<compile_context>
chip_gen: v5e
topology: v5e:2x2
jax: 0.10.0
libtpu: 0.0.40
codegen_flags: <defaults>
</compile_context>

<pallas_src>
import functools

import jax
import jax.numpy as jnp
from jax.experimental import pallas as pl
from jax.experimental.pallas import tpu as pltpu


_ACTS = {
    "tanh": jnp.tanh,
    "relu": jax.nn.relu,
    "sigmoid": jax.nn.sigmoid,
    "silu": jax.nn.silu,
    "gelu": jax.nn.gelu,
    "leakyrelu": jax.nn.leaky_relu,
}

_DEFAULT_BLOCK_ROWS = 512  # rows per lane-half; 2*tm rows are processed per grid step


def _round_up(x, m):
    return (x + m - 1) // m * m


def _make_fls_kernel(d_in, n_hidden, activation):
    act = _ACTS[activation]

    def kernel(*refs):
        xa_ref, xb_ref, w0a_ref, w0b_ref, b0_ref = refs[:5]
        hidden_refs = refs[5:5 + 2 * n_hidden]
        w4t_ref, b4t_ref, o_ref = refs[5 + 2 * n_hidden:]

        xa = xa_ref[...]            # (tm, d_in)  rows of tile A
        xb = xb_ref[...]            # (tm, d_in)  rows of tile B
        w0a = w0a_ref[...]          # (d_in, 2H)  [W0 | 0]  -> lanes [0, H)
        w0b = w0b_ref[...]          # (d_in, 2H)  [0 | W0]  -> lanes [H, 2H)

        # ---- layer 0: Linear(d_in, H) + sin.  K = d_in is tiny -> VPU FMAs, no MXU ----
        acc = xa[:, 0:1] * w0a[0:1, :] + xb[:, 0:1] * w0b[0:1, :]
        for k in range(1, d_in):
            acc = acc + xa[:, k:k + 1] * w0a[k:k + 1, :]
            acc = acc + xb[:, k:k + 1] * w0b[k:k + 1, :]
        h = jnp.sin(acc + b0_ref[...])                       # (tm, 2H)

        # ---- hidden layers: Linear(H, H) + act, block-diagonal packed to 2H lanes ----
        for l in range(n_hidden):
            w_ref = hidden_refs[2 * l]
            b_ref = hidden_refs[2 * l + 1]
            h = act(jnp.dot(h, w_ref[...], preferred_element_type=jnp.float32)
                    + b_ref[...])

        # ---- output Linear, produced transposed so the HBM store is lane-dense ----
        out_t = jnp.dot(w4t_ref[...], h.T, preferred_element_type=jnp.float32)
        out_t = out_t + b4t_ref[...]                         # (2*d_out, tm)
        o_ref[...] = out_t.astype(o_ref.dtype)

    return kernel


def prepare_fls_params(params):
    """One-time repack of FLS params for the 2-way lane-packed kernel.

    params: list of (W, b) with W shaped (fan_in, fan_out): layer 0, hidden layers,
    output layer.  Call once, outside the jitted forward.
    """
    (w0, b0) = params[0]
    (wl, bl) = params[-1]
    hidden = params[1:-1]
    d_in, h_dim = w0.shape
    d_out = wl.shape[1]

    zero_ih = jnp.zeros((d_in, h_dim), w0.dtype)
    w0a = jnp.concatenate([w0, zero_ih], axis=1)          # tile A -> lanes [0, H)
    w0b = jnp.concatenate([zero_ih, w0], axis=1)          # tile B -> lanes [H, 2H)
    b0p = jnp.concatenate([b0, b0]).reshape(1, 2 * h_dim)
    packed = [w0a, w0b, b0p]

    zero_hh = jnp.zeros((h_dim, h_dim), w0.dtype)
    for (w, b) in hidden:
        wbd = jnp.block([[w, zero_hh], [zero_hh, w]])     # (2H, 2H) block diagonal
        packed.append(wbd)
        packed.append(jnp.concatenate([b, b]).reshape(1, 2 * h_dim))

    zero_ho = jnp.zeros((h_dim, d_out), wl.dtype)
    w_out_bd = jnp.block([[wl, zero_ho], [zero_ho, wl]])  # (2H, 2*d_out)
    packed.append(w_out_bd.T)                             # (2*d_out, 2H), fed transposed
    packed.append(jnp.concatenate([bl, bl]).reshape(2 * d_out, 1))
    return tuple(packed)


@functools.partial(jax.jit, static_argnames=("activation", "block_rows"))
def fls_forward(x, packed, activation="tanh", block_rows=None):
    """x: (N, d_in) float32.  packed: output of prepare_fls_params.  Returns (N, d_out)."""
    w0a = packed[0]
    w4t = packed[-2]
    n_hidden = (len(packed) - 5) // 2
    d_in = w0a.shape[0]
    d_out2 = w4t.shape[0]
    d_out = d_out2 // 2

    n, d_in_x = x.shape
    assert d_in_x == d_in, (d_in_x, d_in)

    # Row tile per lane-half (multiple of 128 keeps x/out blocks aligned & lane-dense).
    if block_rows is None:
        tm = min(_DEFAULT_BLOCK_ROWS, max(128, _round_up((n + 1) // 2, 128)))
    else:
        tm = block_rows
    n_pad = _round_up(n, 2 * tm)
    grid = n_pad // (2 * tm)
    if n_pad != n:
        x = jnp.pad(x, ((0, n_pad - n), (0, 0)))   # tiny (N, d_in) pad, rows only

    def const_spec(arr):
        nd = arr.ndim
        return pl.BlockSpec(arr.shape, lambda i: (0,) * nd)   # weights stay resident

    in_specs = [
        pl.BlockSpec((tm, d_in), lambda i: (2 * i, 0)),       # rows of tile A
        pl.BlockSpec((tm, d_in), lambda i: (2 * i + 1, 0)),   # rows of tile B
    ] + [const_spec(p) for p in packed]

    out = pl.pallas_call(
        _make_fls_kernel(d_in, n_hidden, activation),
        out_shape=jax.ShapeDtypeStruct((grid, d_out2, tm), jnp.float32),
        grid_spec=pltpu.PrefetchScalarGridSpec(
            num_scalar_prefetch=0,
            grid=(grid,),
            in_specs=in_specs,
            out_specs=pl.BlockSpec((None, d_out2, tm), lambda i: (i, 0, 0)),
        ),
        compiler_params=pltpu.CompilerParams(
            dimension_semantics=("parallel",)),
    )(x, x, *packed)

    # (grid, 2*d_out, tm) -> (n_pad, d_out): lane t of packed channel p at step g is
    # sample g*2*tm + (p // d_out)*tm + t, output channel p % d_out.
    out = out.reshape(grid, 2, d_out, tm).transpose(0, 1, 3, 2).reshape(n_pad, d_out)
    return out[:n]


def init_fls_params(key, d_in=2, d_out=1, d_hidden=64, n_layer_hidden=3):
    """Mimics nn.Linear default init: U(-1/sqrt(fan_in), 1/sqrt(fan_in)) for W and b."""
    dims = [(d_in, d_hidden)] + [(d_hidden, d_hidden)] * n_layer_hidden + [(d_hidden, d_out)]
    params = []
    for (fan_in, fan_out) in dims:
        key, kw, kb = jax.random.split(key, 3)
        bound = 1.0 / (fan_in ** 0.5)
        w = jax.random.uniform(kw, (fan_in, fan_out), jnp.float32, -bound, bound)
        b = jax.random.uniform(kb, (fan_out,), jnp.float32, -bound, bound)
        params.append((w, b))
    return params


def fls_reference(x, params, activation="tanh"):
    """Pure-JAX reference of the FLS forward pass."""
    act = _ACTS[activation]
    hp = jax.lax.Precision.HIGHEST
    (w0, b0) = params[0]
    h = jnp.sin(jnp.dot(x, w0, precision=hp) + b0)
    for (w, b) in params[1:-1]:
        h = act(jnp.dot(h, w, precision=hp) + b)
    (wl, bl) = params[-1]
    return jnp.dot(h, wl, precision=hp) + bl


if __name__ == "__main__":
    key = jax.random.PRNGKey(0)
    k_p, k_x1, k_x2 = jax.random.split(key, 3)

    d_in, d_out, d_hidden, n_layer_hidden = 2, 1, 64, 3
    params = init_fls_params(k_p, d_in, d_out, d_hidden, n_layer_hidden)
    packed = prepare_fls_params(params)   # one-time repack, outside the jitted forward

    # Small ragged batch: exercises the row-padding / single-step path.
    x_small = jax.random.normal(k_x1, (10, d_in), jnp.float32)
    out_small = jax.block_until_ready(fls_forward(x_small, packed))
    ref_small = fls_reference(x_small, params)
    assert out_small.shape == (10, d_out), out_small.shape
    assert jnp.allclose(out_small, ref_small, atol=1e-4, rtol=1e-4), \
        float(jnp.max(jnp.abs(out_small - ref_small)))

    # Larger batch: exercises the tiled grid (2 steps x 2x512 lane-packed rows).
    x_big = jax.random.normal(k_x2, (2048, d_in), jnp.float32)
    out_big = jax.block_until_ready(fls_forward(x_big, packed))
    ref_big = fls_reference(x_big, params)
    assert out_big.shape == (2048, d_out), out_big.shape
    assert jnp.allclose(out_big, ref_big, atol=1e-4, rtol=1e-4), \
        float(jnp.max(jnp.abs(out_big - ref_big)))

    print("KERNEL_OK")
</pallas_src>

<mosaic_0001>
module attributes {stable_mosaic.version = 11 : i64} {
  func.func @kernel(%arg0: i32, %arg1: memref<128x2xf32, #tpu.memory_space<vmem>>, %arg2: memref<128x2xf32, #tpu.memory_space<vmem>>, %arg3: memref<2x128xf32, #tpu.memory_space<vmem>>, %arg4: memref<2x128xf32, #tpu.memory_space<vmem>>, %arg5: memref<1x128xf32, #tpu.memory_space<vmem>>, %arg6: memref<128x128xf32, #tpu.memory_space<vmem>>, %arg7: memref<1x128xf32, #tpu.memory_space<vmem>>, %arg8: memref<128x128xf32, #tpu.memory_space<vmem>>, %arg9: memref<1x128xf32, #tpu.memory_space<vmem>>, %arg10: memref<128x128xf32, #tpu.memory_space<vmem>>, %arg11: memref<1x128xf32, #tpu.memory_space<vmem>>, %arg12: memref<2x128xf32, #tpu.memory_space<vmem>>, %arg13: memref<2x1xf32, #tpu.memory_space<vmem>>, %arg14: memref<1x2x128xf32, #tpu.memory_space<vmem>>) attributes {dimension_semantics = [#tpu.dimension_semantics<parallel>], iteration_bounds = array<i64: 1>, scalar_prefetch = 0 : i64, scratch_operands = 0 : i64, tpu.core_type = #tpu.core_type<tc>, window_params = [{transform_indices = @transform_0, window_bounds = array<i64: 128, 2>}, {transform_indices = @transform_1, window_bounds = array<i64: 128, 2>}, {pipeline_mode = #tpu.pipeline_mode<synchronous>, transform_indices = @transform_2, window_bounds = array<i64: 2, 128>}, {pipeline_mode = #tpu.pipeline_mode<synchronous>, transform_indices = @transform_3, window_bounds = array<i64: 2, 128>}, {pipeline_mode = #tpu.pipeline_mode<synchronous>, transform_indices = @transform_4, window_bounds = array<i64: 1, 128>}, {pipeline_mode = #tpu.pipeline_mode<synchronous>, transform_indices = @transform_5, window_bounds = array<i64: 128, 128>}, {pipeline_mode = #tpu.pipeline_mode<synchronous>, transform_indices = @transform_6, window_bounds = array<i64: 1, 128>}, {pipeline_mode = #tpu.pipeline_mode<synchronous>, transform_indices = @transform_7, window_bounds = array<i64: 128, 128>}, {pipeline_mode = #tpu.pipeline_mode<synchronous>, transform_indices = @transform_8, window_bounds = array<i64: 1, 128>}, {pipeline_mode = #tpu.pipeline_mode<synchronous>, transform_indices = @transform_9, window_bounds = array<i64: 128, 128>}, {pipeline_mode = #tpu.pipeline_mode<synchronous>, transform_indices = @transform_10, window_bounds = array<i64: 1, 128>}, {pipeline_mode = #tpu.pipeline_mode<synchronous>, transform_indices = @transform_11, window_bounds = array<i64: 2, 128>}, {pipeline_mode = #tpu.pipeline_mode<synchronous>, transform_indices = @transform_12, window_bounds = array<i64: 2, 1>}, {transform_indices = @transform_13, window_bounds = array<i64: 1, 2, 128>}]} {
    %c0 = arith.constant 0 : index
    %c0_0 = arith.constant 0 : index
    %0 = vector.load %arg1[%c0, %c0_0] : memref<128x2xf32, #tpu.memory_space<vmem>>, vector<128x2xf32>
    %c0_1 = arith.constant 0 : index
    %c0_2 = arith.constant 0 : index
    %1 = vector.load %arg2[%c0_1, %c0_2] : memref<128x2xf32, #tpu.memory_space<vmem>>, vector<128x2xf32>
    %c0_3 = arith.constant 0 : index
    %c0_4 = arith.constant 0 : index
    %2 = vector.load %arg3[%c0_3, %c0_4] : memref<2x128xf32, #tpu.memory_space<vmem>>, vector<2x128xf32>
    %c0_5 = arith.constant 0 : index
    %c0_6 = arith.constant 0 : index
    %3 = vector.load %arg4[%c0_5, %c0_6] : memref<2x128xf32, #tpu.memory_space<vmem>>, vector<2x128xf32>
    %4 = vector.extract_strided_slice %0 {offsets = [0, 0], sizes = [128, 1], strides = [1, 1]} : vector<128x2xf32> to vector<128x1xf32>
    %5 = vector.extract_strided_slice %2 {offsets = [0, 0], sizes = [1, 128], strides = [1, 1]} : vector<2x128xf32> to vector<1x128xf32>
    %6 = vector.broadcast %4 : vector<128x1xf32> to vector<128x128xf32>
    %7 = vector.broadcast %5 : vector<1x128xf32> to vector<128x128xf32>
    %8 = arith.mulf %6, %7 : vector<128x128xf32>
    %9 = vector.extract_strided_slice %1 {offsets = [0, 0], sizes = [128, 1], strides = [1, 1]} : vector<128x2xf32> to vector<128x1xf32>
    %10 = vector.extract_strided_slice %3 {offsets = [0, 0], sizes = [1, 128], strides = [1, 1]} : vector<2x128xf32> to vector<1x128xf32>
    %11 = vector.broadcast %9 : vector<128x1xf32> to vector<128x128xf32>
    %12 = vector.broadcast %10 : vector<1x128xf32> to vector<128x128xf32>
    %13 = arith.mulf %11, %12 : vector<128x128xf32>
    %14 = arith.addf %8, %13 : vector<128x128xf32>
    %15 = vector.extract_strided_slice %0 {offsets = [0, 1], sizes = [128, 1], strides = [1, 1]} : vector<128x2xf32> to vector<128x1xf32>
    %16 = vector.extract_strided_slice %2 {offsets = [1, 0], sizes = [1, 128], strides = [1, 1]} : vector<2x128xf32> to vector<1x128xf32>
    %17 = vector.broadcast %15 : vector<128x1xf32> to vector<128x128xf32>
    %18 = vector.broadcast %16 : vector<1x128xf32> to vector<128x128xf32>
    %19 = arith.mulf %17, %18 : vector<128x128xf32>
    %20 = arith.addf %14, %19 : vector<128x128xf32>
    %21 = vector.extract_strided_slice %1 {offsets = [0, 1], sizes = [128, 1], strides = [1, 1]} : vector<128x2xf32> to vector<128x1xf32>
    %22 = vector.extract_strided_slice %3 {offsets = [1, 0], sizes = [1, 128], strides = [1, 1]} : vector<2x128xf32> to vector<1x128xf32>
    %23 = vector.broadcast %21 : vector<128x1xf32> to vector<128x128xf32>
    %24 = vector.broadcast %22 : vector<1x128xf32> to vector<128x128xf32>
    %25 = arith.mulf %23, %24 : vector<128x128xf32>
    %26 = arith.addf %20, %25 : vector<128x128xf32>
    %c0_7 = arith.constant 0 : index
    %c0_8 = arith.constant 0 : index
    %27 = vector.load %arg5[%c0_7, %c0_8] : memref<1x128xf32, #tpu.memory_space<vmem>>, vector<1x128xf32>
    %28 = vector.broadcast %27 : vector<1x128xf32> to vector<128x128xf32>
    %29 = arith.addf %26, %28 : vector<128x128xf32>
    %30 = math.sin %29 : vector<128x128xf32>
    %c0_9 = arith.constant 0 : index
    %c0_10 = arith.constant 0 : index
    %31 = vector.load %arg6[%c0_9, %c0_10] : memref<128x128xf32, #tpu.memory_space<vmem>>, vector<128x128xf32>
    %cst = arith.constant dense<0.000000e+00> : vector<128x128xf32>
    %32 = tpu.matmul %30, %31, %cst {dimension_numbers = #tpu.dot_dimension_numbers<[1], [0], [0], [1], [0, 0, 1, 1], [], []>} : vector<128x128xf32>, vector<128x128xf32>, vector<128x128xf32> -> vector<128x128xf32>
    %c0_11 = arith.constant 0 : index
    %c0_12 = arith.constant 0 : index
    %33 = vector.load %arg7[%c0_11, %c0_12] : memref<1x128xf32, #tpu.memory_space<vmem>>, vector<1x128xf32>
    %34 = vector.broadcast %33 : vector<1x128xf32> to vector<128x128xf32>
    %35 = arith.addf %32, %34 : vector<128x128xf32>
    %36 = math.tanh %35 : vector<128x128xf32>
    %c0_13 = arith.constant 0 : index
    %c0_14 = arith.constant 0 : index
    %37 = vector.load %arg8[%c0_13, %c0_14] : memref<128x128xf32, #tpu.memory_space<vmem>>, vector<128x128xf32>
    %cst_15 = arith.constant dense<0.000000e+00> : vector<128x128xf32>
    %38 = tpu.matmul %36, %37, %cst_15 {dimension_numbers = #tpu.dot_dimension_numbers<[1], [0], [0], [1], [0, 0, 1, 1], [], []>} : vector<128x128xf32>, vector<128x128xf32>, vector<128x128xf32> -> vector<128x128xf32>
    %c0_16 = arith.constant 0 : index
    %c0_17 = arith.constant 0 : index
    %39 = vector.load %arg9[%c0_16, %c0_17] : memref<1x128xf32, #tpu.memory_space<vmem>>, vector<1x128xf32>
    %40 = vector.broadcast %39 : vector<1x128xf32> to vector<128x128xf32>
    %41 = arith.addf %38, %40 : vector<128x128xf32>
    %42 = math.tanh %41 : vector<128x128xf32>
    %c0_18 = arith.constant 0 : index
    %c0_19 = arith.constant 0 : index
    %43 = vector.load %arg10[%c0_18, %c0_19] : memref<128x128xf32, #tpu.memory_space<vmem>>, vector<128x128xf32>
    %cst_20 = arith.constant dense<0.000000e+00> : vector<128x128xf32>
    %44 = tpu.matmul %42, %43, %cst_20 {dimension_numbers = #tpu.dot_dimension_numbers<[1], [0], [0], [1], [0, 0, 1, 1], [], []>} : vector<128x128xf32>, vector<128x128xf32>, vector<128x128xf32> -> vector<128x128xf32>
    %c0_21 = arith.constant 0 : index
    %c0_22 = arith.constant 0 : index
    %45 = vector.load %arg11[%c0_21, %c0_22] : memref<1x128xf32, #tpu.memory_space<vmem>>, vector<1x128xf32>
    %46 = vector.broadcast %45 : vector<1x128xf32> to vector<128x128xf32>
    %47 = arith.addf %44, %46 : vector<128x128xf32>
    %48 = math.tanh %47 : vector<128x128xf32>
    %c0_23 = arith.constant 0 : index
    %c0_24 = arith.constant 0 : index
    %49 = vector.load %arg12[%c0_23, %c0_24] : memref<2x128xf32, #tpu.memory_space<vmem>>, vector<2x128xf32>
    %50 = tpu.transpose %48, [1, 0] : vector<128x128xf32> -> vector<128x128xf32>
    %cst_25 = arith.constant dense<0.000000e+00> : vector<2x128xf32>
    %51 = tpu.matmul %49, %50, %cst_25 {dimension_numbers = #tpu.dot_dimension_numbers<[1], [0], [0], [1], [0, 0, 1, 1], [], []>} : vector<2x128xf32>, vector<128x128xf32>, vector<2x128xf32> -> vector<2x128xf32>
    %c0_26 = arith.constant 0 : index
    %c0_27 = arith.constant 0 : index
    %52 = vector.load %arg13[%c0_26, %c0_27] : memref<2x1xf32, #tpu.memory_space<vmem>>, vector<2x1xf32>
    %53 = vector.broadcast %52 : vector<2x1xf32> to vector<2x128xf32>
    %54 = arith.addf %51, %53 : vector<2x128xf32>
    %c0_28 = arith.constant 0 : index
    %c0_29 = arith.constant 0 : index
    %c0_30 = arith.constant 0 : index
    %55 = vector.load %arg14[%c0_28, %c0_29, %c0_30] : memref<1x2x128xf32, #tpu.memory_space<vmem>>, vector<1x2x128xf32>
    %56 = vector.shape_cast %55 : vector<1x2x128xf32> to vector<2x128xf32>
    %57 = vector.shape_cast %54 : vector<2x128xf32> to vector<1x2x128xf32>
    tpu.vector_store %arg14[%c0_28, %c0_29, %c0_30], %57 {strides = array<i32>} : memref<1x2x128xf32, #tpu.memory_space<vmem>>, vector<1x2x128xf32>,
    return
  }
  func.func @transform_0(%arg0: i32) -> (i32, i32) {
    %c2_i32 = arith.constant 2 : i32
    %0 = arith.muli %c2_i32, %arg0 : i32
    %c0_i32 = arith.constant 0 : i32
    %c0_i32_0 = arith.constant 0 : i32
    return %0, %c0_i32 : i32, i32
  }
  func.func @transform_1(%arg0: i32) -> (i32, i32) {
    %c2_i32 = arith.constant 2 : i32
    %0 = arith.muli %c2_i32, %arg0 : i32
    %c1_i32 = arith.constant 1 : i32
    %1 = arith.addi %0, %c1_i32 : i32
    %c0_i32 = arith.constant 0 : i32
    %c0_i32_0 = arith.constant 0 : i32
    return %1, %c0_i32 : i32, i32
  }
  func.func @transform_2(%arg0: i32) -> (i32, i32) {
    %c0_i32 = arith.constant 0 : i32
    %c0_i32_0 = arith.constant 0 : i32
    %c0_i32_1 = arith.constant 0 : i32
    return %c0_i32, %c0_i32_0 : i32, i32
  }
  func.func @transform_3(%arg0: i32) -> (i32, i32) {
    %c0_i32 = arith.constant 0 : i32
    %c0_i32_0 = arith.constant 0 : i32
    %c0_i32_1 = arith.constant 0 : i32
    return %c0_i32, %c0_i32_0 : i32, i32
  }
  func.func @transform_4(%arg0: i32) -> (i32, i32) {
    %c0_i32 = arith.constant 0 : i32
    %c0_i32_0 = arith.constant 0 : i32
    %c0_i32_1 = arith.constant 0 : i32
    return %c0_i32, %c0_i32_0 : i32, i32
  }
  func.func @transform_5(%arg0: i32) -> (i32, i32) {
    %c0_i32 = arith.constant 0 : i32
    %c0_i32_0 = arith.constant 0 : i32
    %c0_i32_1 = arith.constant 0 : i32
    return %c0_i32, %c0_i32_0 : i32, i32
  }
  func.func @transform_6(%arg0: i32) -> (i32, i32) {
    %c0_i32 = arith.constant 0 : i32
    %c0_i32_0 = arith.constant 0 : i32
    %c0_i32_1 = arith.constant 0 : i32
    return %c0_i32, %c0_i32_0 : i32, i32
  }
  func.func @transform_7(%arg0: i32) -> (i32, i32) {
    %c0_i32 = arith.constant 0 : i32
    %c0_i32_0 = arith.constant 0 : i32
    %c0_i32_1 = arith.constant 0 : i32
    return %c0_i32, %c0_i32_0 : i32, i32
  }
  func.func @transform_8(%arg0: i32) -> (i32, i32) {
    %c0_i32 = arith.constant 0 : i32
    %c0_i32_0 = arith.constant 0 : i32
    %c0_i32_1 = arith.constant 0 : i32
    return %c0_i32, %c0_i32_0 : i32, i32
  }
  func.func @transform_9(%arg0: i32) -> (i32, i32) {
    %c0_i32 = arith.constant 0 : i32
    %c0_i32_0 = arith.constant 0 : i32
    %c0_i32_1 = arith.constant 0 : i32
    return %c0_i32, %c0_i32_0 : i32, i32
  }
  func.func @transform_10(%arg0: i32) -> (i32, i32) {
    %c0_i32 = arith.constant 0 : i32
    %c0_i32_0 = arith.constant 0 : i32
    %c0_i32_1 = arith.constant 0 : i32
    return %c0_i32, %c0_i32_0 : i32, i32
  }
  func.func @transform_11(%arg0: i32) -> (i32, i32) {
    %c0_i32 = arith.constant 0 : i32
    %c0_i32_0 = arith.constant 0 : i32
    %c0_i32_1 = arith.constant 0 : i32
    return %c0_i32, %c0_i32_0 : i32, i32
  }
  func.func @transform_12(%arg0: i32) -> (i32, i32) {
    %c0_i32 = arith.constant 0 : i32
    %c0_i32_0 = arith.constant 0 : i32
    %c0_i32_1 = arith.constant 0 : i32
    return %c0_i32, %c0_i32_0 : i32, i32
  }
  func.func @transform_13(%arg0: i32) -> (i32, i32, i32) {
    %c0_i32 = arith.constant 0 : i32
    %c0_i32_0 = arith.constant 0 : i32
    %c0_i32_1 = arith.constant 0 : i32
    return %arg0, %c0_i32, %c0_i32_0 : i32, i32, i32
  }
}

</mosaic_0001>

<llo_original>
// kernel: fls_forward.1
$region0: #{fls_forward.1}
  #allocation0 [shape = 'u32[]', space=smem, size = 0x4, offset = 0x4, fixed_abs, tag = 'smem constant byte address 0x4 - core index']
  #allocation1 [shape = 'u32[72,128]{1,0:T(1,128)}', space=vmem, size = 0x9000, scoped, tag = 'internal scratch']
  %s0 = inlined_call_operand.vmem [shape: f32[256,2], index: 0, kind: input, shape index: {}, may-alias: {0,1}]
  %s1 = inlined_call_operand.vmem [shape: f32[256,2], index: 1, kind: input, shape index: {}, may-alias: {0,1}]
  %s2 = inlined_call_operand.vmem [shape: f32[2,128], index: 2, kind: input, shape index: {}]
  %s3 = inlined_call_operand.vmem [shape: f32[2,128], index: 3, kind: input, shape index: {}]
  %s4 = inlined_call_operand.vmem [shape: f32[1,128], index: 4, kind: input, shape index: {}]
  %s5 = inlined_call_operand.vmem [shape: f32[128,128], index: 5, kind: input, shape index: {}]
  %s6 = inlined_call_operand.vmem [shape: f32[1,128], index: 6, kind: input, shape index: {}]
  %s7 = inlined_call_operand.vmem [shape: f32[128,128], index: 7, kind: input, shape index: {}]
  %s8 = inlined_call_operand.vmem [shape: f32[1,128], index: 8, kind: input, shape index: {}]
  %s9 = inlined_call_operand.hbm [shape: f32[128,128], index: 9, kind: input, shape index: {}]
  %s10 = inlined_call_operand.vmem [shape: f32[1,128], index: 10, kind: input, shape index: {}]
  %s11 = inlined_call_operand.vmem [shape: f32[2,128], index: 11, kind: input, shape index: {}]
  %s12 = inlined_call_operand.vmem [shape: f32[2,1], index: 12, kind: input, shape index: {}]
  %s13 = inlined_call_operand.vmem [shape: f32[1,2,128], index: 13, kind: output, shape index: {}]
  %s14 = sld [smem:[#allocation0]]
  $region66: #{fls_forward.1} parent=0
    _
  %s16 = ssub.s32 1, %s14
  %s17 = scalar_select 0, %s16, %s14
  $region1: #{fls_forward.1} parent=0
    #allocation2 [shape = 'u8[65536]{0}', space=vmem, size = 0x10000, scoped, tag = 'input window, operand 9, single buffered']
    #allocation3 [shape = 's32[1]{0}', space=sflag, size = 0x4, scoped, tag = 'scoped memory for fls_forward.1']
    %18 = vsyncpa [#allocation3], 0
    // Predicated region
    $region2: #{fls_forward.1} parent=1 // pred_check
      _
    $region3: #{fls_forward.1} parent=1 // pred_check_branch
      %20 = sbr.rel (0) target = $region5
    $region4: #{fls_forward.1} parent=1 // pred_region
      %s21 = smul.u32 0, 2
      %s22 = smul.u32 16, %s21
      %p23 = scmp.lt.s32.totalorder %s22, 31
      %s24 = scalar_select %p23, %s22, 31
      %s25 = smul.addr %s24, 8
      %s26 = scalar_lea.vmem %s0, %s25
      %s27 = smul.u32 0, 2
      %s28 = smul.u32 16, %s27
    $region5: #{fls_forward.1} parent=1 // pred_fallthru
      _
    // Predicated region
    $region6: #{fls_forward.1} parent=1 // pred_check
      _
    $region7: #{fls_forward.1} parent=1 // pred_check_branch
      %30 = sbr.rel (0) target = $region9
    $region8: #{fls_forward.1} parent=1 // pred_region
      %s31 = smul.u32 0, 2
      %s32 = sadd.s32 %s31, 1
      %s33 = smul.u32 16, %s32
      %p34 = scmp.lt.s32.totalorder %s33, 31
      %s35 = scalar_select %p34, %s33, 31
      %s36 = smul.addr %s35, 8
      %s37 = scalar_lea.vmem %s1, %s36
      %s38 = smul.u32 0, 2
      %s39 = sadd.s32 %s38, 1
      %s40 = smul.u32 16, %s39
    $region9: #{fls_forward.1} parent=1 // pred_fallthru
      _
    // Predicated region
    $region10: #{fls_forward.1} parent=1 // pred_check
      _
    $region11: #{fls_forward.1} parent=1 // pred_check_branch
      %42 = sbr.rel (0) target = $region13
    $region12: #{fls_forward.1} parent=1 // pred_region
      _
    $region13: #{fls_forward.1} parent=1 // pred_fallthru
      _
    // Predicated region
    $region14: #{fls_forward.1} parent=1 // pred_check
      _
    $region15: #{fls_forward.1} parent=1 // pred_check_branch
      %44 = sbr.rel (0) target = $region17
    $region16: #{fls_forward.1} parent=1 // pred_region
      _
    $region17: #{fls_forward.1} parent=1 // pred_fallthru
      _
    // Predicated region
    $region18: #{fls_forward.1} parent=1 // pred_check
      _
    $region19: #{fls_forward.1} parent=1 // pred_check_branch
      %46 = sbr.rel (0) target = $region21
    $region20: #{fls_forward.1} parent=1 // pred_region
      _
    $region21: #{fls_forward.1} parent=1 // pred_fallthru
      _
    // Predicated region
    $region22: #{fls_forward.1} parent=1 // pred_check
      _
    $region23: #{fls_forward.1} parent=1 // pred_check_branch
      %48 = sbr.rel (0) target = $region25
    $region24: #{fls_forward.1} parent=1 // pred_region
      _
    $region25: #{fls_forward.1} parent=1 // pred_fallthru
      _
    // Predicated region
    $region26: #{fls_forward.1} parent=1 // pred_check
      _
    $region27: #{fls_forward.1} parent=1 // pred_check_branch
      %50 = sbr.rel (0) target = $region29
    $region28: #{fls_forward.1} parent=1 // pred_region
      _
    $region29: #{fls_forward.1} parent=1 // pred_fallthru
      _
    // Predicated region
    $region30: #{fls_forward.1} parent=1 // pred_check
      _
    $region31: #{fls_forward.1} parent=1 // pred_check_branch
      %52 = sbr.rel (0) target = $region33
    $region32: #{fls_forward.1} parent=1 // pred_region
      _
    $region33: #{fls_forward.1} parent=1 // pred_fallthru
      _
    // Predicated region
    $region34: #{fls_forward.1} parent=1 // pred_check
      _
    $region35: #{fls_forward.1} parent=1 // pred_check_branch
      %54 = sbr.rel (0) target = $region37
    $region36: #{fls_forward.1} parent=1 // pred_region
      _
    $region37: #{fls_forward.1} parent=1 // pred_fallthru
      _
    // Predicated region
    $region38: #{fls_forward.1} parent=1 // pred_check
      _
    $region39: #{fls_forward.1} parent=1 // pred_check_branch
      %56 = sbr.rel (0) target = $region41
    $region40: #{fls_forward.1} parent=1 // pred_region
      %58 = vsyncadd [#allocation3], 0
      %s59 = sshll.u32 %s9, 4
      %s60 = int_to_ptr.hbm [resolvable:$true] %s59
      %s61 = sshll.u32 [#allocation2], 4
      %s62 = int_to_ptr.vmem [resolvable:$true] %s61
      %67 = dma.hbm_to_vmem [thread:$0]  %s60, 2048, %s62, [#allocation3], 128, 128, 8
    $region41: #{fls_forward.1} parent=1 // pred_fallthru
      _
    // Predicated region
    $region42: #{fls_forward.1} parent=1 // pred_check
      _
    $region43: #{fls_forward.1} parent=1 // pred_check_branch
      %69 = sbr.rel (0) target = $region45
    $region44: #{fls_forward.1} parent=1 // pred_region
      _
    $region45: #{fls_forward.1} parent=1 // pred_fallthru
      _
    // Predicated region
    $region46: #{fls_forward.1} parent=1 // pred_check
      _
    $region47: #{fls_forward.1} parent=1 // pred_check_branch
      %71 = sbr.rel (0) target = $region49
    $region48: #{fls_forward.1} parent=1 // pred_region
      _
    $region49: #{fls_forward.1} parent=1 // pred_fallthru
      _
    // Predicated region
    $region50: #{fls_forward.1} parent=1 // pred_check
      _
    $region51: #{fls_forward.1} parent=1 // pred_check_branch
      %73 = sbr.rel (0) target = $region53
    $region52: #{fls_forward.1} parent=1 // pred_region
      _
    $region53: #{fls_forward.1} parent=1 // pred_fallthru
      _
    // Predicated region
    $region54: #{fls_forward.1} parent=1 // pred_check
      _
    $region55: #{fls_forward.1} parent=1 // pred_check_branch
      %75 = sbr.rel (0) target = $region57
    $region56: #{fls_forward.1} parent=1 // pred_region
      %77 = dma.done [#allocation3], 2048
    $region57: #{fls_forward.1} parent=1 // pred_fallthru
      _
    %s78 = smul.u32 0, 2
    %s79 = smul.u32 16, %s78
    %p80 = scmp.lt.s32.totalorder %s79, 31
    %s81 = scalar_select %p80, %s79, 31
    %s82 = smul.addr %s81, 8
    %s83 = scalar_lea.vmem %s0, %s82
    %s84 = smul.u32 0, 2
    %s85 = sadd.s32 %s84, 1
    %s86 = smul.u32 16, %s85
    %p87 = scmp.lt.s32.totalorder %s86, 31
    %s88 = scalar_select %p87, %s86, 31
    %s89 = smul.addr %s88, 8
    %s90 = scalar_lea.vmem %s1, %s89
    %s91 = smul.u32 0, 2
    %s92 = smul.u32 16, %s91
    %p93 = scmp.lt.s32.totalorder %s92, 31
    %s94 = scalar_select %p93, %s92, 31
    %s95 = smul.addr %s94, 8
    %s96 = scalar_lea.vmem %s0, %s95
    %s97 = smul.u32 0, 2
    %s98 = smul.u32 16, %s97
    %s99 = smul.u32 0, 2
    %s100 = sadd.s32 %s99, 1
    %s101 = smul.u32 16, %s100
    %p102 = scmp.lt.s32.totalorder %s101, 31
    %s103 = scalar_select %p102, %s101, 31
    %s104 = smul.addr %s103, 8
    %s105 = scalar_lea.vmem %s1, %s104
    %s106 = smul.u32 0, 2
    %s107 = sadd.s32 %s106, 1
    %s108 = smul.u32 16, %s107
    %v109 = vld [vmem:[%s96] sm:$0xff]
    %v110 = vld [vmem:[%s96 + $0x8] sm:$0xff]
    %v111 = vld [vmem:[%s96 + $0x10] sm:$0xff]
    %v112 = vld [vmem:[%s96 + $0x18] sm:$0xff]
    %v113 = vld [vmem:[%s96 + $0x20] sm:$0xff]
    %v114 = vld [vmem:[%s96 + $0x28] sm:$0xff]
    %v115 = vld [vmem:[%s96 + $0x30] sm:$0xff]
    %v116 = vld [vmem:[%s96 + $0x38] sm:$0xff]
    %v117 = vld [vmem:[%s96 + $0x40] sm:$0xff]
    %v118 = vld [vmem:[%s96 + $0x48] sm:$0xff]
    %v119 = vld [vmem:[%s96 + $0x50] sm:$0xff]
    %v120 = vld [vmem:[%s96 + $0x58] sm:$0xff]
    %v121 = vld [vmem:[%s96 + $0x60] sm:$0xff]
    %v122 = vld [vmem:[%s96 + $0x68] sm:$0xff]
    %v123 = vld [vmem:[%s96 + $0x70] sm:$0xff]
    %v124 = vld [vmem:[%s96 + $0x78] sm:$0xff]
    %v125 = vld [vmem:[%s105] sm:$0xff]
    %v126 = vld [vmem:[%s105 + $0x8] sm:$0xff]
    %v127 = vld [vmem:[%s105 + $0x10] sm:$0xff]
    %v128 = vld [vmem:[%s105 + $0x18] sm:$0xff]
    %v129 = vld [vmem:[%s105 + $0x20] sm:$0xff]
    %v130 = vld [vmem:[%s105 + $0x28] sm:$0xff]
    %v131 = vld [vmem:[%s105 + $0x30] sm:$0xff]
    %v132 = vld [vmem:[%s105 + $0x38] sm:$0xff]
    %v133 = vld [vmem:[%s105 + $0x40] sm:$0xff]
    %v134 = vld [vmem:[%s105 + $0x48] sm:$0xff]
    %v135 = vld [vmem:[%s105 + $0x50] sm:$0xff]
    %v136 = vld [vmem:[%s105 + $0x58] sm:$0xff]
    %v137 = vld [vmem:[%s105 + $0x60] sm:$0xff]
    %v138 = vld [vmem:[%s105 + $0x68] sm:$0xff]
    %v139 = vld [vmem:[%s105 + $0x70] sm:$0xff]
    %v140 = vld [vmem:[%s105 + $0x78] sm:$0xff]
    %v141 = vld [vmem:[%s2] sm:$0x3]
    %v142 = vld [vmem:[%s3] sm:$0x3]
    %144 = vset.pattern.permute.xlu0 0
    %145 = vperm.xlu0 %144, %v109
    %v146 = vpop.permute.xlu0 %145
    %149 = vset.pattern.permute.xlu0 0
    %150 = vperm.xlu0 %149, %v110
    %v151 = vpop.permute.xlu0 %150
    %154 = vset.pattern.permute.xlu0 0
    %155 = vperm.xlu0 %154, %v111
    %v156 = vpop.permute.xlu0 %155
    %159 = vset.pattern.permute.xlu0 0
    %160 = vperm.xlu0 %159, %v112
    %v161 = vpop.permute.xlu0 %160
    %164 = vset.pattern.permute.xlu0 0
    %165 = vperm.xlu0 %164, %v113
    %v166 = vpop.permute.xlu0 %165
    %169 = vset.pattern.permute.xlu0 0
    %170 = vperm.xlu0 %169, %v114
    %v171 = vpop.permute.xlu0 %170
    %174 = vset.pattern.permute.xlu0 0
    %175 = vperm.xlu0 %174, %v115
    %v176 = vpop.permute.xlu0 %175
    %179 = vset.pattern.permute.xlu0 0
    %180 = vperm.xlu0 %179, %v116
    %v181 = vpop.permute.xlu0 %180
    %184 = vset.pattern.permute.xlu0 0
    %185 = vperm.xlu0 %184, %v117
    %v186 = vpop.permute.xlu0 %185
    %189 = vset.pattern.permute.xlu0 0
    %190 = vperm.xlu0 %189, %v118
    %v191 = vpop.permute.xlu0 %190
    %194 = vset.pattern.permute.xlu0 0
    %195 = vperm.xlu0 %194, %v119
    %v196 = vpop.permute.xlu0 %195
    %199 = vset.pattern.permute.xlu0 0
    %200 = vperm.xlu0 %199, %v120
    %v201 = vpop.permute.xlu0 %200
    %204 = vset.pattern.permute.xlu0 0
    %205 = vperm.xlu0 %204, %v121
    %v206 = vpop.permute.xlu0 %205
    %209 = vset.pattern.permute.xlu0 0
    %210 = vperm.xlu0 %209, %v122
    %v211 = vpop.permute.xlu0 %210
    %214 = vset.pattern.permute.xlu0 0
    %215 = vperm.xlu0 %214, %v123
    %v216 = vpop.permute.xlu0 %215
    %219 = vset.pattern.permute.xlu0 0
    %220 = vperm.xlu0 %219, %v124
    %v221 = vpop.permute.xlu0 %220
    %v223 = vperm.slane %v141, 0
    %v224 = vmul.f32 %v146, %v223
    %v225 = vmul.f32 %v151, %v223
    %v226 = vmul.f32 %v156, %v223
    %v227 = vmul.f32 %v161, %v223
    %v228 = vmul.f32 %v166, %v223
    %v229 = vmul.f32 %v171, %v223
    %v230 = vmul.f32 %v176, %v223
    %v231 = vmul.f32 %v181, %v223
    %v232 = vmul.f32 %v186, %v223
    %v233 = vmul.f32 %v191, %v223
    %v234 = vmul.f32 %v196, %v223
    %v235 = vmul.f32 %v201, %v223
    %v236 = vmul.f32 %v206, %v223
    %v237 = vmul.f32 %v211, %v223
    %v238 = vmul.f32 %v216, %v223
    %v239 = vmul.f32 %v221, %v223
    %241 = vset.pattern.permute.xlu0 0
    %242 = vperm.xlu0 %241, %v125
    %v243 = vpop.permute.xlu0 %242
    %246 = vset.pattern.permute.xlu0 0
    %247 = vperm.xlu0 %246, %v126
    %v248 = vpop.permute.xlu0 %247
    %251 = vset.pattern.permute.xlu0 0
    %252 = vperm.xlu0 %251, %v127
    %v253 = vpop.permute.xlu0 %252
    %256 = vset.pattern.permute.xlu0 0
    %257 = vperm.xlu0 %256, %v128
    %v258 = vpop.permute.xlu0 %257
    %261 = vset.pattern.permute.xlu0 0
    %262 = vperm.xlu0 %261, %v129
    %v263 = vpop.permute.xlu0 %262
    %266 = vset.pattern.permute.xlu0 0
    %267 = vperm.xlu0 %266, %v130
    %v268 = vpop.permute.xlu0 %267
    %271 = vset.pattern.permute.xlu0 0
    %272 = vperm.xlu0 %271, %v131
    %v273 = vpop.permute.xlu0 %272
    %276 = vset.pattern.permute.xlu0 0
    %277 = vperm.xlu0 %276, %v132
    %v278 = vpop.permute.xlu0 %277
    %281 = vset.pattern.permute.xlu0 0
    %282 = vperm.xlu0 %281, %v133
    %v283 = vpop.permute.xlu0 %282
    %286 = vset.pattern.permute.xlu0 0
    %287 = vperm.xlu0 %286, %v134
    %v288 = vpop.permute.xlu0 %287
    %291 = vset.pattern.permute.xlu0 0
    %292 = vperm.xlu0 %291, %v135
    %v293 = vpop.permute.xlu0 %292
    %296 = vset.pattern.permute.xlu0 0
    %297 = vperm.xlu0 %296, %v136
    %v298 = vpop.permute.xlu0 %297
    %301 = vset.pattern.permute.xlu0 0
    %302 = vperm.xlu0 %301, %v137
    %v303 = vpop.permute.xlu0 %302
    %306 = vset.pattern.permute.xlu0 0
    %307 = vperm.xlu0 %306, %v138
    %v308 = vpop.permute.xlu0 %307
    %311 = vset.pattern.permute.xlu0 0
    %312 = vperm.xlu0 %311, %v139
    %v313 = vpop.permute.xlu0 %312
    %316 = vset.pattern.permute.xlu0 0
    %317 = vperm.xlu0 %316, %v140
    %v318 = vpop.permute.xlu0 %317
    %v320 = vperm.slane %v142, 0
    %v321 = vmul.f32 %v243, %v320
    %v322 = vmul.f32 %v248, %v320
    %v323 = vmul.f32 %v253, %v320
    %v324 = vmul.f32 %v258, %v320
    %v325 = vmul.f32 %v263, %v320
    %v326 = vmul.f32 %v268, %v320
    %v327 = vmul.f32 %v273, %v320
    %v328 = vmul.f32 %v278, %v320
    %v329 = vmul.f32 %v283, %v320
    %v330 = vmul.f32 %v288, %v320
    %v331 = vmul.f32 %v293, %v320
    %v332 = vmul.f32 %v298, %v320
    %v333 = vmul.f32 %v303, %v320
    %v334 = vmul.f32 %v308, %v320
    %v335 = vmul.f32 %v313, %v320
    %v336 = vmul.f32 %v318, %v320
    %v337 = vadd.f32 %v224, %v321
    %v338 = vadd.f32 %v225, %v322
    %v339 = vadd.f32 %v226, %v323
    %v340 = vadd.f32 %v227, %v324
    %v341 = vadd.f32 %v228, %v325
    %v342 = vadd.f32 %v229, %v326
    %v343 = vadd.f32 %v230, %v327
    %v344 = vadd.f32 %v231, %v328
    %v345 = vadd.f32 %v232, %v329
    %v346 = vadd.f32 %v233, %v330
    %v347 = vadd.f32 %v234, %v331
    %v348 = vadd.f32 %v235, %v332
    %v349 = vadd.f32 %v236, %v333
    %v350 = vadd.f32 %v237, %v334
    %v351 = vadd.f32 %v238, %v335
    %v352 = vadd.f32 %v239, %v336
    %353 = vset.pattern.permute.xlu0 1
    %354 = vperm.xlu0 %353, %v109
    %v355 = vpop.permute.xlu0 %354
    %357 = vset.pattern.permute.xlu0 1
    %358 = vperm.xlu0 %357, %v110
    %v359 = vpop.permute.xlu0 %358
    %361 = vset.pattern.permute.xlu0 1
    %362 = vperm.xlu0 %361, %v111
    %v363 = vpop.permute.xlu0 %362
    %365 = vset.pattern.permute.xlu0 1
    %366 = vperm.xlu0 %365, %v112
    %v367 = vpop.permute.xlu0 %366
    %369 = vset.pattern.permute.xlu0 1
    %370 = vperm.xlu0 %369, %v113
    %v371 = vpop.permute.xlu0 %370
    %373 = vset.pattern.permute.xlu0 1
    %374 = vperm.xlu0 %373, %v114
    %v375 = vpop.permute.xlu0 %374
    %377 = vset.pattern.permute.xlu0 1
    %378 = vperm.xlu0 %377, %v115
    %v379 = vpop.permute.xlu0 %378
    %381 = vset.pattern.permute.xlu0 1
    %382 = vperm.xlu0 %381, %v116
    %v383 = vpop.permute.xlu0 %382
    %385 = vset.pattern.permute.xlu0 1
    %386 = vperm.xlu0 %385, %v117
    %v387 = vpop.permute.xlu0 %386
    %389 = vset.pattern.permute.xlu0 1
    %390 = vperm.xlu0 %389, %v118
    %v391 = vpop.permute.xlu0 %390
    %393 = vset.pattern.permute.xlu0 1
    %394 = vperm.xlu0 %393, %v119
    %v395 = vpop.permute.xlu0 %394
    %397 = vset.pattern.permute.xlu0 1
    %398 = vperm.xlu0 %397, %v120
    %v399 = vpop.permute.xlu0 %398
    %401 = vset.pattern.permute.xlu0 1
    %402 = vperm.xlu0 %401, %v121
    %v403 = vpop.permute.xlu0 %402
    %405 = vset.pattern.permute.xlu0 1
    %406 = vperm.xlu0 %405, %v122
    %v407 = vpop.permute.xlu0 %406
    %409 = vset.pattern.permute.xlu0 1
    %410 = vperm.xlu0 %409, %v123
    %v411 = vpop.permute.xlu0 %410
    %413 = vset.pattern.permute.xlu0 1
    %414 = vperm.xlu0 %413, %v124
    %v415 = vpop.permute.xlu0 %414
    %v417 = vperm.slane %v141, 1
    %v418 = vmul.f32 %v355, %v417
    %v419 = vmul.f32 %v359, %v417
    %v420 = vmul.f32 %v363, %v417
    %v421 = vmul.f32 %v367, %v417
    %v422 = vmul.f32 %v371, %v417
    %v423 = vmul.f32 %v375, %v417
    %v424 = vmul.f32 %v379, %v417
    %v425 = vmul.f32 %v383, %v417
    %v426 = vmul.f32 %v387, %v417
    %v427 = vmul.f32 %v391, %v417
    %v428 = vmul.f32 %v395, %v417
    %v429 = vmul.f32 %v399, %v417
    %v430 = vmul.f32 %v403, %v417
    %v431 = vmul.f32 %v407, %v417
    %v432 = vmul.f32 %v411, %v417
    %v433 = vmul.f32 %v415, %v417
    %v434 = vadd.f32 %v337, %v418
    %v435 = vadd.f32 %v338, %v419
    %v436 = vadd.f32 %v339, %v420
    %v437 = vadd.f32 %v340, %v421
    %v438 = vadd.f32 %v341, %v422
    %v439 = vadd.f32 %v342, %v423
    %v440 = vadd.f32 %v343, %v424
    %v441 = vadd.f32 %v344, %v425
    %v442 = vadd.f32 %v345, %v426
    %v443 = vadd.f32 %v346, %v427
    %v444 = vadd.f32 %v347, %v428
    %v445 = vadd.f32 %v348, %v429
    %v446 = vadd.f32 %v349, %v430
    %v447 = vadd.f32 %v350, %v431
    %v448 = vadd.f32 %v351, %v432
    %v449 = vadd.f32 %v352, %v433
    %450 = vset.pattern.permute.xlu0 1
    %451 = vperm.xlu0 %450, %v125
    %v452 = vpop.permute.xlu0 %451
    %454 = vset.pattern.permute.xlu0 1
    %455 = vperm.xlu0 %454, %v126
    %v456 = vpop.permute.xlu0 %455
    %458 = vset.pattern.permute.xlu0 1
    %459 = vperm.xlu0 %458, %v127
    %v460 = vpop.permute.xlu0 %459
    %462 = vset.pattern.permute.xlu0 1
    %463 = vperm.xlu0 %462, %v128
    %v464 = vpop.permute.xlu0 %463
    %466 = vset.pattern.permute.xlu0 1
    %467 = vperm.xlu0 %466, %v129
    %v468 = vpop.permute.xlu0 %467
    %470 = vset.pattern.permute.xlu0 1
    %471 = vperm.xlu0 %470, %v130
    %v472 = vpop.permute.xlu0 %471
    %474 = vset.pattern.permute.xlu0 1
    %475 = vperm.xlu0 %474, %v131
    %v476 = vpop.permute.xlu0 %475
    %478 = vset.pattern.permute.xlu0 1
    %479 = vperm.xlu0 %478, %v132
    %v480 = vpop.permute.xlu0 %479
    %482 = vset.pattern.permute.xlu0 1
    %483 = vperm.xlu0 %482, %v133
    %v484 = vpop.permute.xlu0 %483
    %486 = vset.pattern.permute.xlu0 1
    %487 = vperm.xlu0 %486, %v134
    %v488 = vpop.permute.xlu0 %487
    %490 = vset.pattern.permute.xlu0 1
    %491 = vperm.xlu0 %490, %v135
    %v492 = vpop.permute.xlu0 %491
    %494 = vset.pattern.permute.xlu0 1
    %495 = vperm.xlu0 %494, %v136
    %v496 = vpop.permute.xlu0 %495
    %498 = vset.pattern.permute.xlu0 1
    %499 = vperm.xlu0 %498, %v137
    %v500 = vpop.permute.xlu0 %499
    %502 = vset.pattern.permute.xlu0 1
    %503 = vperm.xlu0 %502, %v138
    %v504 = vpop.permute.xlu0 %503
    %506 = vset.pattern.permute.xlu0 1
    %507 = vperm.xlu0 %506, %v139
    %v508 = vpop.permute.xlu0 %507
    %510 = vset.pattern.permute.xlu0 1
    %511 = vperm.xlu0 %510, %v140
    %v512 = vpop.permute.xlu0 %511
    %v514 = vperm.slane %v142, 1
    %v515 = vmul.f32 %v452, %v514
    %v516 = vmul.f32 %v456, %v514
    %v517 = vmul.f32 %v460, %v514
    %v518 = vmul.f32 %v464, %v514
    %v519 = vmul.f32 %v468, %v514
    %v520 = vmul.f32 %v472, %v514
    %v521 = vmul.f32 %v476, %v514
    %v522 = vmul.f32 %v480, %v514
    %v523 = vmul.f32 %v484, %v514
    %v524 = vmul.f32 %v488, %v514
    %v525 = vmul.f32 %v492, %v514
    %v526 = vmul.f32 %v496, %v514
    %v527 = vmul.f32 %v500, %v514
    %v528 = vmul.f32 %v504, %v514
    %v529 = vmul.f32 %v508, %v514
    %v530 = vmul.f32 %v512, %v514
    %v531 = vadd.f32 %v434, %v515
    %v532 = vadd.f32 %v435, %v516
    %v533 = vadd.f32 %v436, %v517
    %v534 = vadd.f32 %v437, %v518
    %v535 = vadd.f32 %v438, %v519
    %v536 = vadd.f32 %v439, %v520
    %v537 = vadd.f32 %v440, %v521
    %v538 = vadd.f32 %v441, %v522
    %v539 = vadd.f32 %v442, %v523
    %v540 = vadd.f32 %v443, %v524
    %v541 = vadd.f32 %v444, %v525
    %v542 = vadd.f32 %v445, %v526
    %v543 = vadd.f32 %v446, %v527
    %v544 = vadd.f32 %v447, %v528
    %v545 = vadd.f32 %v448, %v529
    %v546 = vadd.f32 %v449, %v530
    %v547 = vld [vmem:[%s4] sm:$0x1]
    %v549 = vperm.slane %v547, 0
    %v551 = vadd.f32 %v531, %v549
    %v552 = vadd.f32 %v532, %v549
    %v553 = vadd.f32 %v533, %v549
    %v554 = vadd.f32 %v534, %v549
    %v555 = vadd.f32 %v535, %v549
    %v556 = vadd.f32 %v536, %v549
    %v557 = vadd.f32 %v537, %v549
    %v558 = vadd.f32 %v538, %v549
    %v559 = vadd.f32 %v539, %v549
    %v560 = vadd.f32 %v540, %v549
    %v561 = vadd.f32 %v541, %v549
    %v562 = vadd.f32 %v542, %v549
    %v563 = vadd.f32 %v543, %v549
    %v564 = vadd.f32 %v544, %v549
    %v565 = vadd.f32 %v545, %v549
    %v566 = vadd.f32 %v546, %v549
    %v567 = vand.u32 2147483647, %v551
    %vm568 = vcmp.le.f32.partialorder %v567, 0.7853982
    %vm569 = vcmp.lt.s32.totalorder %v551, 0
    %v570 = vand.u32 %v551, 2139095040
    %v571 = vshrl.u32 %v570, 23
    %v572 = vsub.s32 %v571, 127
    %v573 = vand.u32 2147483647, %v551
    %v574 = vand.u32 %v573, 8388607
    %v575 = vor.u32 %v574, 8388608
    %v576 = vsub.s32 0, %v575
    %v577 = vadd.s32 %v572, 1
    %vm578 = vcmp.gt.s32.totalorder %v577, 0
    %v579 = vsel %vm578, %v577, 0
    %v580 = vshrl.u32 %v579, 5
    %v581 = vand.u32 %v579, 31
    %v582 = vsub.s32 32, %v581
    %v583 = vshrl.u32 683565275, %v582
    %v584 = vshll.u32 683565275, %v581
    %v585 = vshrl.u32 2475754826, %v582
    %v586 = vor.u32 %v584, %v585
    %v587 = vshll.u32 2475754826, %v581
    %v588 = vshrl.u32 2131351028, %v582
    %v589 = vor.u32 %v587, %v588
    %v590 = vshll.u32 2131351028, %v581
    %v591 = vshrl.u32 2102212464, %v582
    %v592 = vor.u32 %v590, %v591
    %v593 = vshll.u32 2102212464, %v581
    %v594 = vshrl.u32 920167782, %v582
    %v595 = vor.u32 %v593, %v594
    %v596 = vshll.u32 920167782, %v581
    %v597 = vshrl.u32 1326507024, %v582
    %v598 = vor.u32 %v596, %v597
    %vm599 = vcmp.lt.s32.totalorder %v580, 1
    %vm600 = vcmp.lt.s32.totalorder %v580, 2
    %vm601 = vcmp.lt.s32.totalorder %v580, 3
    %vm602 = vcmp.lt.s32.totalorder %v580, 4
    %v603 = vsel %vm599, %v583, %v586
    %v604 = vsel %vm602, %v592, 2102212464
    %v605 = vsel %vm601, %v589, %v604
    %v606 = vsel %vm600, %v603, %v605
    %v607 = vsel %vm599, %v586, %v589
    %v608 = vsel %vm602, %v595, 920167782
    %v609 = vsel %vm601, %v592, %v608
    %v610 = vsel %vm600, %v607, %v609
    %v611 = vsel %vm599, %v589, %v592
    %v612 = vsel %vm602, %v598, 1326507024
    %v613 = vsel %vm601, %v595, %v612
    %v614 = vsel %vm600, %v611, %v613
    %v615 = vshll.u32 %v575, 8
    %v616 = vand.u32 %v615, 65535
    %v617 = vshrl.u32 %v615, 16
    %v618 = vand.u32 %v614, 65535
    %v619 = vshrl.u32 %v614, 16
    %v620 = vmul.u32 %v616, %v618
    %v621 = vmul.u32 %v616, %v619
    %v622 = vmul.u32 %v617, %v618
    %v623 = vmul.u32 %v617, %v619
    %v624 = vshll.u32 %v621, 16
    %v625 = vshrl.u32 %v621, 16
    %v626 = vshll.u32 %v622, 16
    %v627 = vshrl.u32 %v622, 16
    %vm628 = vc.u32 %v620, %v624
    %v629 = vsel %vm628, 1, 0
    %v630 = vadd.s32 %v620, %v624
    %v631 = vadd.s32 %v623, %v629
    %vm632 = vc.u32 %v630, %v626
    %v633 = vsel %vm632, 1, 0
    %v634 = vadd.s32 %v630, %v626
    %v635 = vadd.s32 %v631, %v633
    %v636 = vadd.s32 %v635, %v625
    %v637 = vadd.s32 %v636, %v627
    %v638 = vand.u32 %v615, 65535
    %v639 = vshrl.u32 %v615, 16
    %v640 = vand.u32 %v610, 65535
    %v641 = vshrl.u32 %v610, 16
    %v642 = vmul.u32 %v638, %v640
    %v643 = vmul.u32 %v638, %v641
    %v644 = vmul.u32 %v639, %v640
    %v645 = vmul.u32 %v639, %v641
    %v646 = vshll.u32 %v643, 16
    %v647 = vshrl.u32 %v643, 16
    %v648 = vshll.u32 %v644, 16
    %v649 = vshrl.u32 %v644, 16
    %vm650 = vc.u32 %v642, %v646
    %v651 = vsel %vm650, 1, 0
    %v652 = vadd.s32 %v642, %v646
    %v653 = vadd.s32 %v645, %v651
    %vm654 = vc.u32 %v652, %v648
    %v655 = vsel %vm654, 1, 0
    %v656 = vadd.s32 %v652, %v648
    %v657 = vadd.s32 %v653, %v655
    %v658 = vadd.s32 %v657, %v647
    %v659 = vadd.s32 %v658, %v649
    %v660 = vmul.u32 %v615, %v606
    %v661 = vadd.s32 %v637, %v656
    %vm662 = vc.u32 %v637, %v656
    %v663 = vadd.s32 %v659, 1
    %v664 = vsel %vm662, %v663, %v659
    %v665 = vadd.s32 %v660, %v664
    %v666 = vadd.s32 %v665, 536870912
    %v667 = vshrl.u32 %v666, 30
    %v668 = vshll.u32 %v667, 30
    %v669 = vsub.s32 %v665, %v668
    %vm670 = vcmp.lt.s32.totalorder %v669, 0
    %v671 = vsub.s32 0, %v669
    %v672 = vsel %vm670, %v671, %v669
    %v673 = vclz %v672
    %v674 = vsub.s32 %v673, 2
    %vm675 = vcmp.gt.s32.totalorder 0, %v674
    %v676 = vsel %vm675, 0, %v674
    %v677 = vsub.s32 32, %v676
    %v678 = vshll.u32 %v669, %v676
    %v679 = vshrl.u32 %v661, %v677
    %v680 = vor.u32 %v678, %v679
    %v681 = vsub.s32 4294967266, %v676
    %v682 = vadd.s32 %v681, 127
    %v683 = vshll.u32 %v682, 23
    %v684 = vor.u32 4788187, %v683
    %v685 = vand.u32 2147483647, %v684
    %v687 = vcvt.s32.f32 %v680
    %v688 = vmul.f32 %v687, %v685
    %v689 = vxor.u32 %v688, 2147483648
    %v690 = vsel %vm569, %v689, %v688
    %v691 = vsub.s32 4, %v667
    %v692 = vsel %vm569, %v691, %v667
    %v693 = vsel %vm568, %v551, %v690
    %v694 = vsel %vm568, 0, %v692
    %v695 = vmul.f32 %v693, %v693
    %v696 = vmul.f32 %v695, -0.001358992
    %v697 = vadd.f32 %v696, 0.041655596
    %v698 = vmul.f32 %v695, %v697
    %v699 = vadd.f32 %v698, -0.4999988
    %v700 = vmul.f32 %v695, %v699
    %v701 = vadd.f32 1.0, %v700
    %v702 = vmul.f32 %v693, %v693
    %v703 = vmul.f32 %v702, -0.00019511016
    %v704 = vadd.f32 %v703, 0.008332121
    %v705 = vmul.f32 %v702, %v704
    %v706 = vadd.f32 %v705, -0.16666654
    %v707 = vmul.f32 %v702, %v706
    %v708 = vadd.f32 %v707, 1.0
    %v709 = vmul.f32 %v708, %v693
    %vm710 = vweird.f32 %v551
    %v711 = vadd.s32 %v694, 3
    %v712 = vand.u32 %v711, 3
    %vm713 = vcmp.lt.s32.totalorder %v712, 2
    %vm714 = vcmp.eq.s32.totalorder %v712, 0
    %v715 = vxor.u32 %v709, 2147483648
    %v716 = vsel %vm714, %v701, %v715
    %vm717 = vcmp.eq.s32.totalorder %v712, 2
    %v718 = vxor.u32 %v701, 2147483648
    %v719 = vsel %vm717, %v718, %v709
    %v720 = vsel %vm713, %v716, %v719
    %v721 = vsel %vm710, nan, %v720
    %v722 = vand.u32 2147483647, %v552
    %vm723 = vcmp.le.f32.partialorder %v722, 0.7853982
    %vm724 = vcmp.lt.s32.totalorder %v552, 0
    %v725 = vand.u32 %v552, 2139095040
    %v726 = vshrl.u32 %v725, 23
    %v727 = vsub.s32 %v726, 127
    %v728 = vand.u32 2147483647, %v552
    %v729 = vand.u32 %v728, 8388607
    %v730 = vor.u32 %v729, 8388608
    %v731 = vsub.s32 0, %v730
    %v732 = vadd.s32 %v727, 1
    %vm733 = vcmp.gt.s32.totalorder %v732, 0
    %v734 = vsel %vm733, %v732, 0
    %v735 = vshrl.u32 %v734, 5
    %v736 = vand.u32 %v734, 31
    %v737 = vsub.s32 32, %v736
    %v738 = vshrl.u32 683565275, %v737
    %v739 = vshll.u32 683565275, %v736
    %v740 = vshrl.u32 2475754826, %v737
    %v741 = vor.u32 %v739, %v740
    %v742 = vshll.u32 2475754826, %v736
    %v743 = vshrl.u32 2131351028, %v737
    %v744 = vor.u32 %v742, %v743
    %v745 = vshll.u32 2131351028, %v736
    %v746 = vshrl.u32 2102212464, %v737
    %v747 = vor.u32 %v745, %v746
    %v748 = vshll.u32 2102212464, %v736
    %v749 = vshrl.u32 920167782, %v737
    %v750 = vor.u32 %v748, %v749
    %v751 = vshll.u32 920167782, %v736
    %v752 = vshrl.u32 1326507024, %v737
    %v753 = vor.u32 %v751, %v752
    %vm754 = vcmp.lt.s32.totalorder %v735, 1
    %vm755 = vcmp.lt.s32.totalorder %v735, 2
    %vm756 = vcmp.lt.s32.totalorder %v735, 3
    %vm757 = vcmp.lt.s32.totalorder %v735, 4
    %v758 = vsel %vm754, %v738, %v741
    %v759 = vsel %vm757, %v747, 2102212464
    %v760 = vsel %vm756, %v744, %v759
    %v761 = vsel %vm755, %v758, %v760
    %v762 = vsel %vm754, %v741, %v744
    %v763 = vsel %vm757, %v750, 920167782
    %v764 = vsel %vm756, %v747, %v763
    %v765 = vsel %vm755, %v762, %v764
    %v766 = vsel %vm754, %v744, %v747
    %v767 = vsel %vm757, %v753, 1326507024
    %v768 = vsel %vm756, %v750, %v767
    %v769 = vsel %vm755, %v766, %v768
    %v770 = vshll.u32 %v730, 8
    %v771 = vand.u32 %v770, 65535
    %v772 = vshrl.u32 %v770, 16
    %v773 = vand.u32 %v769, 65535
    %v774 = vshrl.u32 %v769, 16
    %v775 = vmul.u32 %v771, %v773
    %v776 = vmul.u32 %v771, %v774
    %v777 = vmul.u32 %v772, %v773
    %v778 = vmul.u32 %v772, %v774
    %v779 = vshll.u32 %v776, 16
    %v780 = vshrl.u32 %v776, 16
    %v781 = vshll.u32 %v777, 16
    %v782 = vshrl.u32 %v777, 16
    %vm783 = vc.u32 %v775, %v779
    %v784 = vsel %vm783, 1, 0
    %v785 = vadd.s32 %v775, %v779
    %v786 = vadd.s32 %v778, %v784
    %vm787 = vc.u32 %v785, %v781
    %v788 = vsel %vm787, 1, 0
    %v789 = vadd.s32 %v785, %v781
    %v790 = vadd.s32 %v786, %v788
    %v791 = vadd.s32 %v790, %v780
    %v792 = vadd.s32 %v791, %v782
    %v793 = vand.u32 %v770, 65535
    %v794 = vshrl.u32 %v770, 16
    %v795 = vand.u32 %v765, 65535
    %v796 = vshrl.u32 %v765, 16
    %v797 = vmul.u32 %v793, %v795
    %v798 = vmul.u32 %v793, %v796
    %v799 = vmul.u32 %v794, %v795
    %v800 = vmul.u32 %v794, %v796
    %v801 = vshll.u32 %v798, 16
    %v802 = vshrl.u32 %v798, 16
    %v803 = vshll.u32 %v799, 16
    %v804 = vshrl.u32 %v799, 16
    %vm805 = vc.u32 %v797, %v801
    %v806 = vsel %vm805, 1, 0
    %v807 = vadd.s32 %v797, %v801
    %v808 = vadd.s32 %v800, %v806
    %vm809 = vc.u32 %v807, %v803
    %v810 = vsel %vm809, 1, 0
    %v811 = vadd.s32 %v807, %v803
    %v812 = vadd.s32 %v808, %v810
    %v813 = vadd.s32 %v812, %v802
    %v814 = vadd.s32 %v813, %v804
    %v815 = vmul.u32 %v770, %v761
    %v816 = vadd.s32 %v792, %v811
    %vm817 = vc.u32 %v792, %v811
    %v818 = vadd.s32 %v814, 1
    %v819 = vsel %vm817, %v818, %v814
    %v820 = vadd.s32 %v815, %v819
    %v821 = vadd.s32 %v820, 536870912
    %v822 = vshrl.u32 %v821, 30
    %v823 = vshll.u32 %v822, 30
    %v824 = vsub.s32 %v820, %v823
    %vm825 = vcmp.lt.s32.totalorder %v824, 0
    %v826 = vsub.s32 0, %v824
    %v827 = vsel %vm825, %v826, %v824
    %v828 = vclz %v827
    %v829 = vsub.s32 %v828, 2
    %vm830 = vcmp.gt.s32.totalorder 0, %v829
    %v831 = vsel %vm830, 0, %v829
    %v832 = vsub.s32 32, %v831
    %v833 = vshll.u32 %v824, %v831
    %v834 = vshrl.u32 %v816, %v832
    %v835 = vor.u32 %v833, %v834
    %v836 = vsub.s32 4294967266, %v831
    %v837 = vadd.s32 %v836, 127
    %v838 = vshll.u32 %v837, 23
    %v839 = vor.u32 4788187, %v838
    %v840 = vand.u32 2147483647, %v839
    %v842 = vcvt.s32.f32 %v835
    %v843 = vmul.f32 %v842, %v840
    %v844 = vxor.u32 %v843, 2147483648
    %v845 = vsel %vm724, %v844, %v843
    %v846 = vsub.s32 4, %v822
    %v847 = vsel %vm724, %v846, %v822
    %v848 = vsel %vm723, %v552, %v845
    %v849 = vsel %vm723, 0, %v847
    %v850 = vmul.f32 %v848, %v848
    %v851 = vmul.f32 %v850, -0.001358992
    %v852 = vadd.f32 %v851, 0.041655596
    %v853 = vmul.f32 %v850, %v852
    %v854 = vadd.f32 %v853, -0.4999988
    %v855 = vmul.f32 %v850, %v854
    %v856 = vadd.f32 1.0, %v855
    %v857 = vmul.f32 %v848, %v848
    %v858 = vmul.f32 %v857, -0.00019511016
    %v859 = vadd.f32 %v858, 0.008332121
    %v860 = vmul.f32 %v857, %v859
    %v861 = vadd.f32 %v860, -0.16666654
    %v862 = vmul.f32 %v857, %v861
    %v863 = vadd.f32 %v862, 1.0
    %v864 = vmul.f32 %v863, %v848
    %vm865 = vweird.f32 %v552
    %v866 = vadd.s32 %v849, 3
    %v867 = vand.u32 %v866, 3
    %vm868 = vcmp.lt.s32.totalorder %v867, 2
    %vm869 = vcmp.eq.s32.totalorder %v867, 0
    %v870 = vxor.u32 %v864, 2147483648
    %v871 = vsel %vm869, %v856, %v870
    %vm872 = vcmp.eq.s32.totalorder %v867, 2
    %v873 = vxor.u32 %v856, 2147483648
    %v874 = vsel %vm872, %v873, %v864
    %v875 = vsel %vm868, %v871, %v874
    %v876 = vsel %vm865, nan, %v875
    %v877 = vand.u32 2147483647, %v553
    %vm878 = vcmp.le.f32.partialorder %v877, 0.7853982
    %vm879 = vcmp.lt.s32.totalorder %v553, 0
    %v880 = vand.u32 %v553, 2139095040
    %v881 = vshrl.u32 %v880, 23
    %v882 = vsub.s32 %v881, 127
    %v883 = vand.u32 2147483647, %v553
    %v884 = vand.u32 %v883, 8388607
    %v885 = vor.u32 %v884, 8388608
    %v886 = vsub.s32 0, %v885
    %v887 = vadd.s32 %v882, 1
    %vm888 = vcmp.gt.s32.totalorder %v887, 0
    %v889 = vsel %vm888, %v887, 0
    %v890 = vshrl.u32 %v889, 5
    %v891 = vand.u32 %v889, 31
    %v892 = vsub.s32 32, %v891
    %v893 = vshrl.u32 683565275, %v892
    %v894 = vshll.u32 683565275, %v891
    %v895 = vshrl.u32 2475754826, %v892
    %v896 = vor.u32 %v894, %v895
    %v897 = vshll.u32 2475754826, %v891
    %v898 = vshrl.u32 2131351028, %v892
    %v899 = vor.u32 %v897, %v898
    %v900 = vshll.u32 2131351028, %v891
    %v901 = vshrl.u32 2102212464, %v892
    %v902 = vor.u32 %v900, %v901
    %v903 = vshll.u32 2102212464, %v891
    %v904 = vshrl.u32 920167782, %v892
    %v905 = vor.u32 %v903, %v904
    %v906 = vshll.u32 920167782, %v891
    %v907 = vshrl.u32 1326507024, %v892
    %v908 = vor.u32 %v906, %v907
    %vm909 = vcmp.lt.s32.totalorder %v890, 1
    %vm910 = vcmp.lt.s32.totalorder %v890, 2
    %vm911 = vcmp.lt.s32.totalorder %v890, 3
    %vm912 = vcmp.lt.s32.totalorder %v890, 4
    %v913 = vsel %vm909, %v893, %v896
    %v914 = vsel %vm912, %v902, 2102212464
    %v915 = vsel %vm911, %v899, %v914
    %v916 = vsel %vm910, %v913, %v915
    %v917 = vsel %vm909, %v896, %v899
    %v918 = vsel %vm912, %v905, 920167782
    %v919 = vsel %vm911, %v902, %v918
    %v920 = vsel %vm910, %v917, %v919
    %v921 = vsel %vm909, %v899, %v902
    %v922 = vsel %vm912, %v908, 1326507024
    %v923 = vsel %vm911, %v905, %v922
    %v924 = vsel %vm910, %v921, %v923
    %v925 = vshll.u32 %v885, 8
    %v926 = vand.u32 %v925, 65535
    %v927 = vshrl.u32 %v925, 16
    %v928 = vand.u32 %v924, 65535
    %v929 = vshrl.u32 %v924, 16
    %v930 = vmul.u32 %v926, %v928
    %v931 = vmul.u32 %v926, %v929
    %v932 = vmul.u32 %v927, %v928
    %v933 = vmul.u32 %v927, %v929
    %v934 = vshll.u32 %v931, 16
    %v935 = vshrl.u32 %v931, 16
    %v936 = vshll.u32 %v932, 16
    %v937 = vshrl.u32 %v932, 16
    %vm938 = vc.u32 %v930, %v934
    %v939 = vsel %vm938, 1, 0
    %v940 = vadd.s32 %v930, %v934
    %v941 = vadd.s32 %v933, %v939
    %vm942 = vc.u32 %v940, %v936
    %v943 = vsel %vm942, 1, 0
    %v944 = vadd.s32 %v940, %v936
    %v945 = vadd.s32 %v941, %v943
    %v946 = vadd.s32 %v945, %v935
    %v947 = vadd.s32 %v946, %v937
    %v948 = vand.u32 %v925, 65535
    %v949 = vshrl.u32 %v925, 16
    %v950 = vand.u32 %v920, 65535
    %v951 = vshrl.u32 %v920, 16
    %v952 = vmul.u32 %v948, %v950
    %v953 = vmul.u32 %v948, %v951
    %v954 = vmul.u32 %v949, %v950
    %v955 = vmul.u32 %v949, %v951
    %v956 = vshll.u32 %v953, 16
    %v957 = vshrl.u32 %v953, 16
    %v958 = vshll.u32 %v954, 16
    %v959 = vshrl.u32 %v954, 16
    %vm960 = vc.u32 %v952, %v956
    %v961 = vsel %vm960, 1, 0
    %v962 = vadd.s32 %v952, %v956
    %v963 = vadd.s32 %v955, %v961
    %vm964 = vc.u32 %v962, %v958
    %v965 = vsel %vm964, 1, 0
    %v966 = vadd.s32 %v962, %v958
    %v967 = vadd.s32 %v963, %v965
    %v968 = vadd.s32 %v967, %v957
    %v969 = vadd.s32 %v968, %v959
    %v970 = vmul.u32 %v925, %v916
    %v971 = vadd.s32 %v947, %v966
    %vm972 = vc.u32 %v947, %v966
    %v973 = vadd.s32 %v969, 1
    %v974 = vsel %vm972, %v973, %v969
    %v975 = vadd.s32 %v970, %v974
    %v976 = vadd.s32 %v975, 536870912
    %v977 = vshrl.u32 %v976, 30
    %v978 = vshll.u32 %v977, 30
    %v979 = vsub.s32 %v975, %v978
    %vm980 = vcmp.lt.s32.totalorder %v979, 0
    %v981 = vsub.s32 0, %v979
    %v982 = vsel %vm980, %v981, %v979
    %v983 = vclz %v982
    %v984 = vsub.s32 %v983, 2
    %vm985 = vcmp.gt.s32.totalorder 0, %v984
    %v986 = vsel %vm985, 0, %v984
    %v987 = vsub.s32 32, %v986
    %v988 = vshll.u32 %v979, %v986
    %v989 = vshrl.u32 %v971, %v987
    %v990 = vor.u32 %v988, %v989
    %v991 = vsub.s32 4294967266, %v986
    %v992 = vadd.s32 %v991, 127
    %v993 = vshll.u32 %v992, 23
    %v994 = vor.u32 4788187, %v993
    %v995 = vand.u32 2147483647, %v994
    %v997 = vcvt.s32.f32 %v990
    %v998 = vmul.f32 %v997, %v995
    %v999 = vxor.u32 %v998, 2147483648
    %v1000 = vsel %vm879, %v999, %v998
    %v1001 = vsub.s32 4, %v977
    %v1002 = vsel %vm879, %v1001, %v977
    %v1003 = vsel %vm878, %v553, %v1000
    %v1004 = vsel %vm878, 0, %v1002
    %v1005 = vmul.f32 %v1003, %v1003
    %v1006 = vmul.f32 %v1005, -0.001358992
    %v1007 = vadd.f32 %v1006, 0.041655596
    %v1008 = vmul.f32 %v1005, %v1007
    %v1009 = vadd.f32 %v1008, -0.4999988
    %v1010 = vmul.f32 %v1005, %v1009
    %v1011 = vadd.f32 1.0, %v1010
    %v1012 = vmul.f32 %v1003, %v1003
    %v1013 = vmul.f32 %v1012, -0.00019511016
    %v1014 = vadd.f32 %v1013, 0.008332121
    %v1015 = vmul.f32 %v1012, %v1014
    %v1016 = vadd.f32 %v1015, -0.16666654
    %v1017 = vmul.f32 %v1012, %v1016
    %v1018 = vadd.f32 %v1017, 1.0
    %v1019 = vmul.f32 %v1018, %v1003
    %vm1020 = vweird.f32 %v553
    %v1021 = vadd.s32 %v1004, 3
    %v1022 = vand.u32 %v1021, 3
    %vm1023 = vcmp.lt.s32.totalorder %v1022, 2
    %vm1024 = vcmp.eq.s32.totalorder %v1022, 0
    %v1025 = vxor.u32 %v1019, 2147483648
    %v1026 = vsel %vm1024, %v1011, %v1025
    %vm1027 = vcmp.eq.s32.totalorder %v1022, 2
    %v1028 = vxor.u32 %v1011, 2147483648
    %v1029 = vsel %vm1027, %v1028, %v1019
    %v1030 = vsel %vm1023, %v1026, %v1029
    %v1031 = vsel %vm1020, nan, %v1030
    %v1032 = vand.u32 2147483647, %v554
    %vm1033 = vcmp.le.f32.partialorder %v1032, 0.7853982
    %vm1034 = vcmp.lt.s32.totalorder %v554, 0
    %v1035 = vand.u32 %v554, 2139095040
    %v1036 = vshrl.u32 %v1035, 23
    %v1037 = vsub.s32 %v1036, 127
    %v1038 = vand.u32 2147483647, %v554
    %v1039 = vand.u32 %v1038, 8388607
    %v1040 = vor.u32 %v1039, 8388608
    %v1041 = vsub.s32 0, %v1040
    %v1042 = vadd.s32 %v1037, 1
    %vm1043 = vcmp.gt.s32.totalorder %v1042, 0
    %v1044 = vsel %vm1043, %v1042, 0
    %v1045 = vshrl.u32 %v1044, 5
    %v1046 = vand.u32 %v1044, 31
    %v1047 = vsub.s32 32, %v1046
    %v1048 = vshrl.u32 683565275, %v1047
    %v1049 = vshll.u32 683565275, %v1046
    %v1050 = vshrl.u32 2475754826, %v1047
    %v1051 = vor.u32 %v1049, %v1050
    %v1052 = vshll.u32 2475754826, %v1046
    %v1053 = vshrl.u32 2131351028, %v1047
    %v1054 = vor.u32 %v1052, %v1053
    %v1055 = vshll.u32 2131351028, %v1046
    %v1056 = vshrl.u32 2102212464, %v1047
    %v1057 = vor.u32 %v1055, %v1056
    %v1058 = vshll.u32 2102212464, %v1046
    %v1059 = vshrl.u32 920167782, %v1047
    %v1060 = vor.u32 %v1058, %v1059
    %v1061 = vshll.u32 920167782, %v1046
    %v1062 = vshrl.u32 1326507024, %v1047
    %v1063 = vor.u32 %v1061, %v1062
    %vm1064 = vcmp.lt.s32.totalorder %v1045, 1
    %vm1065 = vcmp.lt.s32.totalorder %v1045, 2
    %vm1066 = vcmp.lt.s32.totalorder %v1045, 3
    %vm1067 = vcmp.lt.s32.totalorder %v1045, 4
    %v1068 = vsel %vm1064, %v1048, %v1051
    %v1069 = vsel %vm1067, %v1057, 2102212464
    %v1070 = vsel %vm1066, %v1054, %v1069
    %v1071 = vsel %vm1065, %v1068, %v1070
    %v1072 = vsel %vm1064, %v1051, %v1054
    %v1073 = vsel %vm1067, %v1060, 920167782
    %v1074 = vsel %vm1066, %v1057, %v1073
    %v1075 = vsel %vm1065, %v1072, %v1074
    %v1076 = vsel %vm1064, %v1054, %v1057
    %v1077 = vsel %vm1067, %v1063, 1326507024
    %v1078 = vsel %vm1066, %v1060, %v1077
    %v1079 = vsel %vm1065, %v1076, %v1078
    %v1080 = vshll.u32 %v1040, 8
    %v1081 = vand.u32 %v1080, 65535
    %v1082 = vshrl.u32 %v1080, 16
    %v1083 = vand.u32 %v1079, 65535
    %v1084 = vshrl.u32 %v1079, 16
    %v1085 = vmul.u32 %v1081, %v1083
    %v1086 = vmul.u32 %v1081, %v1084
    %v1087 = vmul.u32 %v1082, %v1083
    %v1088 = vmul.u32 %v1082, %v1084
    %v1089 = vshll.u32 %v1086, 16
    %v1090 = vshrl.u32 %v1086, 16
    %v1091 = vshll.u32 %v1087, 16
    %v1092 = vshrl.u32 %v1087, 16
    %vm1093 = vc.u32 %v1085, %v1089
    %v1094 = vsel %vm1093, 1, 0
    %v1095 = vadd.s32 %v1085, %v1089
    %v1096 = vadd.s32 %v1088, %v1094
    %vm1097 = vc.u32 %v1095, %v1091
    %v1098 = vsel %vm1097, 1, 0
    %v1099 = vadd.s32 %v1095, %v1091
    %v1100 = vadd.s32 %v1096, %v1098
    %v1101 = vadd.s32 %v1100, %v1090
    %v1102 = vadd.s32 %v1101, %v1092
    %v1103 = vand.u32 %v1080, 65535
    %v1104 = vshrl.u32 %v1080, 16
    %v1105 = vand.u32 %v1075, 65535
    %v1106 = vshrl.u32 %v1075, 16
    %v1107 = vmul.u32 %v1103, %v1105
    %v1108 = vmul.u32 %v1103, %v1106
    %v1109 = vmul.u32 %v1104, %v1105
    %v1110 = vmul.u32 %v1104, %v1106
    %v1111 = vshll.u32 %v1108, 16
    %v1112 = vshrl.u32 %v1108, 16
    %v1113 = vshll.u32 %v1109, 16
    %v1114 = vshrl.u32 %v1109, 16
    %vm1115 = vc.u32 %v1107, %v1111
    %v1116 = vsel %vm1115, 1, 0
    %v1117 = vadd.s32 %v1107, %v1111
    %v1118 = vadd.s32 %v1110, %v1116
    %vm1119 = vc.u32 %v1117, %v1113
    %v1120 = vsel %vm1119, 1, 0
    %v1121 = vadd.s32 %v1117, %v1113
    %v1122 = vadd.s32 %v1118, %v1120
    %v1123 = vadd.s32 %v1122, %v1112
    %v1124 = vadd.s32 %v1123, %v1114
    %v1125 = vmul.u32 %v1080, %v1071
    %v1126 = vadd.s32 %v1102, %v1121
    %vm1127 = vc.u32 %v1102, %v1121
    %v1128 = vadd.s32 %v1124, 1
    %v1129 = vsel %vm1127, %v1128, %v1124
    %v1130 = vadd.s32 %v1125, %v1129
    %v1131 = vadd.s32 %v1130, 536870912
    %v1132 = vshrl.u32 %v1131, 30
    %v1133 = vshll.u32 %v1132, 30
    %v1134 = vsub.s32 %v1130, %v1133
    %vm1135 = vcmp.lt.s32.totalorder %v1134, 0
    %v1136 = vsub.s32 0, %v1134
    %v1137 = vsel %vm1135, %v1136, %v1134
    %v1138 = vclz %v1137
    %v1139 = vsub.s32 %v1138, 2
    %vm1140 = vcmp.gt.s32.totalorder 0, %v1139
    %v1141 = vsel %vm1140, 0, %v1139
    %v1142 = vsub.s32 32, %v1141
    %v1143 = vshll.u32 %v1134, %v1141
    %v1144 = vshrl.u32 %v1126, %v1142
    %v1145 = vor.u32 %v1143, %v1144
    %v1146 = vsub.s32 4294967266, %v1141
    %v1147 = vadd.s32 %v1146, 127
    %v1148 = vshll.u32 %v1147, 23
    %v1149 = vor.u32 4788187, %v1148
    %v1150 = vand.u32 2147483647, %v1149
    %v1152 = vcvt.s32.f32 %v1145
    %v1153 = vmul.f32 %v1152, %v1150
    %v1154 = vxor.u32 %v1153, 2147483648
    %v1155 = vsel %vm1034, %v1154, %v1153
    %v1156 = vsub.s32 4, %v1132
    %v1157 = vsel %vm1034, %v1156, %v1132
    %v1158 = vsel %vm1033, %v554, %v1155
    %v1159 = vsel %vm1033, 0, %v1157
    %v1160 = vmul.f32 %v1158, %v1158
    %v1161 = vmul.f32 %v1160, -0.001358992
    %v1162 = vadd.f32 %v1161, 0.041655596
    %v1163 = vmul.f32 %v1160, %v1162
    %v1164 = vadd.f32 %v1163, -0.4999988
    %v1165 = vmul.f32 %v1160, %v1164
    %v1166 = vadd.f32 1.0, %v1165
    %v1167 = vmul.f32 %v1158, %v1158
    %v1168 = vmul.f32 %v1167, -0.00019511016
    %v1169 = vadd.f32 %v1168, 0.008332121
    %v1170 = vmul.f32 %v1167, %v1169
    %v1171 = vadd.f32 %v1170, -0.16666654
    %v1172 = vmul.f32 %v1167, %v1171
    %v1173 = vadd.f32 %v1172, 1.0
    %v1174 = vmul.f32 %v1173, %v1158
    %vm1175 = vweird.f32 %v554
    %v1176 = vadd.s32 %v1159, 3
    %v1177 = vand.u32 %v1176, 3
    %vm1178 = vcmp.lt.s32.totalorder %v1177, 2
    %vm1179 = vcmp.eq.s32.totalorder %v1177, 0
    %v1180 = vxor.u32 %v1174, 2147483648
    %v1181 = vsel %vm1179, %v1166, %v1180
    %vm1182 = vcmp.eq.s32.totalorder %v1177, 2
    %v1183 = vxor.u32 %v1166, 2147483648
    %v1184 = vsel %vm1182, %v1183, %v1174
    %v1185 = vsel %vm1178, %v1181, %v1184
    %v1186 = vsel %vm1175, nan, %v1185
    %v1187 = vand.u32 2147483647, %v555
    %vm1188 = vcmp.le.f32.partialorder %v1187, 0.7853982
    %vm1189 = vcmp.lt.s32.totalorder %v555, 0
    %v1190 = vand.u32 %v555, 2139095040
    %v1191 = vshrl.u32 %v1190, 23
    %v1192 = vsub.s32 %v1191, 127
    %v1193 = vand.u32 2147483647, %v555
    %v1194 = vand.u32 %v1193, 8388607
    %v1195 = vor.u32 %v1194, 8388608
    %v1196 = vsub.s32 0, %v1195
    %v1197 = vadd.s32 %v1192, 1
    %vm1198 = vcmp.gt.s32.totalorder %v1197, 0
    %v1199 = vsel %vm1198, %v1197, 0
    %v1200 = vshrl.u32 %v1199, 5
    %v1201 = vand.u32 %v1199, 31
    %v1202 = vsub.s32 32, %v1201
    %v1203 = vshrl.u32 683565275, %v1202
    %v1204 = vshll.u32 683565275, %v1201
    %v1205 = vshrl.u32 2475754826, %v1202
    %v1206 = vor.u32 %v1204, %v1205
    %v1207 = vshll.u32 2475754826, %v1201
    %v1208 = vshrl.u32 2131351028, %v1202
    %v1209 = vor.u32 %v1207, %v1208
    %v1210 = vshll.u32 2131351028, %v1201
    %v1211 = vshrl.u32 2102212464, %v1202
    %v1212 = vor.u32 %v1210, %v1211
    %v1213 = vshll.u32 2102212464, %v1201
    %v1214 = vshrl.u32 920167782, %v1202
    %v1215 = vor.u32 %v1213, %v1214
    %v1216 = vshll.u32 920167782, %v1201
    %v1217 = vshrl.u32 1326507024, %v1202
    %v1218 = vor.u32 %v1216, %v1217
    %vm1219 = vcmp.lt.s32.totalorder %v1200, 1
    %vm1220 = vcmp.lt.s32.totalorder %v1200, 2
    %vm1221 = vcmp.lt.s32.totalorder %v1200, 3
    %vm1222 = vcmp.lt.s32.totalorder %v1200, 4
    %v1223 = vsel %vm1219, %v1203, %v1206
    %v1224 = vsel %vm1222, %v1212, 2102212464
    %v1225 = vsel %vm1221, %v1209, %v1224
    %v1226 = vsel %vm1220, %v1223, %v1225
    %v1227 = vsel %vm1219, %v1206, %v1209
    %v1228 = vsel %vm1222, %v1215, 920167782
    %v1229 = vsel %vm1221, %v1212, %v1228
    %v1230 = vsel %vm1220, %v1227, %v1229
    %v1231 = vsel %vm1219, %v1209, %v1212
    %v1232 = vsel %vm1222, %v1218, 1326507024
    %v1233 = vsel %vm1221, %v1215, %v1232
    %v1234 = vsel %vm1220, %v1231, %v1233
    %v1235 = vshll.u32 %v1195, 8
    %v1236 = vand.u32 %v1235, 65535
    %v1237 = vshrl.u32 %v1235, 16
    %v1238 = vand.u32 %v1234, 65535
    %v1239 = vshrl.u32 %v1234, 16
    %v1240 = vmul.u32 %v1236, %v1238
    %v1241 = vmul.u32 %v1236, %v1239
    %v1242 = vmul.u32 %v1237, %v1238
    %v1243 = vmul.u32 %v1237, %v1239
    %v1244 = vshll.u32 %v1241, 16
    %v1245 = vshrl.u32 %v1241, 16
    %v1246 = vshll.u32 %v1242, 16
    %v1247 = vshrl.u32 %v1242, 16
    %vm1248 = vc.u32 %v1240, %v1244
    %v1249 = vsel %vm1248, 1, 0
    %v1250 = vadd.s32 %v1240, %v1244
    %v1251 = vadd.s32 %v1243, %v1249
    %vm1252 = vc.u32 %v1250, %v1246
    %v1253 = vsel %vm1252, 1, 0
    %v1254 = vadd.s32 %v1250, %v1246
    %v1255 = vadd.s32 %v1251, %v1253
    %v1256 = vadd.s32 %v1255, %v1245
    %v1257 = vadd.s32 %v1256, %v1247
    %v1258 = vand.u32 %v1235, 65535
    %v1259 = vshrl.u32 %v1235, 16
    %v1260 = vand.u32 %v1230, 65535
    %v1261 = vshrl.u32 %v1230, 16
    %v1262 = vmul.u32 %v1258, %v1260
    %v1263 = vmul.u32 %v1258, %v1261
    %v1264 = vmul.u32 %v1259, %v1260
    %v1265 = vmul.u32 %v1259, %v1261
    %v1266 = vshll.u32 %v1263, 16
    %v1267 = vshrl.u32 %v1263, 16
    %v1268 = vshll.u32 %v1264, 16
    %v1269 = vshrl.u32 %v1264, 16
    %vm1270 = vc.u32 %v1262, %v1266
    %v1271 = vsel %vm1270, 1, 0
    %v1272 = vadd.s32 %v1262, %v1266
    %v1273 = vadd.s32 %v1265, %v1271
    %vm1274 = vc.u32 %v1272, %v1268
    %v1275 = vsel %vm1274, 1, 0
    %v1276 = vadd.s32 %v1272, %v1268
    %v1277 = vadd.s32 %v1273, %v1275
    %v1278 = vadd.s32 %v1277, %v1267
    %v1279 = vadd.s32 %v1278, %v1269
    %v1280 = vmul.u32 %v1235, %v1226
    %v1281 = vadd.s32 %v1257, %v1276
    %vm1282 = vc.u32 %v1257, %v1276
    %v1283 = vadd.s32 %v1279, 1
    %v1284 = vsel %vm1282, %v1283, %v1279
    %v1285 = vadd.s32 %v1280, %v1284
    %v1286 = vadd.s32 %v1285, 536870912
    %v1287 = vshrl.u32 %v1286, 30
    %v1288 = vshll.u32 %v1287, 30
    %v1289 = vsub.s32 %v1285, %v1288
    %vm1290 = vcmp.lt.s32.totalorder %v1289, 0
    %v1291 = vsub.s32 0, %v1289
    %v1292 = vsel %vm1290, %v1291, %v1289
    %v1293 = vclz %v1292
    %v1294 = vsub.s32 %v1293, 2
    %vm1295 = vcmp.gt.s32.totalorder 0, %v1294
    %v1296 = vsel %vm1295, 0, %v1294
    %v1297 = vsub.s32 32, %v1296
    %v1298 = vshll.u32 %v1289, %v1296
    %v1299 = vshrl.u32 %v1281, %v1297
    %v1300 = vor.u32 %v1298, %v1299
    %v1301 = vsub.s32 4294967266, %v1296
    %v1302 = vadd.s32 %v1301, 127
    %v1303 = vshll.u32 %v1302, 23
    %v1304 = vor.u32 4788187, %v1303
    %v1305 = vand.u32 2147483647, %v1304
    %v1307 = vcvt.s32.f32 %v1300
    %v1308 = vmul.f32 %v1307, %v1305
    %v1309 = vxor.u32 %v1308, 2147483648
    %v1310 = vsel %vm1189, %v1309, %v1308
    %v1311 = vsub.s32 4, %v1287
    %v1312 = vsel %vm1189, %v1311, %v1287
    %v1313 = vsel %vm1188, %v555, %v1310
    %v1314 = vsel %vm1188, 0, %v1312
    %v1315 = vmul.f32 %v1313, %v1313
    %v1316 = vmul.f32 %v1315, -0.001358992
    %v1317 = vadd.f32 %v1316, 0.041655596
    %v1318 = vmul.f32 %v1315, %v1317
    %v1319 = vadd.f32 %v1318, -0.4999988
    %v1320 = vmul.f32 %v1315, %v1319
    %v1321 = vadd.f32 1.0, %v1320
    %v1322 = vmul.f32 %v1313, %v1313
    %v1323 = vmul.f32 %v1322, -0.00019511016
    %v1324 = vadd.f32 %v1323, 0.008332121
    %v1325 = vmul.f32 %v1322, %v1324
    %v1326 = vadd.f32 %v1325, -0.16666654
    %v1327 = vmul.f32 %v1322, %v1326
    %v1328 = vadd.f32 %v1327, 1.0
    %v1329 = vmul.f32 %v1328, %v1313
    %vm1330 = vweird.f32 %v555
    %v1331 = vadd.s32 %v1314, 3
    %v1332 = vand.u32 %v1331, 3
    %vm1333 = vcmp.lt.s32.totalorder %v1332, 2
    %vm1334 = vcmp.eq.s32.totalorder %v1332, 0
    %v1335 = vxor.u32 %v1329, 2147483648
    %v1336 = vsel %vm1334, %v1321, %v1335
    %vm1337 = vcmp.eq.s32.totalorder %v1332, 2
    %v1338 = vxor.u32 %v1321, 2147483648
    %v1339 = vsel %vm1337, %v1338, %v1329
    %v1340 = vsel %vm1333, %v1336, %v1339
    %v1341 = vsel %vm1330, nan, %v1340
    %v1342 = vand.u32 2147483647, %v556
    %vm1343 = vcmp.le.f32.partialorder %v1342, 0.7853982
    %vm1344 = vcmp.lt.s32.totalorder %v556, 0
    %v1345 = vand.u32 %v556, 2139095040
    %v1346 = vshrl.u32 %v1345, 23
    %v1347 = vsub.s32 %v1346, 127
    %v1348 = vand.u32 2147483647, %v556
    %v1349 = vand.u32 %v1348, 8388607
    %v1350 = vor.u32 %v1349, 8388608
    %v1351 = vsub.s32 0, %v1350
    %v1352 = vadd.s32 %v1347, 1
    %vm1353 = vcmp.gt.s32.totalorder %v1352, 0
    %v1354 = vsel %vm1353, %v1352, 0
    %v1355 = vshrl.u32 %v1354, 5
    %v1356 = vand.u32 %v1354, 31
    %v1357 = vsub.s32 32, %v1356
    %v1358 = vshrl.u32 683565275, %v1357
    %v1359 = vshll.u32 683565275, %v1356
    %v1360 = vshrl.u32 2475754826, %v1357
    %v1361 = vor.u32 %v1359, %v1360
    %v1362 = vshll.u32 2475754826, %v1356
    %v1363 = vshrl.u32 2131351028, %v1357
    %v1364 = vor.u32 %v1362, %v1363
    %v1365 = vshll.u32 2131351028, %v1356
    %v1366 = vshrl.u32 2102212464, %v1357
    %v1367 = vor.u32 %v1365, %v1366
    %v1368 = vshll.u32 2102212464, %v1356
    %v1369 = vshrl.u32 920167782, %v1357
    %v1370 = vor.u32 %v1368, %v1369
    %v1371 = vshll.u32 920167782, %v1356
    %v1372 = vshrl.u32 1326507024, %v1357
    %v1373 = vor.u32 %v1371, %v1372
    %vm1374 = vcmp.lt.s32.totalorder %v1355, 1
    %vm1375 = vcmp.lt.s32.totalorder %v1355, 2
    %vm1376 = vcmp.lt.s32.totalorder %v1355, 3
    %vm1377 = vcmp.lt.s32.totalorder %v1355, 4
    %v1378 = vsel %vm1374, %v1358, %v1361
    %v1379 = vsel %vm1377, %v1367, 2102212464
    %v1380 = vsel %vm1376, %v1364, %v1379
    %v1381 = vsel %vm1375, %v1378, %v1380
    %v1382 = vsel %vm1374, %v1361, %v1364
    %v1383 = vsel %vm1377, %v1370, 920167782
    %v1384 = vsel %vm1376, %v1367, %v1383
    %v1385 = vsel %vm1375, %v1382, %v1384
    %v1386 = vsel %vm1374, %v1364, %v1367
    %v1387 = vsel %vm1377, %v1373, 1326507024
    %v1388 = vsel %vm1376, %v1370, %v1387
    %v1389 = vsel %vm1375, %v1386, %v1388
    %v1390 = vshll.u32 %v1350, 8
    %v1391 = vand.u32 %v1390, 65535
    %v1392 = vshrl.u32 %v1390, 16
    %v1393 = vand.u32 %v1389, 65535
    %v1394 = vshrl.u32 %v1389, 16
    %v1395 = vmul.u32 %v1391, %v1393
    %v1396 = vmul.u32 %v1391, %v1394
    %v1397 = vmul.u32 %v1392, %v1393
    %v1398 = vmul.u32 %v1392, %v1394
    %v1399 = vshll.u32 %v1396, 16
    %v1400 = vshrl.u32 %v1396, 16
    %v1401 = vshll.u32 %v1397, 16
    %v1402 = vshrl.u32 %v1397, 16
    %vm1403 = vc.u32 %v1395, %v1399
    %v1404 = vsel %vm1403, 1, 0
    %v1405 = vadd.s32 %v1395, %v1399
    %v1406 = vadd.s32 %v1398, %v1404
    %vm1407 = vc.u32 %v1405, %v1401
    %v1408 = vsel %vm1407, 1, 0
    %v1409 = vadd.s32 %v1405, %v1401
    %v1410 = vadd.s32 %v1406, %v1408
    %v1411 = vadd.s32 %v1410, %v1400
    %v1412 = vadd.s32 %v1411, %v1402
    %v1413 = vand.u32 %v1390, 65535
    %v1414 = vshrl.u32 %v1390, 16
    %v1415 = vand.u32 %v1385, 65535
    %v1416 = vshrl.u32 %v1385, 16
    %v1417 = vmul.u32 %v1413, %v1415
    %v1418 = vmul.u32 %v1413, %v1416
    %v1419 = vmul.u32 %v1414, %v1415
    %v1420 = vmul.u32 %v1414, %v1416
    %v1421 = vshll.u32 %v1418, 16
    %v1422 = vshrl.u32 %v1418, 16
    %v1423 = vshll.u32 %v1419, 16
    %v1424 = vshrl.u32 %v1419, 16
    %vm1425 = vc.u32 %v1417, %v1421
    %v1426 = vsel %vm1425, 1, 0
    %v1427 = vadd.s32 %v1417, %v1421
    %v1428 = vadd.s32 %v1420, %v1426
    %vm1429 = vc.u32 %v1427, %v1423
    %v1430 = vsel %vm1429, 1, 0
    %v1431 = vadd.s32 %v1427, %v1423
    %v1432 = vadd.s32 %v1428, %v1430
    %v1433 = vadd.s32 %v1432, %v1422
    %v1434 = vadd.s32 %v1433, %v1424
    %v1435 = vmul.u32 %v1390, %v1381
    %v1436 = vadd.s32 %v1412, %v1431
    %vm1437 = vc.u32 %v1412, %v1431
    %v1438 = vadd.s32 %v1434, 1
    %v1439 = vsel %vm1437, %v1438, %v1434
    %v1440 = vadd.s32 %v1435, %v1439
    %v1441 = vadd.s32 %v1440, 536870912
    %v1442 = vshrl.u32 %v1441, 30
    %v1443 = vshll.u32 %v1442, 30
    %v1444 = vsub.s32 %v1440, %v1443
    %vm1445 = vcmp.lt.s32.totalorder %v1444, 0
    %v1446 = vsub.s32 0, %v1444
    %v1447 = vsel %vm1445, %v1446, %v1444
    %v1448 = vclz %v1447
    %v1449 = vsub.s32 %v1448, 2
    %vm1450 = vcmp.gt.s32.totalorder 0, %v1449
    %v1451 = vsel %vm1450, 0, %v1449
    %v1452 = vsub.s32 32, %v1451
    %v1453 = vshll.u32 %v1444, %v1451
    %v1454 = vshrl.u32 %v1436, %v1452
    %v1455 = vor.u32 %v1453, %v1454
    %v1456 = vsub.s32 4294967266, %v1451
    %v1457 = vadd.s32 %v1456, 127
    %v1458 = vshll.u32 %v1457, 23
    %v1459 = vor.u32 4788187, %v1458
    %v1460 = vand.u32 2147483647, %v1459
    %v1462 = vcvt.s32.f32 %v1455
    %v1463 = vmul.f32 %v1462, %v1460
    %v1464 = vxor.u32 %v1463, 2147483648
    %v1465 = vsel %vm1344, %v1464, %v1463
    %v1466 = vsub.s32 4, %v1442
    %v1467 = vsel %vm1344, %v1466, %v1442
    %v1468 = vsel %vm1343, %v556, %v1465
    %v1469 = vsel %vm1343, 0, %v1467
    %v1470 = vmul.f32 %v1468, %v1468
    %v1471 = vmul.f32 %v1470, -0.001358992
    %v1472 = vadd.f32 %v1471, 0.041655596
    %v1473 = vmul.f32 %v1470, %v1472
    %v1474 = vadd.f32 %v1473, -0.4999988
    %v1475 = vmul.f32 %v1470, %v1474
    %v1476 = vadd.f32 1.0, %v1475
    %v1477 = vmul.f32 %v1468, %v1468
    %v1478 = vmul.f32 %v1477, -0.00019511016
    %v1479 = vadd.f32 %v1478, 0.008332121
    %v1480 = vmul.f32 %v1477, %v1479
    %v1481 = vadd.f32 %v1480, -0.16666654
    %v1482 = vmul.f32 %v1477, %v1481
    %v1483 = vadd.f32 %v1482, 1.0
    %v1484 = vmul.f32 %v1483, %v1468
    %vm1485 = vweird.f32 %v556
    %v1486 = vadd.s32 %v1469, 3
    %v1487 = vand.u32 %v1486, 3
    %vm1488 = vcmp.lt.s32.totalorder %v1487, 2
    %vm1489 = vcmp.eq.s32.totalorder %v1487, 0
    %v1490 = vxor.u32 %v1484, 2147483648
    %v1491 = vsel %vm1489, %v1476, %v1490
    %vm1492 = vcmp.eq.s32.totalorder %v1487, 2
    %v1493 = vxor.u32 %v1476, 2147483648
    %v1494 = vsel %vm1492, %v1493, %v1484
    %v1495 = vsel %vm1488, %v1491, %v1494
    %v1496 = vsel %vm1485, nan, %v1495
    %v1497 = vand.u32 2147483647, %v557
    %vm1498 = vcmp.le.f32.partialorder %v1497, 0.7853982
    %vm1499 = vcmp.lt.s32.totalorder %v557, 0
    %v1500 = vand.u32 %v557, 2139095040
    %v1501 = vshrl.u32 %v1500, 23
    %v1502 = vsub.s32 %v1501, 127
    %v1503 = vand.u32 2147483647, %v557
    %v1504 = vand.u32 %v1503, 8388607
    %v1505 = vor.u32 %v1504, 8388608
    %v1506 = vsub.s32 0, %v1505
    %v1507 = vadd.s32 %v1502, 1
    %vm1508 = vcmp.gt.s32.totalorder %v1507, 0
    %v1509 = vsel %vm1508, %v1507, 0
    %v1510 = vshrl.u32 %v1509, 5
    %v1511 = vand.u32 %v1509, 31
    %v1512 = vsub.s32 32, %v1511
    %v1513 = vshrl.u32 683565275, %v1512
    %v1514 = vshll.u32 683565275, %v1511
    %v1515 = vshrl.u32 2475754826, %v1512
    %v1516 = vor.u32 %v1514, %v1515
    %v1517 = vshll.u32 2475754826, %v1511
    %v1518 = vshrl.u32 2131351028, %v1512
    %v1519 = vor.u32 %v1517, %v1518
    %v1520 = vshll.u32 2131351028, %v1511
    %v1521 = vshrl.u32 2102212464, %v1512
    %v1522 = vor.u32 %v1520, %v1521
    %v1523 = vshll.u32 2102212464, %v1511
    %v1524 = vshrl.u32 920167782, %v1512
    %v1525 = vor.u32 %v1523, %v1524
    %v1526 = vshll.u32 920167782, %v1511
    %v1527 = vshrl.u32 1326507024, %v1512
    %v1528 = vor.u32 %v1526, %v1527
    %vm1529 = vcmp.lt.s32.totalorder %v1510, 1
    %vm1530 = vcmp.lt.s32.totalorder %v1510, 2
    %vm1531 = vcmp.lt.s32.totalorder %v1510, 3
    %vm1532 = vcmp.lt.s32.totalorder %v1510, 4
    %v1533 = vsel %vm1529, %v1513, %v1516
    %v1534 = vsel %vm1532, %v1522, 2102212464
    %v1535 = vsel %vm1531, %v1519, %v1534
    %v1536 = vsel %vm1530, %v1533, %v1535
    %v1537 = vsel %vm1529, %v1516, %v1519
    %v1538 = vsel %vm1532, %v1525, 920167782
    %v1539 = vsel %vm1531, %v1522, %v1538
    %v1540 = vsel %vm1530, %v1537, %v1539
    %v1541 = vsel %vm1529, %v1519, %v1522
    %v1542 = vsel %vm1532, %v1528, 1326507024
    %v1543 = vsel %vm1531, %v1525, %v1542
    %v1544 = vsel %vm1530, %v1541, %v1543
    %v1545 = vshll.u32 %v1505, 8
    %v1546 = vand.u32 %v1545, 65535
    %v1547 = vshrl.u32 %v1545, 16
    %v1548 = vand.u32 %v1544, 65535
    %v1549 = vshrl.u32 %v1544, 16
    %v1550 = vmul.u32 %v1546, %v1548
    %v1551 = vmul.u32 %v1546, %v1549
    %v1552 = vmul.u32 %v1547, %v1548
    %v1553 = vmul.u32 %v1547, %v1549
    %v1554 = vshll.u32 %v1551, 16
    %v1555 = vshrl.u32 %v1551, 16
    %v1556 = vshll.u32 %v1552, 16
    %v1557 = vshrl.u32 %v1552, 16
    %vm1558 = vc.u32 %v1550, %v1554
    %v1559 = vsel %vm1558, 1, 0
    %v1560 = vadd.s32 %v1550, %v1554
    %v1561 = vadd.s32 %v1553, %v1559
    %vm1562 = vc.u32 %v1560, %v1556
    %v1563 = vsel %vm1562, 1, 0
    %v1564 = vadd.s32 %v1560, %v1556
    %v1565 = vadd.s32 %v1561, %v1563
    %v1566 = vadd.s32 %v1565, %v1555
    %v1567 = vadd.s32 %v1566, %v1557
    %v1568 = vand.u32 %v1545, 65535
    %v1569 = vshrl.u32 %v1545, 16
    %v1570 = vand.u32 %v1540, 65535
    %v1571 = vshrl.u32 %v1540, 16
    %v1572 = vmul.u32 %v1568, %v1570
    %v1573 = vmul.u32 %v1568, %v1571
    %v1574 = vmul.u32 %v1569, %v1570
    %v1575 = vmul.u32 %v1569, %v1571
    %v1576 = vshll.u32 %v1573, 16
    %v1577 = vshrl.u32 %v1573, 16
    %v1578 = vshll.u32 %v1574, 16
    %v1579 = vshrl.u32 %v1574, 16
    %vm1580 = vc.u32 %v1572, %v1576
    %v1581 = vsel %vm1580, 1, 0
    %v1582 = vadd.s32 %v1572, %v1576
    %v1583 = vadd.s32 %v1575, %v1581
    %vm1584 = vc.u32 %v1582, %v1578
    %v1585 = vsel %vm1584, 1, 0
    %v1586 = vadd.s32 %v1582, %v1578
    %v1587 = vadd.s32 %v1583, %v1585
    %v1588 = vadd.s32 %v1587, %v1577
    %v1589 = vadd.s32 %v1588, %v1579
    %v1590 = vmul.u32 %v1545, %v1536
    %v1591 = vadd.s32 %v1567, %v1586
    %vm1592 = vc.u32 %v1567, %v1586
    %v1593 = vadd.s32 %v1589, 1
    %v1594 = vsel %vm1592, %v1593, %v1589
    %v1595 = vadd.s32 %v1590, %v1594
    %v1596 = vadd.s32 %v1595, 536870912
    %v1597 = vshrl.u32 %v1596, 30
    %v1598 = vshll.u32 %v1597, 30
    %v1599 = vsub.s32 %v1595, %v1598
    %vm1600 = vcmp.lt.s32.totalorder %v1599, 0
    %v1601 = vsub.s32 0, %v1599
    %v1602 = vsel %vm1600, %v1601, %v1599
    %v1603 = vclz %v1602
    %v1604 = vsub.s32 %v1603, 2
    %vm1605 = vcmp.gt.s32.totalorder 0, %v1604
    %v1606 = vsel %vm1605, 0, %v1604
    %v1607 = vsub.s32 32, %v1606
    %v1608 = vshll.u32 %v1599, %v1606
    %v1609 = vshrl.u32 %v1591, %v1607
    %v1610 = vor.u32 %v1608, %v1609
    %v1611 = vsub.s32 4294967266, %v1606
    %v1612 = vadd.s32 %v1611, 127
    %v1613 = vshll.u32 %v1612, 23
    %v1614 = vor.u32 4788187, %v1613
    %v1615 = vand.u32 2147483647, %v1614
    %v1617 = vcvt.s32.f32 %v1610
    %v1618 = vmul.f32 %v1617, %v1615
    %v1619 = vxor.u32 %v1618, 2147483648
    %v1620 = vsel %vm1499, %v1619, %v1618
    %v1621 = vsub.s32 4, %v1597
    %v1622 = vsel %vm1499, %v1621, %v1597
    %v1623 = vsel %vm1498, %v557, %v1620
    %v1624 = vsel %vm1498, 0, %v1622
    %v1625 = vmul.f32 %v1623, %v1623
    %v1626 = vmul.f32 %v1625, -0.001358992
    %v1627 = vadd.f32 %v1626, 0.041655596
    %v1628 = vmul.f32 %v1625, %v1627
    %v1629 = vadd.f32 %v1628, -0.4999988
    %v1630 = vmul.f32 %v1625, %v1629
    %v1631 = vadd.f32 1.0, %v1630
    %v1632 = vmul.f32 %v1623, %v1623
    %v1633 = vmul.f32 %v1632, -0.00019511016
    %v1634 = vadd.f32 %v1633, 0.008332121
    %v1635 = vmul.f32 %v1632, %v1634
    %v1636 = vadd.f32 %v1635, -0.16666654
    %v1637 = vmul.f32 %v1632, %v1636
    %v1638 = vadd.f32 %v1637, 1.0
    %v1639 = vmul.f32 %v1638, %v1623
    %vm1640 = vweird.f32 %v557
    %v1641 = vadd.s32 %v1624, 3
    %v1642 = vand.u32 %v1641, 3
    %vm1643 = vcmp.lt.s32.totalorder %v1642, 2
    %vm1644 = vcmp.eq.s32.totalorder %v1642, 0
    %v1645 = vxor.u32 %v1639, 2147483648
    %v1646 = vsel %vm1644, %v1631, %v1645
    %vm1647 = vcmp.eq.s32.totalorder %v1642, 2
    %v1648 = vxor.u32 %v1631, 2147483648
    %v1649 = vsel %vm1647, %v1648, %v1639
    %v1650 = vsel %vm1643, %v1646, %v1649
    %v1651 = vsel %vm1640, nan, %v1650
    %v1652 = vand.u32 2147483647, %v558
    %vm1653 = vcmp.le.f32.partialorder %v1652, 0.7853982
    %vm1654 = vcmp.lt.s32.totalorder %v558, 0
    %v1655 = vand.u32 %v558, 2139095040
    %v1656 = vshrl.u32 %v1655, 23
    %v1657 = vsub.s32 %v1656, 127
    %v1658 = vand.u32 2147483647, %v558
    %v1659 = vand.u32 %v1658, 8388607
    %v1660 = vor.u32 %v1659, 8388608
    %v1661 = vsub.s32 0, %v1660
    %v1662 = vadd.s32 %v1657, 1
    %vm1663 = vcmp.gt.s32.totalorder %v1662, 0
    %v1664 = vsel %vm1663, %v1662, 0
    %v1665 = vshrl.u32 %v1664, 5
    %v1666 = vand.u32 %v1664, 31
    %v1667 = vsub.s32 32, %v1666
    %v1668 = vshrl.u32 683565275, %v1667
    %v1669 = vshll.u32 683565275, %v1666
    %v1670 = vshrl.u32 2475754826, %v1667
    %v1671 = vor.u32 %v1669, %v1670
    %v1672 = vshll.u32 2475754826, %v1666
    %v1673 = vshrl.u32 2131351028, %v1667
    %v1674 = vor.u32 %v1672, %v1673
    %v1675 = vshll.u32 2131351028, %v1666
    %v1676 = vshrl.u32 2102212464, %v1667
    %v1677 = vor.u32 %v1675, %v1676
    %v1678 = vshll.u32 2102212464, %v1666
    %v1679 = vshrl.u32 920167782, %v1667
    %v1680 = vor.u32 %v1678, %v1679
    %v1681 = vshll.u32 920167782, %v1666
    %v1682 = vshrl.u32 1326507024, %v1667
    %v1683 = vor.u32 %v1681, %v1682
    %vm1684 = vcmp.lt.s32.totalorder %v1665, 1
    %vm1685 = vcmp.lt.s32.totalorder %v1665, 2
    %vm1686 = vcmp.lt.s32.totalorder %v1665, 3
    %vm1687 = vcmp.lt.s32.totalorder %v1665, 4
    %v1688 = vsel %vm1684, %v1668, %v1671
    %v1689 = vsel %vm1687, %v1677, 2102212464
    %v1690 = vsel %vm1686, %v1674, %v1689
    %v1691 = vsel %vm1685, %v1688, %v1690
    %v1692 = vsel %vm1684, %v1671, %v1674
    %v1693 = vsel %vm1687, %v1680, 920167782
    %v1694 = vsel %vm1686, %v1677, %v1693
    %v1695 = vsel %vm1685, %v1692, %v1694
    %v1696 = vsel %vm1684, %v1674, %v1677
    %v1697 = vsel %vm1687, %v1683, 1326507024
    %v1698 = vsel %vm1686, %v1680, %v1697
    %v1699 = vsel %vm1685, %v1696, %v1698
    %v1700 = vshll.u32 %v1660, 8
    %v1701 = vand.u32 %v1700, 65535
    %v1702 = vshrl.u32 %v1700, 16
    %v1703 = vand.u32 %v1699, 65535
    %v1704 = vshrl.u32 %v1699, 16
    %v1705 = vmul.u32 %v1701, %v1703
    %v1706 = vmul.u32 %v1701, %v1704
    %v1707 = vmul.u32 %v1702, %v1703
    %v1708 = vmul.u32 %v1702, %v1704
    %v1709 = vshll.u32 %v1706, 16
    %v1710 = vshrl.u32 %v1706, 16
    %v1711 = vshll.u32 %v1707, 16
    %v1712 = vshrl.u32 %v1707, 16
    %vm1713 = vc.u32 %v1705, %v1709
    %v1714 = vsel %vm1713, 1, 0
    %v1715 = vadd.s32 %v1705, %v1709
    %v1716 = vadd.s32 %v1708, %v1714
    %vm1717 = vc.u32 %v1715, %v1711
    %v1718 = vsel %vm1717, 1, 0
    %v1719 = vadd.s32 %v1715, %v1711
    %v1720 = vadd.s32 %v1716, %v1718
    %v1721 = vadd.s32 %v1720, %v1710
    %v1722 = vadd.s32 %v1721, %v1712
    %v1723 = vand.u32 %v1700, 65535
    %v1724 = vshrl.u32 %v1700, 16
    %v1725 = vand.u32 %v1695, 65535
    %v1726 = vshrl.u32 %v1695, 16
    %v1727 = vmul.u32 %v1723, %v1725
    %v1728 = vmul.u32 %v1723, %v1726
    %v1729 = vmul.u32 %v1724, %v1725
    %v1730 = vmul.u32 %v1724, %v1726
    %v1731 = vshll.u32 %v1728, 16
    %v1732 = vshrl.u32 %v1728, 16
    %v1733 = vshll.u32 %v1729, 16
    %v1734 = vshrl.u32 %v1729, 16
    %vm1735 = vc.u32 %v1727, %v1731
    %v1736 = vsel %vm1735, 1, 0
    %v1737 = vadd.s32 %v1727, %v1731
    %v1738 = vadd.s32 %v1730, %v1736
    %vm1739 = vc.u32 %v1737, %v1733
    %v1740 = vsel %vm1739, 1, 0
    %v1741 = vadd.s32 %v1737, %v1733
    %v1742 = vadd.s32 %v1738, %v1740
    %v1743 = vadd.s32 %v1742, %v1732
    %v1744 = vadd.s32 %v1743, %v1734
    %v1745 = vmul.u32 %v1700, %v1691
    %v1746 = vadd.s32 %v1722, %v1741
    %vm1747 = vc.u32 %v1722, %v1741
    %v1748 = vadd.s32 %v1744, 1
    %v1749 = vsel %vm1747, %v1748, %v1744
    %v1750 = vadd.s32 %v1745, %v1749
    %v1751 = vadd.s32 %v1750, 536870912
    %v1752 = vshrl.u32 %v1751, 30
    %v1753 = vshll.u32 %v1752, 30
    %v1754 = vsub.s32 %v1750, %v1753
    %vm1755 = vcmp.lt.s32.totalorder %v1754, 0
    %v1756 = vsub.s32 0, %v1754
    %v1757 = vsel %vm1755, %v1756, %v1754
    %v1758 = vclz %v1757
    %v1759 = vsub.s32 %v1758, 2
    %vm1760 = vcmp.gt.s32.totalorder 0, %v1759
    %v1761 = vsel %vm1760, 0, %v1759
    %v1762 = vsub.s32 32, %v1761
    %v1763 = vshll.u32 %v1754, %v1761
    %v1764 = vshrl.u32 %v1746, %v1762
    %v1765 = vor.u32 %v1763, %v1764
    %v1766 = vsub.s32 4294967266, %v1761
    %v1767 = vadd.s32 %v1766, 127
    %v1768 = vshll.u32 %v1767, 23
    %v1769 = vor.u32 4788187, %v1768
    %v1770 = vand.u32 2147483647, %v1769
    %v1772 = vcvt.s32.f32 %v1765
    %v1773 = vmul.f32 %v1772, %v1770
    %v1774 = vxor.u32 %v1773, 2147483648
    %v1775 = vsel %vm1654, %v1774, %v1773
    %v1776 = vsub.s32 4, %v1752
    %v1777 = vsel %vm1654, %v1776, %v1752
    %v1778 = vsel %vm1653, %v558, %v1775
    %v1779 = vsel %vm1653, 0, %v1777
    %v1780 = vmul.f32 %v1778, %v1778
    %v1781 = vmul.f32 %v1780, -0.001358992
    %v1782 = vadd.f32 %v1781, 0.041655596
    %v1783 = vmul.f32 %v1780, %v1782
    %v1784 = vadd.f32 %v1783, -0.4999988
    %v1785 = vmul.f32 %v1780, %v1784
    %v1786 = vadd.f32 1.0, %v1785
    %v1787 = vmul.f32 %v1778, %v1778
    %v1788 = vmul.f32 %v1787, -0.00019511016
    %v1789 = vadd.f32 %v1788, 0.008332121
    %v1790 = vmul.f32 %v1787, %v1789
    %v1791 = vadd.f32 %v1790, -0.16666654
    %v1792 = vmul.f32 %v1787, %v1791
    %v1793 = vadd.f32 %v1792, 1.0
    %v1794 = vmul.f32 %v1793, %v1778
    %vm1795 = vweird.f32 %v558
    %v1796 = vadd.s32 %v1779, 3
    %v1797 = vand.u32 %v1796, 3
    %vm1798 = vcmp.lt.s32.totalorder %v1797, 2
    %vm1799 = vcmp.eq.s32.totalorder %v1797, 0
    %v1800 = vxor.u32 %v1794, 2147483648
    %v1801 = vsel %vm1799, %v1786, %v1800
    %vm1802 = vcmp.eq.s32.totalorder %v1797, 2
    %v1803 = vxor.u32 %v1786, 2147483648
    %v1804 = vsel %vm1802, %v1803, %v1794
    %v1805 = vsel %vm1798, %v1801, %v1804
    %v1806 = vsel %vm1795, nan, %v1805
    %v1807 = vand.u32 2147483647, %v559
    %vm1808 = vcmp.le.f32.partialorder %v1807, 0.7853982
    %vm1809 = vcmp.lt.s32.totalorder %v559, 0
    %v1810 = vand.u32 %v559, 2139095040
    %v1811 = vshrl.u32 %v1810, 23
    %v1812 = vsub.s32 %v1811, 127
    %v1813 = vand.u32 2147483647, %v559
    %v1814 = vand.u32 %v1813, 8388607
    %v1815 = vor.u32 %v1814, 8388608
    %v1816 = vsub.s32 0, %v1815
    %v1817 = vadd.s32 %v1812, 1
    %vm1818 = vcmp.gt.s32.totalorder %v1817, 0
    %v1819 = vsel %vm1818, %v1817, 0
    %v1820 = vshrl.u32 %v1819, 5
    %v1821 = vand.u32 %v1819, 31
    %v1822 = vsub.s32 32, %v1821
    %v1823 = vshrl.u32 683565275, %v1822
    %v1824 = vshll.u32 683565275, %v1821
    %v1825 = vshrl.u32 2475754826, %v1822
    %v1826 = vor.u32 %v1824, %v1825
    %v1827 = vshll.u32 2475754826, %v1821
    %v1828 = vshrl.u32 2131351028, %v1822
    %v1829 = vor.u32 %v1827, %v1828
    %v1830 = vshll.u32 2131351028, %v1821
    %v1831 = vshrl.u32 2102212464, %v1822
    %v1832 = vor.u32 %v1830, %v1831
    %v1833 = vshll.u32 2102212464, %v1821
    %v1834 = vshrl.u32 920167782, %v1822
    %v1835 = vor.u32 %v1833, %v1834
    %v1836 = vshll.u32 920167782, %v1821
    %v1837 = vshrl.u32 1326507024, %v1822
    %v1838 = vor.u32 %v1836, %v1837
    %vm1839 = vcmp.lt.s32.totalorder %v1820, 1
    %vm1840 = vcmp.lt.s32.totalorder %v1820, 2
    %vm1841 = vcmp.lt.s32.totalorder %v1820, 3
    %vm1842 = vcmp.lt.s32.totalorder %v1820, 4
    %v1843 = vsel %vm1839, %v1823, %v1826
    %v1844 = vsel %vm1842, %v1832, 2102212464
    %v1845 = vsel %vm1841, %v1829, %v1844
    %v1846 = vsel %vm1840, %v1843, %v1845
    %v1847 = vsel %vm1839, %v1826, %v1829
    %v1848 = vsel %vm1842, %v1835, 920167782
    %v1849 = vsel %vm1841, %v1832, %v1848
    %v1850 = vsel %vm1840, %v1847, %v1849
    %v1851 = vsel %vm1839, %v1829, %v1832
    %v1852 = vsel %vm1842, %v1838, 1326507024
    %v1853 = vsel %vm1841, %v1835, %v1852
    %v1854 = vsel %vm1840, %v1851, %v1853
    %v1855 = vshll.u32 %v1815, 8
    %v1856 = vand.u32 %v1855, 65535
    %v1857 = vshrl.u32 %v1855, 16
    %v1858 = vand.u32 %v1854, 65535
    %v1859 = vshrl.u32 %v1854, 16
    %v1860 = vmul.u32 %v1856, %v1858
    %v1861 = vmul.u32 %v1856, %v1859
    %v1862 = vmul.u32 %v1857, %v1858
    %v1863 = vmul.u32 %v1857, %v1859
    %v1864 = vshll.u32 %v1861, 16
    %v1865 = vshrl.u32 %v1861, 16
    %v1866 = vshll.u32 %v1862, 16
    %v1867 = vshrl.u32 %v1862, 16
    %vm1868 = vc.u32 %v1860, %v1864
    %v1869 = vsel %vm1868, 1, 0
    %v1870 = vadd.s32 %v1860, %v1864
    %v1871 = vadd.s32 %v1863, %v1869
    %vm1872 = vc.u32 %v1870, %v1866
    %v1873 = vsel %vm1872, 1, 0
    %v1874 = vadd.s32 %v1870, %v1866
    %v1875 = vadd.s32 %v1871, %v1873
    %v1876 = vadd.s32 %v1875, %v1865
    %v1877 = vadd.s32 %v1876, %v1867
    %v1878 = vand.u32 %v1855, 65535
    %v1879 = vshrl.u32 %v1855, 16
    %v1880 = vand.u32 %v1850, 65535
    %v1881 = vshrl.u32 %v1850, 16
    %v1882 = vmul.u32 %v1878, %v1880
    %v1883 = vmul.u32 %v1878, %v1881
    %v1884 = vmul.u32 %v1879, %v1880
    %v1885 = vmul.u32 %v1879, %v1881
    %v1886 = vshll.u32 %v1883, 16
    %v1887 = vshrl.u32 %v1883, 16
    %v1888 = vshll.u32 %v1884, 16
    %v1889 = vshrl.u32 %v1884, 16
    %vm1890 = vc.u32 %v1882, %v1886
    %v1891 = vsel %vm1890, 1, 0
    %v1892 = vadd.s32 %v1882, %v1886
    %v1893 = vadd.s32 %v1885, %v1891
    %vm1894 = vc.u32 %v1892, %v1888
    %v1895 = vsel %vm1894, 1, 0
    %v1896 = vadd.s32 %v1892, %v1888
    %v1897 = vadd.s32 %v1893, %v1895
    %v1898 = vadd.s32 %v1897, %v1887
    %v1899 = vadd.s32 %v1898, %v1889
    %v1900 = vmul.u32 %v1855, %v1846
    %v1901 = vadd.s32 %v1877, %v1896
    %vm1902 = vc.u32 %v1877, %v1896
    %v1903 = vadd.s32 %v1899, 1
    %v1904 = vsel %vm1902, %v1903, %v1899
    %v1905 = vadd.s32 %v1900, %v1904
    %v1906 = vadd.s32 %v1905, 536870912
    %v1907 = vshrl.u32 %v1906, 30
    %v1908 = vshll.u32 %v1907, 30
    %v1909 = vsub.s32 %v1905, %v1908
    %vm1910 = vcmp.lt.s32.totalorder %v1909, 0
    %v1911 = vsub.s32 0, %v1909
    %v1912 = vsel %vm1910, %v1911, %v1909
    %v1913 = vclz %v1912
    %v1914 = vsub.s32 %v1913, 2
    %vm1915 = vcmp.gt.s32.totalorder 0, %v1914
    %v1916 = vsel %vm1915, 0, %v1914
    %v1917 = vsub.s32 32, %v1916
    %v1918 = vshll.u32 %v1909, %v1916
    %v1919 = vshrl.u32 %v1901, %v1917
    %v1920 = vor.u32 %v1918, %v1919
    %v1921 = vsub.s32 4294967266, %v1916
    %v1922 = vadd.s32 %v1921, 127
    %v1923 = vshll.u32 %v1922, 23
    %v1924 = vor.u32 4788187, %v1923
    %v1925 = vand.u32 2147483647, %v1924
    %v1927 = vcvt.s32.f32 %v1920
    %v1928 = vmul.f32 %v1927, %v1925
    %v1929 = vxor.u32 %v1928, 2147483648
    %v1930 = vsel %vm1809, %v1929, %v1928
    %v1931 = vsub.s32 4, %v1907
    %v1932 = vsel %vm1809, %v1931, %v1907
    %v1933 = vsel %vm1808, %v559, %v1930
    %v1934 = vsel %vm1808, 0, %v1932
    %v1935 = vmul.f32 %v1933, %v1933
    %v1936 = vmul.f32 %v1935, -0.001358992
    %v1937 = vadd.f32 %v1936, 0.041655596
    %v1938 = vmul.f32 %v1935, %v1937
    %v1939 = vadd.f32 %v1938, -0.4999988
    %v1940 = vmul.f32 %v1935, %v1939
    %v1941 = vadd.f32 1.0, %v1940
    %v1942 = vmul.f32 %v1933, %v1933
    %v1943 = vmul.f32 %v1942, -0.00019511016
    %v1944 = vadd.f32 %v1943, 0.008332121
    %v1945 = vmul.f32 %v1942, %v1944
    %v1946 = vadd.f32 %v1945, -0.16666654
    %v1947 = vmul.f32 %v1942, %v1946
    %v1948 = vadd.f32 %v1947, 1.0
    %v1949 = vmul.f32 %v1948, %v1933
    %vm1950 = vweird.f32 %v559
    %v1951 = vadd.s32 %v1934, 3
    %v1952 = vand.u32 %v1951, 3
    %vm1953 = vcmp.lt.s32.totalorder %v1952, 2
    %vm1954 = vcmp.eq.s32.totalorder %v1952, 0
    %v1955 = vxor.u32 %v1949, 2147483648
    %v1956 = vsel %vm1954, %v1941, %v1955
    %vm1957 = vcmp.eq.s32.totalorder %v1952, 2
    %v1958 = vxor.u32 %v1941, 2147483648
    %v1959 = vsel %vm1957, %v1958, %v1949
    %v1960 = vsel %vm1953, %v1956, %v1959
    %v1961 = vsel %vm1950, nan, %v1960
    %v1962 = vand.u32 2147483647, %v560
    %vm1963 = vcmp.le.f32.partialorder %v1962, 0.7853982
    %vm1964 = vcmp.lt.s32.totalorder %v560, 0
    %v1965 = vand.u32 %v560, 2139095040
    %v1966 = vshrl.u32 %v1965, 23
    %v1967 = vsub.s32 %v1966, 127
    %v1968 = vand.u32 2147483647, %v560
    %v1969 = vand.u32 %v1968, 8388607
    %v1970 = vor.u32 %v1969, 8388608
    %v1971 = vsub.s32 0, %v1970
    %v1972 = vadd.s32 %v1967, 1
    %vm1973 = vcmp.gt.s32.totalorder %v1972, 0
    %v1974 = vsel %vm1973, %v1972, 0
    %v1975 = vshrl.u32 %v1974, 5
    %v1976 = vand.u32 %v1974, 31
    %v1977 = vsub.s32 32, %v1976
    %v1978 = vshrl.u32 683565275, %v1977
    %v1979 = vshll.u32 683565275, %v1976
    %v1980 = vshrl.u32 2475754826, %v1977
    %v1981 = vor.u32 %v1979, %v1980
    %v1982 = vshll.u32 2475754826, %v1976
    %v1983 = vshrl.u32 2131351028, %v1977
    %v1984 = vor.u32 %v1982, %v1983
    %v1985 = vshll.u32 2131351028, %v1976
    %v1986 = vshrl.u32 2102212464, %v1977
    %v1987 = vor.u32 %v1985, %v1986
    %v1988 = vshll.u32 2102212464, %v1976
    %v1989 = vshrl.u32 920167782, %v1977
    %v1990 = vor.u32 %v1988, %v1989
    %v1991 = vshll.u32 920167782, %v1976
    %v1992 = vshrl.u32 1326507024, %v1977
    %v1993 = vor.u32 %v1991, %v1992
    %vm1994 = vcmp.lt.s32.totalorder %v1975, 1
    %vm1995 = vcmp.lt.s32.totalorder %v1975, 2
    %vm1996 = vcmp.lt.s32.totalorder %v1975, 3
    %vm1997 = vcmp.lt.s32.totalorder %v1975, 4
    %v1998 = vsel %vm1994, %v1978, %v1981
    %v1999 = vsel %vm1997, %v1987, 2102212464
    %v2000 = vsel %vm1996, %v1984, %v1999
    %v2001 = vsel %vm1995, %v1998, %v2000
    %v2002 = vsel %vm1994, %v1981, %v1984
    %v2003 = vsel %vm1997, %v1990, 920167782
    %v2004 = vsel %vm1996, %v1987, %v2003
    %v2005 = vsel %vm1995, %v2002, %v2004
    %v2006 = vsel %vm1994, %v1984, %v1987
    %v2007 = vsel %vm1997, %v1993, 1326507024
    %v2008 = vsel %vm1996, %v1990, %v2007
    %v2009 = vsel %vm1995, %v2006, %v2008
    %v2010 = vshll.u32 %v1970, 8
    %v2011 = vand.u32 %v2010, 65535
    %v2012 = vshrl.u32 %v2010, 16
    %v2013 = vand.u32 %v2009, 65535
    %v2014 = vshrl.u32 %v2009, 16
    %v2015 = vmul.u32 %v2011, %v2013
    %v2016 = vmul.u32 %v2011, %v2014
    %v2017 = vmul.u32 %v2012, %v2013
    %v2018 = vmul.u32 %v2012, %v2014
    %v2019 = vshll.u32 %v2016, 16
    %v2020 = vshrl.u32 %v2016, 16
    %v2021 = vshll.u32 %v2017, 16
    %v2022 = vshrl.u32 %v2017, 16
    %vm2023 = vc.u32 %v2015, %v2019
    %v2024 = vsel %vm2023, 1, 0
    %v2025 = vadd.s32 %v2015, %v2019
    %v2026 = vadd.s32 %v2018, %v2024
    %vm2027 = vc.u32 %v2025, %v2021
    %v2028 = vsel %vm2027, 1, 0
    %v2029 = vadd.s32 %v2025, %v2021
    %v2030 = vadd.s32 %v2026, %v2028
    %v2031 = vadd.s32 %v2030, %v2020
    %v2032 = vadd.s32 %v2031, %v2022
    %v2033 = vand.u32 %v2010, 65535
    %v2034 = vshrl.u32 %v2010, 16
    %v2035 = vand.u32 %v2005, 65535
    %v2036 = vshrl.u32 %v2005, 16
    %v2037 = vmul.u32 %v2033, %v2035
    %v2038 = vmul.u32 %v2033, %v2036
    %v2039 = vmul.u32 %v2034, %v2035
    %v2040 = vmul.u32 %v2034, %v2036
    %v2041 = vshll.u32 %v2038, 16
    %v2042 = vshrl.u32 %v2038, 16
    %v2043 = vshll.u32 %v2039, 16
    %v2044 = vshrl.u32 %v2039, 16
    %vm2045 = vc.u32 %v2037, %v2041
    %v2046 = vsel %vm2045, 1, 0
    %v2047 = vadd.s32 %v2037, %v2041
    %v2048 = vadd.s32 %v2040, %v2046
    %vm2049 = vc.u32 %v2047, %v2043
    %v2050 = vsel %vm2049, 1, 0
    %v2051 = vadd.s32 %v2047, %v2043
    %v2052 = vadd.s32 %v2048, %v2050
    %v2053 = vadd.s32 %v2052, %v2042
    %v2054 = vadd.s32 %v2053, %v2044
    %v2055 = vmul.u32 %v2010, %v2001
    %v2056 = vadd.s32 %v2032, %v2051
    %vm2057 = vc.u32 %v2032, %v2051
    %v2058 = vadd.s32 %v2054, 1
    %v2059 = vsel %vm2057, %v2058, %v2054
    %v2060 = vadd.s32 %v2055, %v2059
    %v2061 = vadd.s32 %v2060, 536870912
    %v2062 = vshrl.u32 %v2061, 30
    %v2063 = vshll.u32 %v2062, 30
    %v2064 = vsub.s32 %v2060, %v2063
    %vm2065 = vcmp.lt.s32.totalorder %v2064, 0
    %v2066 = vsub.s32 0, %v2064
    %v2067 = vsel %vm2065, %v2066, %v2064
    %v2068 = vclz %v2067
    %v2069 = vsub.s32 %v2068, 2
    %vm2070 = vcmp.gt.s32.totalorder 0, %v2069
    %v2071 = vsel %vm2070, 0, %v2069
    %v2072 = vsub.s32 32, %v2071
    %v2073 = vshll.u32 %v2064, %v2071
    %v2074 = vshrl.u32 %v2056, %v2072
    %v2075 = vor.u32 %v2073, %v2074
    %v2076 = vsub.s32 4294967266, %v2071
    %v2077 = vadd.s32 %v2076, 127
    %v2078 = vshll.u32 %v2077, 23
    %v2079 = vor.u32 4788187, %v2078
    %v2080 = vand.u32 2147483647, %v2079
    %v2082 = vcvt.s32.f32 %v2075
    %v2083 = vmul.f32 %v2082, %v2080
    %v2084 = vxor.u32 %v2083, 2147483648
    %v2085 = vsel %vm1964, %v2084, %v2083
    %v2086 = vsub.s32 4, %v2062
    %v2087 = vsel %vm1964, %v2086, %v2062
    %v2088 = vsel %vm1963, %v560, %v2085
    %v2089 = vsel %vm1963, 0, %v2087
    %v2090 = vmul.f32 %v2088, %v2088
    %v2091 = vmul.f32 %v2090, -0.001358992
    %v2092 = vadd.f32 %v2091, 0.041655596
    %v2093 = vmul.f32 %v2090, %v2092
    %v2094 = vadd.f32 %v2093, -0.4999988
    %v2095 = vmul.f32 %v2090, %v2094
    %v2096 = vadd.f32 1.0, %v2095
    %v2097 = vmul.f32 %v2088, %v2088
    %v2098 = vmul.f32 %v2097, -0.00019511016
    %v2099 = vadd.f32 %v2098, 0.008332121
    %v2100 = vmul.f32 %v2097, %v2099
    %v2101 = vadd.f32 %v2100, -0.16666654
    %v2102 = vmul.f32 %v2097, %v2101
    %v2103 = vadd.f32 %v2102, 1.0
    %v2104 = vmul.f32 %v2103, %v2088
    %vm2105 = vweird.f32 %v560
    %v2106 = vadd.s32 %v2089, 3
    %v2107 = vand.u32 %v2106, 3
    %vm2108 = vcmp.lt.s32.totalorder %v2107, 2
    %vm2109 = vcmp.eq.s32.totalorder %v2107, 0
    %v2110 = vxor.u32 %v2104, 2147483648
    %v2111 = vsel %vm2109, %v2096, %v2110
    %vm2112 = vcmp.eq.s32.totalorder %v2107, 2
    %v2113 = vxor.u32 %v2096, 2147483648
    %v2114 = vsel %vm2112, %v2113, %v2104
    %v2115 = vsel %vm2108, %v2111, %v2114
    %v2116 = vsel %vm2105, nan, %v2115
    %v2117 = vand.u32 2147483647, %v561
    %vm2118 = vcmp.le.f32.partialorder %v2117, 0.7853982
    %vm2119 = vcmp.lt.s32.totalorder %v561, 0
    %v2120 = vand.u32 %v561, 2139095040
    %v2121 = vshrl.u32 %v2120, 23
    %v2122 = vsub.s32 %v2121, 127
    %v2123 = vand.u32 2147483647, %v561
    %v2124 = vand.u32 %v2123, 8388607
    %v2125 = vor.u32 %v2124, 8388608
    %v2126 = vsub.s32 0, %v2125
    %v2127 = vadd.s32 %v2122, 1
    %vm2128 = vcmp.gt.s32.totalorder %v2127, 0
    %v2129 = vsel %vm2128, %v2127, 0
    %v2130 = vshrl.u32 %v2129, 5
    %v2131 = vand.u32 %v2129, 31
    %v2132 = vsub.s32 32, %v2131
    %v2133 = vshrl.u32 683565275, %v2132
    %v2134 = vshll.u32 683565275, %v2131
    %v2135 = vshrl.u32 2475754826, %v2132
    %v2136 = vor.u32 %v2134, %v2135
    %v2137 = vshll.u32 2475754826, %v2131
    %v2138 = vshrl.u32 2131351028, %v2132
    %v2139 = vor.u32 %v2137, %v2138
    %v2140 = vshll.u32 2131351028, %v2131
    %v2141 = vshrl.u32 2102212464, %v2132
    %v2142 = vor.u32 %v2140, %v2141
    %v2143 = vshll.u32 2102212464, %v2131
    %v2144 = vshrl.u32 920167782, %v2132
    %v2145 = vor.u32 %v2143, %v2144
    %v2146 = vshll.u32 920167782, %v2131
    %v2147 = vshrl.u32 1326507024, %v2132
    %v2148 = vor.u32 %v2146, %v2147
    %vm2149 = vcmp.lt.s32.totalorder %v2130, 1
    %vm2150 = vcmp.lt.s32.totalorder %v2130, 2
    %vm2151 = vcmp.lt.s32.totalorder %v2130, 3
    %vm2152 = vcmp.lt.s32.totalorder %v2130, 4
    %v2153 = vsel %vm2149, %v2133, %v2136
    %v2154 = vsel %vm2152, %v2142, 2102212464
    %v2155 = vsel %vm2151, %v2139, %v2154
    %v2156 = vsel %vm2150, %v2153, %v2155
    %v2157 = vsel %vm2149, %v2136, %v2139
    %v2158 = vsel %vm2152, %v2145, 920167782
    %v2159 = vsel %vm2151, %v2142, %v2158
    %v2160 = vsel %vm2150, %v2157, %v2159
    %v2161 = vsel %vm2149, %v2139, %v2142
    %v2162 = vsel %vm2152, %v2148, 1326507024
    %v2163 = vsel %vm2151, %v2145, %v2162
    %v2164 = vsel %vm2150, %v2161, %v2163
    %v2165 = vshll.u32 %v2125, 8
    %v2166 = vand.u32 %v2165, 65535
    %v2167 = vshrl.u32 %v2165, 16
    %v2168 = vand.u32 %v2164, 65535
    %v2169 = vshrl.u32 %v2164, 16
    %v2170 = vmul.u32 %v2166, %v2168
    %v2171 = vmul.u32 %v2166, %v2169
    %v2172 = vmul.u32 %v2167, %v2168
    %v2173 = vmul.u32 %v2167, %v2169
    %v2174 = vshll.u32 %v2171, 16
    %v2175 = vshrl.u32 %v2171, 16
    %v2176 = vshll.u32 %v2172, 16
    %v2177 = vshrl.u32 %v2172, 16
    %vm2178 = vc.u32 %v2170, %v2174
    %v2179 = vsel %vm2178, 1, 0
    %v2180 = vadd.s32 %v2170, %v2174
    %v2181 = vadd.s32 %v2173, %v2179
    %vm2182 = vc.u32 %v2180, %v2176
    %v2183 = vsel %vm2182, 1, 0
    %v2184 = vadd.s32 %v2180, %v2176
    %v2185 = vadd.s32 %v2181, %v2183
    %v2186 = vadd.s32 %v2185, %v2175
    %v2187 = vadd.s32 %v2186, %v2177
    %v2188 = vand.u32 %v2165, 65535
    %v2189 = vshrl.u32 %v2165, 16
    %v2190 = vand.u32 %v2160, 65535
    %v2191 = vshrl.u32 %v2160, 16
    %v2192 = vmul.u32 %v2188, %v2190
    %v2193 = vmul.u32 %v2188, %v2191
    %v2194 = vmul.u32 %v2189, %v2190
    %v2195 = vmul.u32 %v2189, %v2191
    %v2196 = vshll.u32 %v2193, 16
    %v2197 = vshrl.u32 %v2193, 16
    %v2198 = vshll.u32 %v2194, 16
    %v2199 = vshrl.u32 %v2194, 16
    %vm2200 = vc.u32 %v2192, %v2196
    %v2201 = vsel %vm2200, 1, 0
    %v2202 = vadd.s32 %v2192, %v2196
    %v2203 = vadd.s32 %v2195, %v2201
    %vm2204 = vc.u32 %v2202, %v2198
    %v2205 = vsel %vm2204, 1, 0
    %v2206 = vadd.s32 %v2202, %v2198
    %v2207 = vadd.s32 %v2203, %v2205
    %v2208 = vadd.s32 %v2207, %v2197
    %v2209 = vadd.s32 %v2208, %v2199
    %v2210 = vmul.u32 %v2165, %v2156
    %v2211 = vadd.s32 %v2187, %v2206
    %vm2212 = vc.u32 %v2187, %v2206
    %v2213 = vadd.s32 %v2209, 1
    %v2214 = vsel %vm2212, %v2213, %v2209
    %v2215 = vadd.s32 %v2210, %v2214
    %v2216 = vadd.s32 %v2215, 536870912
    %v2217 = vshrl.u32 %v2216, 30
    %v2218 = vshll.u32 %v2217, 30
    %v2219 = vsub.s32 %v2215, %v2218
    %vm2220 = vcmp.lt.s32.totalorder %v2219, 0
    %v2221 = vsub.s32 0, %v2219
    %v2222 = vsel %vm2220, %v2221, %v2219
    %v2223 = vclz %v2222
    %v2224 = vsub.s32 %v2223, 2
    %vm2225 = vcmp.gt.s32.totalorder 0, %v2224
    %v2226 = vsel %vm2225, 0, %v2224
    %v2227 = vsub.s32 32, %v2226
    %v2228 = vshll.u32 %v2219, %v2226
    %v2229 = vshrl.u32 %v2211, %v2227
    %v2230 = vor.u32 %v2228, %v2229
    %v2231 = vsub.s32 4294967266, %v2226
    %v2232 = vadd.s32 %v2231, 127
    %v2233 = vshll.u32 %v2232, 23
    %v2234 = vor.u32 4788187, %v2233
    %v2235 = vand.u32 2147483647, %v2234
    %v2237 = vcvt.s32.f32 %v2230
    %v2238 = vmul.f32 %v2237, %v2235
    %v2239 = vxor.u32 %v2238, 2147483648
    %v2240 = vsel %vm2119, %v2239, %v2238
    %v2241 = vsub.s32 4, %v2217
    %v2242 = vsel %vm2119, %v2241, %v2217
    %v2243 = vsel %vm2118, %v561, %v2240
    %v2244 = vsel %vm2118, 0, %v2242
    %v2245 = vmul.f32 %v2243, %v2243
    %v2246 = vmul.f32 %v2245, -0.001358992
    %v2247 = vadd.f32 %v2246, 0.041655596
    %v2248 = vmul.f32 %v2245, %v2247
    %v2249 = vadd.f32 %v2248, -0.4999988
    %v2250 = vmul.f32 %v2245, %v2249
    %v2251 = vadd.f32 1.0, %v2250
    %v2252 = vmul.f32 %v2243, %v2243
    %v2253 = vmul.f32 %v2252, -0.00019511016
    %v2254 = vadd.f32 %v2253, 0.008332121
    %v2255 = vmul.f32 %v2252, %v2254
    %v2256 = vadd.f32 %v2255, -0.16666654
    %v2257 = vmul.f32 %v2252, %v2256
    %v2258 = vadd.f32 %v2257, 1.0
    %v2259 = vmul.f32 %v2258, %v2243
    %vm2260 = vweird.f32 %v561
    %v2261 = vadd.s32 %v2244, 3
    %v2262 = vand.u32 %v2261, 3
    %vm2263 = vcmp.lt.s32.totalorder %v2262, 2
    %vm2264 = vcmp.eq.s32.totalorder %v2262, 0
    %v2265 = vxor.u32 %v2259, 2147483648
    %v2266 = vsel %vm2264, %v2251, %v2265
    %vm2267 = vcmp.eq.s32.totalorder %v2262, 2
    %v2268 = vxor.u32 %v2251, 2147483648
    %v2269 = vsel %vm2267, %v2268, %v2259
    %v2270 = vsel %vm2263, %v2266, %v2269
    %v2271 = vsel %vm2260, nan, %v2270
    %v2272 = vand.u32 2147483647, %v562
    %vm2273 = vcmp.le.f32.partialorder %v2272, 0.7853982
    %vm2274 = vcmp.lt.s32.totalorder %v562, 0
    %v2275 = vand.u32 %v562, 2139095040
    %v2276 = vshrl.u32 %v2275, 23
    %v2277 = vsub.s32 %v2276, 127
    %v2278 = vand.u32 2147483647, %v562
    %v2279 = vand.u32 %v2278, 8388607
    %v2280 = vor.u32 %v2279, 8388608
    %v2281 = vsub.s32 0, %v2280
    %v2282 = vadd.s32 %v2277, 1
    %vm2283 = vcmp.gt.s32.totalorder %v2282, 0
    %v2284 = vsel %vm2283, %v2282, 0
    %v2285 = vshrl.u32 %v2284, 5
    %v2286 = vand.u32 %v2284, 31
    %v2287 = vsub.s32 32, %v2286
    %v2288 = vshrl.u32 683565275, %v2287
    %v2289 = vshll.u32 683565275, %v2286
    %v2290 = vshrl.u32 2475754826, %v2287
    %v2291 = vor.u32 %v2289, %v2290
    %v2292 = vshll.u32 2475754826, %v2286
    %v2293 = vshrl.u32 2131351028, %v2287
    %v2294 = vor.u32 %v2292, %v2293
    %v2295 = vshll.u32 2131351028, %v2286
    %v2296 = vshrl.u32 2102212464, %v2287
    %v2297 = vor.u32 %v2295, %v2296
    %v2298 = vshll.u32 2102212464, %v2286
    %v2299 = vshrl.u32 920167782, %v2287
    %v2300 = vor.u32 %v2298, %v2299
    %v2301 = vshll.u32 920167782, %v2286
    %v2302 = vshrl.u32 1326507024, %v2287
    %v2303 = vor.u32 %v2301, %v2302
    %vm2304 = vcmp.lt.s32.totalorder %v2285, 1
    %vm2305 = vcmp.lt.s32.totalorder %v2285, 2
    %vm2306 = vcmp.lt.s32.totalorder %v2285, 3
    %vm2307 = vcmp.lt.s32.totalorder %v2285, 4
    %v2308 = vsel %vm2304, %v2288, %v2291
    %v2309 = vsel %vm2307, %v2297, 2102212464
    %v2310 = vsel %vm2306, %v2294, %v2309
    %v2311 = vsel %vm2305, %v2308, %v2310
    %v2312 = vsel %vm2304, %v2291, %v2294
    %v2313 = vsel %vm2307, %v2300, 920167782
    %v2314 = vsel %vm2306, %v2297, %v2313
    %v2315 = vsel %vm2305, %v2312, %v2314
    %v2316 = vsel %vm2304, %v2294, %v2297
    %v2317 = vsel %vm2307, %v2303, 1326507024
    %v2318 = vsel %vm2306, %v2300, %v2317
    %v2319 = vsel %vm2305, %v2316, %v2318
    %v2320 = vshll.u32 %v2280, 8
    %v2321 = vand.u32 %v2320, 65535
    %v2322 = vshrl.u32 %v2320, 16
    %v2323 = vand.u32 %v2319, 65535
    %v2324 = vshrl.u32 %v2319, 16
    %v2325 = vmul.u32 %v2321, %v2323
    %v2326 = vmul.u32 %v2321, %v2324
    %v2327 = vmul.u32 %v2322, %v2323
    %v2328 = vmul.u32 %v2322, %v2324
    %v2329 = vshll.u32 %v2326, 16
    %v2330 = vshrl.u32 %v2326, 16
    %v2331 = vshll.u32 %v2327, 16
    %v2332 = vshrl.u32 %v2327, 16
    %vm2333 = vc.u32 %v2325, %v2329
    %v2334 = vsel %vm2333, 1, 0
    %v2335 = vadd.s32 %v2325, %v2329
    %v2336 = vadd.s32 %v2328, %v2334
    %vm2337 = vc.u32 %v2335, %v2331
    %v2338 = vsel %vm2337, 1, 0
    %v2339 = vadd.s32 %v2335, %v2331
    %v2340 = vadd.s32 %v2336, %v2338
    %v2341 = vadd.s32 %v2340, %v2330
    %v2342 = vadd.s32 %v2341, %v2332
    %v2343 = vand.u32 %v2320, 65535
    %v2344 = vshrl.u32 %v2320, 16
    %v2345 = vand.u32 %v2315, 65535
    %v2346 = vshrl.u32 %v2315, 16
    %v2347 = vmul.u32 %v2343, %v2345
    %v2348 = vmul.u32 %v2343, %v2346
    %v2349 = vmul.u32 %v2344, %v2345
    %v2350 = vmul.u32 %v2344, %v2346
    %v2351 = vshll.u32 %v2348, 16
    %v2352 = vshrl.u32 %v2348, 16
    %v2353 = vshll.u32 %v2349, 16
    %v2354 = vshrl.u32 %v2349, 16
    %vm2355 = vc.u32 %v2347, %v2351
    %v2356 = vsel %vm2355, 1, 0
    %v2357 = vadd.s32 %v2347, %v2351
    %v2358 = vadd.s32 %v2350, %v2356
    %vm2359 = vc.u32 %v2357, %v2353
    %v2360 = vsel %vm2359, 1, 0
    %v2361 = vadd.s32 %v2357, %v2353
    %v2362 = vadd.s32 %v2358, %v2360
    %v2363 = vadd.s32 %v2362, %v2352
    %v2364 = vadd.s32 %v2363, %v2354
    %v2365 = vmul.u32 %v2320, %v2311
    %v2366 = vadd.s32 %v2342, %v2361
    %vm2367 = vc.u32 %v2342, %v2361
    %v2368 = vadd.s32 %v2364, 1
    %v2369 = vsel %vm2367, %v2368, %v2364
    %v2370 = vadd.s32 %v2365, %v2369
    %v2371 = vadd.s32 %v2370, 536870912
    %v2372 = vshrl.u32 %v2371, 30
    %v2373 = vshll.u32 %v2372, 30
    %v2374 = vsub.s32 %v2370, %v2373
    %vm2375 = vcmp.lt.s32.totalorder %v2374, 0
    %v2376 = vsub.s32 0, %v2374
    %v2377 = vsel %vm2375, %v2376, %v2374
    %v2378 = vclz %v2377
    %v2379 = vsub.s32 %v2378, 2
    %vm2380 = vcmp.gt.s32.totalorder 0, %v2379
    %v2381 = vsel %vm2380, 0, %v2379
    %v2382 = vsub.s32 32, %v2381
    %v2383 = vshll.u32 %v2374, %v2381
    %v2384 = vshrl.u32 %v2366, %v2382
    %v2385 = vor.u32 %v2383, %v2384
    %v2386 = vsub.s32 4294967266, %v2381
    %v2387 = vadd.s32 %v2386, 127
    %v2388 = vshll.u32 %v2387, 23
    %v2389 = vor.u32 4788187, %v2388
    %v2390 = vand.u32 2147483647, %v2389
    %v2392 = vcvt.s32.f32 %v2385
    %v2393 = vmul.f32 %v2392, %v2390
    %v2394 = vxor.u32 %v2393, 2147483648
    %v2395 = vsel %vm2274, %v2394, %v2393
    %v2396 = vsub.s32 4, %v2372
    %v2397 = vsel %vm2274, %v2396, %v2372
    %v2398 = vsel %vm2273, %v562, %v2395
    %v2399 = vsel %vm2273, 0, %v2397
    %v2400 = vmul.f32 %v2398, %v2398
    %v2401 = vmul.f32 %v2400, -0.001358992
    %v2402 = vadd.f32 %v2401, 0.041655596
    %v2403 = vmul.f32 %v2400, %v2402
    %v2404 = vadd.f32 %v2403, -0.4999988
    %v2405 = vmul.f32 %v2400, %v2404
    %v2406 = vadd.f32 1.0, %v2405
    %v2407 = vmul.f32 %v2398, %v2398
    %v2408 = vmul.f32 %v2407, -0.00019511016
    %v2409 = vadd.f32 %v2408, 0.008332121
    %v2410 = vmul.f32 %v2407, %v2409
    %v2411 = vadd.f32 %v2410, -0.16666654
    %v2412 = vmul.f32 %v2407, %v2411
    %v2413 = vadd.f32 %v2412, 1.0
    %v2414 = vmul.f32 %v2413, %v2398
    %vm2415 = vweird.f32 %v562
    %v2416 = vadd.s32 %v2399, 3
    %v2417 = vand.u32 %v2416, 3
    %vm2418 = vcmp.lt.s32.totalorder %v2417, 2
    %vm2419 = vcmp.eq.s32.totalorder %v2417, 0
    %v2420 = vxor.u32 %v2414, 2147483648
    %v2421 = vsel %vm2419, %v2406, %v2420
    %vm2422 = vcmp.eq.s32.totalorder %v2417, 2
    %v2423 = vxor.u32 %v2406, 2147483648
    %v2424 = vsel %vm2422, %v2423, %v2414
    %v2425 = vsel %vm2418, %v2421, %v2424
    %v2426 = vsel %vm2415, nan, %v2425
    %v2427 = vand.u32 2147483647, %v563
    %vm2428 = vcmp.le.f32.partialorder %v2427, 0.7853982
    %vm2429 = vcmp.lt.s32.totalorder %v563, 0
    %v2430 = vand.u32 %v563, 2139095040
    %v2431 = vshrl.u32 %v2430, 23
    %v2432 = vsub.s32 %v2431, 127
    %v2433 = vand.u32 2147483647, %v563
    %v2434 = vand.u32 %v2433, 8388607
    %v2435 = vor.u32 %v2434, 8388608
    %v2436 = vsub.s32 0, %v2435
    %v2437 = vadd.s32 %v2432, 1
    %vm2438 = vcmp.gt.s32.totalorder %v2437, 0
    %v2439 = vsel %vm2438, %v2437, 0
    %v2440 = vshrl.u32 %v2439, 5
    %v2441 = vand.u32 %v2439, 31
    %v2442 = vsub.s32 32, %v2441
    %v2443 = vshrl.u32 683565275, %v2442
    %v2444 = vshll.u32 683565275, %v2441
    %v2445 = vshrl.u32 2475754826, %v2442
    %v2446 = vor.u32 %v2444, %v2445
    %v2447 = vshll.u32 2475754826, %v2441
    %v2448 = vshrl.u32 2131351028, %v2442
    %v2449 = vor.u32 %v2447, %v2448
    %v2450 = vshll.u32 2131351028, %v2441
    %v2451 = vshrl.u32 2102212464, %v2442
    %v2452 = vor.u32 %v2450, %v2451
    %v2453 = vshll.u32 2102212464, %v2441
    %v2454 = vshrl.u32 920167782, %v2442
    %v2455 = vor.u32 %v2453, %v2454
    %v2456 = vshll.u32 920167782, %v2441
    %v2457 = vshrl.u32 1326507024, %v2442
    %v2458 = vor.u32 %v2456, %v2457
    %vm2459 = vcmp.lt.s32.totalorder %v2440, 1
    %vm2460 = vcmp.lt.s32.totalorder %v2440, 2
    %vm2461 = vcmp.lt.s32.totalorder %v2440, 3
    %vm2462 = vcmp.lt.s32.totalorder %v2440, 4
    %v2463 = vsel %vm2459, %v2443, %v2446
    %v2464 = vsel %vm2462, %v2452, 2102212464
    %v2465 = vsel %vm2461, %v2449, %v2464
    %v2466 = vsel %vm2460, %v2463, %v2465
    %v2467 = vsel %vm2459, %v2446, %v2449
    %v2468 = vsel %vm2462, %v2455, 920167782
    %v2469 = vsel %vm2461, %v2452, %v2468
    %v2470 = vsel %vm2460, %v2467, %v2469
    %v2471 = vsel %vm2459, %v2449, %v2452
    %v2472 = vsel %vm2462, %v2458, 1326507024
    %v2473 = vsel %vm2461, %v2455, %v2472
    %v2474 = vsel %vm2460, %v2471, %v2473
    %v2475 = vshll.u32 %v2435, 8
    %v2476 = vand.u32 %v2475, 65535
    %v2477 = vshrl.u32 %v2475, 16
    %v2478 = vand.u32 %v2474, 65535
    %v2479 = vshrl.u32 %v2474, 16
    %v2480 = vmul.u32 %v2476, %v2478
    %v2481 = vmul.u32 %v2476, %v2479
    %v2482 = vmul.u32 %v2477, %v2478
    %v2483 = vmul.u32 %v2477, %v2479
    %v2484 = vshll.u32 %v2481, 16
    %v2485 = vshrl.u32 %v2481, 16
    %v2486 = vshll.u32 %v2482, 16
    %v2487 = vshrl.u32 %v2482, 16
    %vm2488 = vc.u32 %v2480, %v2484
    %v2489 = vsel %vm2488, 1, 0
    %v2490 = vadd.s32 %v2480, %v2484
    %v2491 = vadd.s32 %v2483, %v2489
    %vm2492 = vc.u32 %v2490, %v2486
    %v2493 = vsel %vm2492, 1, 0
    %v2494 = vadd.s32 %v2490, %v2486
    %v2495 = vadd.s32 %v2491, %v2493
    %v2496 = vadd.s32 %v2495, %v2485
    %v2497 = vadd.s32 %v2496, %v2487
    %v2498 = vand.u32 %v2475, 65535
    %v2499 = vshrl.u32 %v2475, 16
    %v2500 = vand.u32 %v2470, 65535
    %v2501 = vshrl.u32 %v2470, 16
    %v2502 = vmul.u32 %v2498, %v2500
    %v2503 = vmul.u32 %v2498, %v2501
    %v2504 = vmul.u32 %v2499, %v2500
    %v2505 = vmul.u32 %v2499, %v2501
    %v2506 = vshll.u32 %v2503, 16
    %v2507 = vshrl.u32 %v2503, 16
    %v2508 = vshll.u32 %v2504, 16
    %v2509 = vshrl.u32 %v2504, 16
    %vm2510 = vc.u32 %v2502, %v2506
    %v2511 = vsel %vm2510, 1, 0
    %v2512 = vadd.s32 %v2502, %v2506
    %v2513 = vadd.s32 %v2505, %v2511
    %vm2514 = vc.u32 %v2512, %v2508
    %v2515 = vsel %vm2514, 1, 0
    %v2516 = vadd.s32 %v2512, %v2508
    %v2517 = vadd.s32 %v2513, %v2515
    %v2518 = vadd.s32 %v2517, %v2507
    %v2519 = vadd.s32 %v2518, %v2509
    %v2520 = vmul.u32 %v2475, %v2466
    %v2521 = vadd.s32 %v2497, %v2516
    %vm2522 = vc.u32 %v2497, %v2516
    %v2523 = vadd.s32 %v2519, 1
    %v2524 = vsel %vm2522, %v2523, %v2519
    %v2525 = vadd.s32 %v2520, %v2524
    %v2526 = vadd.s32 %v2525, 536870912
    %v2527 = vshrl.u32 %v2526, 30
    %v2528 = vshll.u32 %v2527, 30
    %v2529 = vsub.s32 %v2525, %v2528
    %vm2530 = vcmp.lt.s32.totalorder %v2529, 0
    %v2531 = vsub.s32 0, %v2529
    %v2532 = vsel %vm2530, %v2531, %v2529
    %v2533 = vclz %v2532
    %v2534 = vsub.s32 %v2533, 2
    %vm2535 = vcmp.gt.s32.totalorder 0, %v2534
    %v2536 = vsel %vm2535, 0, %v2534
    %v2537 = vsub.s32 32, %v2536
    %v2538 = vshll.u32 %v2529, %v2536
    %v2539 = vshrl.u32 %v2521, %v2537
    %v2540 = vor.u32 %v2538, %v2539
    %v2541 = vsub.s32 4294967266, %v2536
    %v2542 = vadd.s32 %v2541, 127
    %v2543 = vshll.u32 %v2542, 23
    %v2544 = vor.u32 4788187, %v2543
    %v2545 = vand.u32 2147483647, %v2544
    %v2547 = vcvt.s32.f32 %v2540
    %v2548 = vmul.f32 %v2547, %v2545
    %v2549 = vxor.u32 %v2548, 2147483648
    %v2550 = vsel %vm2429, %v2549, %v2548
    %v2551 = vsub.s32 4, %v2527
    %v2552 = vsel %vm2429, %v2551, %v2527
    %v2553 = vsel %vm2428, %v563, %v2550
    %v2554 = vsel %vm2428, 0, %v2552
    %v2555 = vmul.f32 %v2553, %v2553
    %v2556 = vmul.f32 %v2555, -0.001358992
    %v2557 = vadd.f32 %v2556, 0.041655596
    %v2558 = vmul.f32 %v2555, %v2557
    %v2559 = vadd.f32 %v2558, -0.4999988
    %v2560 = vmul.f32 %v2555, %v2559
    %v2561 = vadd.f32 1.0, %v2560
    %v2562 = vmul.f32 %v2553, %v2553
    %v2563 = vmul.f32 %v2562, -0.00019511016
    %v2564 = vadd.f32 %v2563, 0.008332121
    %v2565 = vmul.f32 %v2562, %v2564
    %v2566 = vadd.f32 %v2565, -0.16666654
    %v2567 = vmul.f32 %v2562, %v2566
    %v2568 = vadd.f32 %v2567, 1.0
    %v2569 = vmul.f32 %v2568, %v2553
    %vm2570 = vweird.f32 %v563
    %v2571 = vadd.s32 %v2554, 3
    %v2572 = vand.u32 %v2571, 3
    %vm2573 = vcmp.lt.s32.totalorder %v2572, 2
    %vm2574 = vcmp.eq.s32.totalorder %v2572, 0
    %v2575 = vxor.u32 %v2569, 2147483648
    %v2576 = vsel %vm2574, %v2561, %v2575
    %vm2577 = vcmp.eq.s32.totalorder %v2572, 2
    %v2578 = vxor.u32 %v2561, 2147483648
    %v2579 = vsel %vm2577, %v2578, %v2569
    %v2580 = vsel %vm2573, %v2576, %v2579
    %v2581 = vsel %vm2570, nan, %v2580
    %v2582 = vand.u32 2147483647, %v564
    %vm2583 = vcmp.le.f32.partialorder %v2582, 0.7853982
    %vm2584 = vcmp.lt.s32.totalorder %v564, 0
    %v2585 = vand.u32 %v564, 2139095040
    %v2586 = vshrl.u32 %v2585, 23
    %v2587 = vsub.s32 %v2586, 127
    %v2588 = vand.u32 2147483647, %v564
    %v2589 = vand.u32 %v2588, 8388607
    %v2590 = vor.u32 %v2589, 8388608
    %v2591 = vsub.s32 0, %v2590
    %v2592 = vadd.s32 %v2587, 1
    %vm2593 = vcmp.gt.s32.totalorder %v2592, 0
    %v2594 = vsel %vm2593, %v2592, 0
    %v2595 = vshrl.u32 %v2594, 5
    %v2596 = vand.u32 %v2594, 31
    %v2597 = vsub.s32 32, %v2596
    %v2598 = vshrl.u32 683565275, %v2597
    %v2599 = vshll.u32 683565275, %v2596
    %v2600 = vshrl.u32 2475754826, %v2597
    %v2601 = vor.u32 %v2599, %v2600
    %v2602 = vshll.u32 2475754826, %v2596
    %v2603 = vshrl.u32 2131351028, %v2597
    %v2604 = vor.u32 %v2602, %v2603
    %v2605 = vshll.u32 2131351028, %v2596
    %v2606 = vshrl.u32 2102212464, %v2597
    %v2607 = vor.u32 %v2605, %v2606
    %v2608 = vshll.u32 2102212464, %v2596
    %v2609 = vshrl.u32 920167782, %v2597
    %v2610 = vor.u32 %v2608, %v2609
    %v2611 = vshll.u32 920167782, %v2596
    %v2612 = vshrl.u32 1326507024, %v2597
    %v2613 = vor.u32 %v2611, %v2612
    %vm2614 = vcmp.lt.s32.totalorder %v2595, 1
    %vm2615 = vcmp.lt.s32.totalorder %v2595, 2
    %vm2616 = vcmp.lt.s32.totalorder %v2595, 3
    %vm2617 = vcmp.lt.s32.totalorder %v2595, 4
    %v2618 = vsel %vm2614, %v2598, %v2601
    %v2619 = vsel %vm2617, %v2607, 2102212464
    %v2620 = vsel %vm2616, %v2604, %v2619
    %v2621 = vsel %vm2615, %v2618, %v2620
    %v2622 = vsel %vm2614, %v2601, %v2604
    %v2623 = vsel %vm2617, %v2610, 920167782
    %v2624 = vsel %vm2616, %v2607, %v2623
    %v2625 = vsel %vm2615, %v2622, %v2624
    %v2626 = vsel %vm2614, %v2604, %v2607
    %v2627 = vsel %vm2617, %v2613, 1326507024
    %v2628 = vsel %vm2616, %v2610, %v2627
    %v2629 = vsel %vm2615, %v2626, %v2628
    %v2630 = vshll.u32 %v2590, 8
    %v2631 = vand.u32 %v2630, 65535
    %v2632 = vshrl.u32 %v2630, 16
    %v2633 = vand.u32 %v2629, 65535
    %v2634 = vshrl.u32 %v2629, 16
    %v2635 = vmul.u32 %v2631, %v2633
    %v2636 = vmul.u32 %v2631, %v2634
    %v2637 = vmul.u32 %v2632, %v2633
    %v2638 = vmul.u32 %v2632, %v2634
    %v2639 = vshll.u32 %v2636, 16
    %v2640 = vshrl.u32 %v2636, 16
    %v2641 = vshll.u32 %v2637, 16
    %v2642 = vshrl.u32 %v2637, 16
    %vm2643 = vc.u32 %v2635, %v2639
    %v2644 = vsel %vm2643, 1, 0
    %v2645 = vadd.s32 %v2635, %v2639
    %v2646 = vadd.s32 %v2638, %v2644
    %vm2647 = vc.u32 %v2645, %v2641
    %v2648 = vsel %vm2647, 1, 0
    %v2649 = vadd.s32 %v2645, %v2641
    %v2650 = vadd.s32 %v2646, %v2648
    %v2651 = vadd.s32 %v2650, %v2640
    %v2652 = vadd.s32 %v2651, %v2642
    %v2653 = vand.u32 %v2630, 65535
    %v2654 = vshrl.u32 %v2630, 16
    %v2655 = vand.u32 %v2625, 65535
    %v2656 = vshrl.u32 %v2625, 16
    %v2657 = vmul.u32 %v2653, %v2655
    %v2658 = vmul.u32 %v2653, %v2656
    %v2659 = vmul.u32 %v2654, %v2655
    %v2660 = vmul.u32 %v2654, %v2656
    %v2661 = vshll.u32 %v2658, 16
    %v2662 = vshrl.u32 %v2658, 16
    %v2663 = vshll.u32 %v2659, 16
    %v2664 = vshrl.u32 %v2659, 16
    %vm2665 = vc.u32 %v2657, %v2661
    %v2666 = vsel %vm2665, 1, 0
    %v2667 = vadd.s32 %v2657, %v2661
    %v2668 = vadd.s32 %v2660, %v2666
    %vm2669 = vc.u32 %v2667, %v2663
    %v2670 = vsel %vm2669, 1, 0
    %v2671 = vadd.s32 %v2667, %v2663
    %v2672 = vadd.s32 %v2668, %v2670
    %v2673 = vadd.s32 %v2672, %v2662
    %v2674 = vadd.s32 %v2673, %v2664
    %v2675 = vmul.u32 %v2630, %v2621
    %v2676 = vadd.s32 %v2652, %v2671
    %vm2677 = vc.u32 %v2652, %v2671
    %v2678 = vadd.s32 %v2674, 1
    %v2679 = vsel %vm2677, %v2678, %v2674
    %v2680 = vadd.s32 %v2675, %v2679
    %v2681 = vadd.s32 %v2680, 536870912
    %v2682 = vshrl.u32 %v2681, 30
    %v2683 = vshll.u32 %v2682, 30
    %v2684 = vsub.s32 %v2680, %v2683
    %vm2685 = vcmp.lt.s32.totalorder %v2684, 0
    %v2686 = vsub.s32 0, %v2684
    %v2687 = vsel %vm2685, %v2686, %v2684
    %v2688 = vclz %v2687
    %v2689 = vsub.s32 %v2688, 2
    %vm2690 = vcmp.gt.s32.totalorder 0, %v2689
    %v2691 = vsel %vm2690, 0, %v2689
    %v2692 = vsub.s32 32, %v2691
    %v2693 = vshll.u32 %v2684, %v2691
    %v2694 = vshrl.u32 %v2676, %v2692
    %v2695 = vor.u32 %v2693, %v2694
    %v2696 = vsub.s32 4294967266, %v2691
    %v2697 = vadd.s32 %v2696, 127
    %v2698 = vshll.u32 %v2697, 23
    %v2699 = vor.u32 4788187, %v2698
    %v2700 = vand.u32 2147483647, %v2699
    %v2702 = vcvt.s32.f32 %v2695
    %v2703 = vmul.f32 %v2702, %v2700
    %v2704 = vxor.u32 %v2703, 2147483648
    %v2705 = vsel %vm2584, %v2704, %v2703
    %v2706 = vsub.s32 4, %v2682
    %v2707 = vsel %vm2584, %v2706, %v2682
    %v2708 = vsel %vm2583, %v564, %v2705
    %v2709 = vsel %vm2583, 0, %v2707
    %v2710 = vmul.f32 %v2708, %v2708
    %v2711 = vmul.f32 %v2710, -0.001358992
    %v2712 = vadd.f32 %v2711, 0.041655596
    %v2713 = vmul.f32 %v2710, %v2712
    %v2714 = vadd.f32 %v2713, -0.4999988
    %v2715 = vmul.f32 %v2710, %v2714
    %v2716 = vadd.f32 1.0, %v2715
    %v2717 = vmul.f32 %v2708, %v2708
    %v2718 = vmul.f32 %v2717, -0.00019511016
    %v2719 = vadd.f32 %v2718, 0.008332121
    %v2720 = vmul.f32 %v2717, %v2719
    %v2721 = vadd.f32 %v2720, -0.16666654
    %v2722 = vmul.f32 %v2717, %v2721
    %v2723 = vadd.f32 %v2722, 1.0
    %v2724 = vmul.f32 %v2723, %v2708
    %vm2725 = vweird.f32 %v564
    %v2726 = vadd.s32 %v2709, 3
    %v2727 = vand.u32 %v2726, 3
    %vm2728 = vcmp.lt.s32.totalorder %v2727, 2
    %vm2729 = vcmp.eq.s32.totalorder %v2727, 0
    %v2730 = vxor.u32 %v2724, 2147483648
    %v2731 = vsel %vm2729, %v2716, %v2730
    %vm2732 = vcmp.eq.s32.totalorder %v2727, 2
    %v2733 = vxor.u32 %v2716, 2147483648
    %v2734 = vsel %vm2732, %v2733, %v2724
    %v2735 = vsel %vm2728, %v2731, %v2734
    %v2736 = vsel %vm2725, nan, %v2735
    %v2737 = vand.u32 2147483647, %v565
    %vm2738 = vcmp.le.f32.partialorder %v2737, 0.7853982
    %vm2739 = vcmp.lt.s32.totalorder %v565, 0
    %v2740 = vand.u32 %v565, 2139095040
    %v2741 = vshrl.u32 %v2740, 23
    %v2742 = vsub.s32 %v2741, 127
    %v2743 = vand.u32 2147483647, %v565
    %v2744 = vand.u32 %v2743, 8388607
    %v2745 = vor.u32 %v2744, 8388608
    %v2746 = vsub.s32 0, %v2745
    %v2747 = vadd.s32 %v2742, 1
    %vm2748 = vcmp.gt.s32.totalorder %v2747, 0
    %v2749 = vsel %vm2748, %v2747, 0
    %v2750 = vshrl.u32 %v2749, 5
    %v2751 = vand.u32 %v2749, 31
    %v2752 = vsub.s32 32, %v2751
    %v2753 = vshrl.u32 683565275, %v2752
    %v2754 = vshll.u32 683565275, %v2751
    %v2755 = vshrl.u32 2475754826, %v2752
    %v2756 = vor.u32 %v2754, %v2755
    %v2757 = vshll.u32 2475754826, %v2751
    %v2758 = vshrl.u32 2131351028, %v2752
    %v2759 = vor.u32 %v2757, %v2758
    %v2760 = vshll.u32 2131351028, %v2751
    %v2761 = vshrl.u32 2102212464, %v2752
    %v2762 = vor.u32 %v2760, %v2761
    %v2763 = vshll.u32 2102212464, %v2751
    %v2764 = vshrl.u32 920167782, %v2752
    %v2765 = vor.u32 %v2763, %v2764
    %v2766 = vshll.u32 920167782, %v2751
    %v2767 = vshrl.u32 1326507024, %v2752
    %v2768 = vor.u32 %v2766, %v2767
    %vm2769 = vcmp.lt.s32.totalorder %v2750, 1
    %vm2770 = vcmp.lt.s32.totalorder %v2750, 2
    %vm2771 = vcmp.lt.s32.totalorder %v2750, 3
    %vm2772 = vcmp.lt.s32.totalorder %v2750, 4
    %v2773 = vsel %vm2769, %v2753, %v2756
    %v2774 = vsel %vm2772, %v2762, 2102212464
    %v2775 = vsel %vm2771, %v2759, %v2774
    %v2776 = vsel %vm2770, %v2773, %v2775
    %v2777 = vsel %vm2769, %v2756, %v2759
    %v2778 = vsel %vm2772, %v2765, 920167782
    %v2779 = vsel %vm2771, %v2762, %v2778
    %v2780 = vsel %vm2770, %v2777, %v2779
    %v2781 = vsel %vm2769, %v2759, %v2762
    %v2782 = vsel %vm2772, %v2768, 1326507024
    %v2783 = vsel %vm2771, %v2765, %v2782
    %v2784 = vsel %vm2770, %v2781, %v2783
    %v2785 = vshll.u32 %v2745, 8
    %v2786 = vand.u32 %v2785, 65535
    %v2787 = vshrl.u32 %v2785, 16
    %v2788 = vand.u32 %v2784, 65535
    %v2789 = vshrl.u32 %v2784, 16
    %v2790 = vmul.u32 %v2786, %v2788
    %v2791 = vmul.u32 %v2786, %v2789
    %v2792 = vmul.u32 %v2787, %v2788
    %v2793 = vmul.u32 %v2787, %v2789
    %v2794 = vshll.u32 %v2791, 16
    %v2795 = vshrl.u32 %v2791, 16
    %v2796 = vshll.u32 %v2792, 16
    %v2797 = vshrl.u32 %v2792, 16
    %vm2798 = vc.u32 %v2790, %v2794
    %v2799 = vsel %vm2798, 1, 0
    %v2800 = vadd.s32 %v2790, %v2794
    %v2801 = vadd.s32 %v2793, %v2799
    %vm2802 = vc.u32 %v2800, %v2796
    %v2803 = vsel %vm2802, 1, 0
    %v2804 = vadd.s32 %v2800, %v2796
    %v2805 = vadd.s32 %v2801, %v2803
    %v2806 = vadd.s32 %v2805, %v2795
    %v2807 = vadd.s32 %v2806, %v2797
    %v2808 = vand.u32 %v2785, 65535
    %v2809 = vshrl.u32 %v2785, 16
    %v2810 = vand.u32 %v2780, 65535
    %v2811 = vshrl.u32 %v2780, 16
    %v2812 = vmul.u32 %v2808, %v2810
    %v2813 = vmul.u32 %v2808, %v2811
    %v2814 = vmul.u32 %v2809, %v2810
    %v2815 = vmul.u32 %v2809, %v2811
    %v2816 = vshll.u32 %v2813, 16
    %v2817 = vshrl.u32 %v2813, 16
    %v2818 = vshll.u32 %v2814, 16
    %v2819 = vshrl.u32 %v2814, 16
    %vm2820 = vc.u32 %v2812, %v2816
    %v2821 = vsel %vm2820, 1, 0
    %v2822 = vadd.s32 %v2812, %v2816
    %v2823 = vadd.s32 %v2815, %v2821
    %vm2824 = vc.u32 %v2822, %v2818
    %v2825 = vsel %vm2824, 1, 0
    %v2826 = vadd.s32 %v2822, %v2818
    %v2827 = vadd.s32 %v2823, %v2825
    %v2828 = vadd.s32 %v2827, %v2817
    %v2829 = vadd.s32 %v2828, %v2819
    %v2830 = vmul.u32 %v2785, %v2776
    %v2831 = vadd.s32 %v2807, %v2826
    %vm2832 = vc.u32 %v2807, %v2826
    %v2833 = vadd.s32 %v2829, 1
    %v2834 = vsel %vm2832, %v2833, %v2829
    %v2835 = vadd.s32 %v2830, %v2834
    %v2836 = vadd.s32 %v2835, 536870912
    %v2837 = vshrl.u32 %v2836, 30
    %v2838 = vshll.u32 %v2837, 30
    %v2839 = vsub.s32 %v2835, %v2838
    %vm2840 = vcmp.lt.s32.totalorder %v2839, 0
    %v2841 = vsub.s32 0, %v2839
    %v2842 = vsel %vm2840, %v2841, %v2839
    %v2843 = vclz %v2842
    %v2844 = vsub.s32 %v2843, 2
    %vm2845 = vcmp.gt.s32.totalorder 0, %v2844
    %v2846 = vsel %vm2845, 0, %v2844
    %v2847 = vsub.s32 32, %v2846
    %v2848 = vshll.u32 %v2839, %v2846
    %v2849 = vshrl.u32 %v2831, %v2847
    %v2850 = vor.u32 %v2848, %v2849
    %v2851 = vsub.s32 4294967266, %v2846
    %v2852 = vadd.s32 %v2851, 127
    %v2853 = vshll.u32 %v2852, 23
    %v2854 = vor.u32 4788187, %v2853
    %v2855 = vand.u32 2147483647, %v2854
    %v2857 = vcvt.s32.f32 %v2850
    %v2858 = vmul.f32 %v2857, %v2855
    %v2859 = vxor.u32 %v2858, 2147483648
    %v2860 = vsel %vm2739, %v2859, %v2858
    %v2861 = vsub.s32 4, %v2837
    %v2862 = vsel %vm2739, %v2861, %v2837
    %v2863 = vsel %vm2738, %v565, %v2860
    %v2864 = vsel %vm2738, 0, %v2862
    %v2865 = vmul.f32 %v2863, %v2863
    %v2866 = vmul.f32 %v2865, -0.001358992
    %v2867 = vadd.f32 %v2866, 0.041655596
    %v2868 = vmul.f32 %v2865, %v2867
    %v2869 = vadd.f32 %v2868, -0.4999988
    %v2870 = vmul.f32 %v2865, %v2869
    %v2871 = vadd.f32 1.0, %v2870
    %v2872 = vmul.f32 %v2863, %v2863
    %v2873 = vmul.f32 %v2872, -0.00019511016
    %v2874 = vadd.f32 %v2873, 0.008332121
    %v2875 = vmul.f32 %v2872, %v2874
    %v2876 = vadd.f32 %v2875, -0.16666654
    %v2877 = vmul.f32 %v2872, %v2876
    %v2878 = vadd.f32 %v2877, 1.0
    %v2879 = vmul.f32 %v2878, %v2863
    %vm2880 = vweird.f32 %v565
    %v2881 = vadd.s32 %v2864, 3
    %v2882 = vand.u32 %v2881, 3
    %vm2883 = vcmp.lt.s32.totalorder %v2882, 2
    %vm2884 = vcmp.eq.s32.totalorder %v2882, 0
    %v2885 = vxor.u32 %v2879, 2147483648
    %v2886 = vsel %vm2884, %v2871, %v2885
    %vm2887 = vcmp.eq.s32.totalorder %v2882, 2
    %v2888 = vxor.u32 %v2871, 2147483648
    %v2889 = vsel %vm2887, %v2888, %v2879
    %v2890 = vsel %vm2883, %v2886, %v2889
    %v2891 = vsel %vm2880, nan, %v2890
    %v2892 = vand.u32 2147483647, %v566
    %vm2893 = vcmp.le.f32.partialorder %v2892, 0.7853982
    %vm2894 = vcmp.lt.s32.totalorder %v566, 0
    %v2895 = vand.u32 %v566, 2139095040
    %v2896 = vshrl.u32 %v2895, 23
    %v2897 = vsub.s32 %v2896, 127
    %v2898 = vand.u32 2147483647, %v566
    %v2899 = vand.u32 %v2898, 8388607
    %v2900 = vor.u32 %v2899, 8388608
    %v2901 = vsub.s32 0, %v2900
    %v2902 = vadd.s32 %v2897, 1
    %vm2903 = vcmp.gt.s32.totalorder %v2902, 0
    %v2904 = vsel %vm2903, %v2902, 0
    %v2905 = vshrl.u32 %v2904, 5
    %v2906 = vand.u32 %v2904, 31
    %v2907 = vsub.s32 32, %v2906
    %v2908 = vshrl.u32 683565275, %v2907
    %v2909 = vshll.u32 683565275, %v2906
    %v2910 = vshrl.u32 2475754826, %v2907
    %v2911 = vor.u32 %v2909, %v2910
    %v2912 = vshll.u32 2475754826, %v2906
    %v2913 = vshrl.u32 2131351028, %v2907
    %v2914 = vor.u32 %v2912, %v2913
    %v2915 = vshll.u32 2131351028, %v2906
    %v2916 = vshrl.u32 2102212464, %v2907
    %v2917 = vor.u32 %v2915, %v2916
    %v2918 = vshll.u32 2102212464, %v2906
    %v2919 = vshrl.u32 920167782, %v2907
    %v2920 = vor.u32 %v2918, %v2919
    %v2921 = vshll.u32 920167782, %v2906
    %v2922 = vshrl.u32 1326507024, %v2907
    %v2923 = vor.u32 %v2921, %v2922
    %vm2924 = vcmp.lt.s32.totalorder %v2905, 1
    %vm2925 = vcmp.lt.s32.totalorder %v2905, 2
    %vm2926 = vcmp.lt.s32.totalorder %v2905, 3
    %vm2927 = vcmp.lt.s32.totalorder %v2905, 4
    %v2928 = vsel %vm2924, %v2908, %v2911
    %v2929 = vsel %vm2927, %v2917, 2102212464
    %v2930 = vsel %vm2926, %v2914, %v2929
    %v2931 = vsel %vm2925, %v2928, %v2930
    %v2932 = vsel %vm2924, %v2911, %v2914
    %v2933 = vsel %vm2927, %v2920, 920167782
    %v2934 = vsel %vm2926, %v2917, %v2933
    %v2935 = vsel %vm2925, %v2932, %v2934
    %v2936 = vsel %vm2924, %v2914, %v2917
    %v2937 = vsel %vm2927, %v2923, 1326507024
    %v2938 = vsel %vm2926, %v2920, %v2937
    %v2939 = vsel %vm2925, %v2936, %v2938
    %v2940 = vshll.u32 %v2900, 8
    %v2941 = vand.u32 %v2940, 65535
    %v2942 = vshrl.u32 %v2940, 16
    %v2943 = vand.u32 %v2939, 65535
    %v2944 = vshrl.u32 %v2939, 16
    %v2945 = vmul.u32 %v2941, %v2943
    %v2946 = vmul.u32 %v2941, %v2944
    %v2947 = vmul.u32 %v2942, %v2943
    %v2948 = vmul.u32 %v2942, %v2944
    %v2949 = vshll.u32 %v2946, 16
    %v2950 = vshrl.u32 %v2946, 16
    %v2951 = vshll.u32 %v2947, 16
    %v2952 = vshrl.u32 %v2947, 16
    %vm2953 = vc.u32 %v2945, %v2949
    %v2954 = vsel %vm2953, 1, 0
    %v2955 = vadd.s32 %v2945, %v2949
    %v2956 = vadd.s32 %v2948, %v2954
    %vm2957 = vc.u32 %v2955, %v2951
    %v2958 = vsel %vm2957, 1, 0
    %v2959 = vadd.s32 %v2955, %v2951
    %v2960 = vadd.s32 %v2956, %v2958
    %v2961 = vadd.s32 %v2960, %v2950
    %v2962 = vadd.s32 %v2961, %v2952
    %v2963 = vand.u32 %v2940, 65535
    %v2964 = vshrl.u32 %v2940, 16
    %v2965 = vand.u32 %v2935, 65535
    %v2966 = vshrl.u32 %v2935, 16
    %v2967 = vmul.u32 %v2963, %v2965
    %v2968 = vmul.u32 %v2963, %v2966
    %v2969 = vmul.u32 %v2964, %v2965
    %v2970 = vmul.u32 %v2964, %v2966
    %v2971 = vshll.u32 %v2968, 16
    %v2972 = vshrl.u32 %v2968, 16
    %v2973 = vshll.u32 %v2969, 16
    %v2974 = vshrl.u32 %v2969, 16
    %vm2975 = vc.u32 %v2967, %v2971
    %v2976 = vsel %vm2975, 1, 0
    %v2977 = vadd.s32 %v2967, %v2971
    %v2978 = vadd.s32 %v2970, %v2976
    %vm2979 = vc.u32 %v2977, %v2973
    %v2980 = vsel %vm2979, 1, 0
    %v2981 = vadd.s32 %v2977, %v2973
    %v2982 = vadd.s32 %v2978, %v2980
    %v2983 = vadd.s32 %v2982, %v2972
    %v2984 = vadd.s32 %v2983, %v2974
    %v2985 = vmul.u32 %v2940, %v2931
    %v2986 = vadd.s32 %v2962, %v2981
    %vm2987 = vc.u32 %v2962, %v2981
    %v2988 = vadd.s32 %v2984, 1
    %v2989 = vsel %vm2987, %v2988, %v2984
    %v2990 = vadd.s32 %v2985, %v2989
    %v2991 = vadd.s32 %v2990, 536870912
    %v2992 = vshrl.u32 %v2991, 30
    %v2993 = vshll.u32 %v2992, 30
    %v2994 = vsub.s32 %v2990, %v2993
    %vm2995 = vcmp.lt.s32.totalorder %v2994, 0
    %v2996 = vsub.s32 0, %v2994
    %v2997 = vsel %vm2995, %v2996, %v2994
    %v2998 = vclz %v2997
    %v2999 = vsub.s32 %v2998, 2
    %vm3000 = vcmp.gt.s32.totalorder 0, %v2999
    %v3001 = vsel %vm3000, 0, %v2999
    %v3002 = vsub.s32 32, %v3001
    %v3003 = vshll.u32 %v2994, %v3001
    %v3004 = vshrl.u32 %v2986, %v3002
    %v3005 = vor.u32 %v3003, %v3004
    %v3006 = vsub.s32 4294967266, %v3001
    %v3007 = vadd.s32 %v3006, 127
    %v3008 = vshll.u32 %v3007, 23
    %v3009 = vor.u32 4788187, %v3008
    %v3010 = vand.u32 2147483647, %v3009
    %v3012 = vcvt.s32.f32 %v3005
    %v3013 = vmul.f32 %v3012, %v3010
    %v3014 = vxor.u32 %v3013, 2147483648
    %v3015 = vsel %vm2894, %v3014, %v3013
    %v3016 = vsub.s32 4, %v2992
    %v3017 = vsel %vm2894, %v3016, %v2992
    %v3018 = vsel %vm2893, %v566, %v3015
    %v3019 = vsel %vm2893, 0, %v3017
    %v3020 = vmul.f32 %v3018, %v3018
    %v3021 = vmul.f32 %v3020, -0.001358992
    %v3022 = vadd.f32 %v3021, 0.041655596
    %v3023 = vmul.f32 %v3020, %v3022
    %v3024 = vadd.f32 %v3023, -0.4999988
    %v3025 = vmul.f32 %v3020, %v3024
    %v3026 = vadd.f32 1.0, %v3025
    %v3027 = vmul.f32 %v3018, %v3018
    %v3028 = vmul.f32 %v3027, -0.00019511016
    %v3029 = vadd.f32 %v3028, 0.008332121
    %v3030 = vmul.f32 %v3027, %v3029
    %v3031 = vadd.f32 %v3030, -0.16666654
    %v3032 = vmul.f32 %v3027, %v3031
    %v3033 = vadd.f32 %v3032, 1.0
    %v3034 = vmul.f32 %v3033, %v3018
    %vm3035 = vweird.f32 %v566
    %v3036 = vadd.s32 %v3019, 3
    %v3037 = vand.u32 %v3036, 3
    %vm3038 = vcmp.lt.s32.totalorder %v3037, 2
    %vm3039 = vcmp.eq.s32.totalorder %v3037, 0
    %v3040 = vxor.u32 %v3034, 2147483648
    %v3041 = vsel %vm3039, %v3026, %v3040
    %vm3042 = vcmp.eq.s32.totalorder %v3037, 2
    %v3043 = vxor.u32 %v3026, 2147483648
    %v3044 = vsel %vm3042, %v3043, %v3034
    %v3045 = vsel %vm3038, %v3041, %v3044
    %v3046 = vsel %vm3035, nan, %v3045
    %v3047 = vld [vmem:[%s5] sm:$0xff]
    %v3048 = vld [vmem:[%s5 + $0x8] sm:$0xff]
    %v3049 = vld [vmem:[%s5 + $0x10] sm:$0xff]
    %v3050 = vld [vmem:[%s5 + $0x18] sm:$0xff]
    %v3051 = vld [vmem:[%s5 + $0x20] sm:$0xff]
    %v3052 = vld [vmem:[%s5 + $0x28] sm:$0xff]
    %v3053 = vld [vmem:[%s5 + $0x30] sm:$0xff]
    %v3054 = vld [vmem:[%s5 + $0x38] sm:$0xff]
    %v3055 = vld [vmem:[%s5 + $0x40] sm:$0xff]
    %v3056 = vld [vmem:[%s5 + $0x48] sm:$0xff]
    %v3057 = vld [vmem:[%s5 + $0x50] sm:$0xff]
    %v3058 = vld [vmem:[%s5 + $0x58] sm:$0xff]
    %v3059 = vld [vmem:[%s5 + $0x60] sm:$0xff]
    %v3060 = vld [vmem:[%s5 + $0x68] sm:$0xff]
    %v3061 = vld [vmem:[%s5 + $0x70] sm:$0xff]
    %v3062 = vld [vmem:[%s5 + $0x78] sm:$0xff]
    %v3063 = vld [vmem:[%s6] sm:$0x1]
    %v3065 = vperm.slane %v3063, 0
    %3067 = vmatpush.msra.mxu0 %v3062
    %3068 = vmatpush.msra.mxu0 %v3061
    %3069 = vmatpush.msra.mxu0 %v3060
    %3070 = vmatpush.msra.mxu0 %v3059
    %3071 = vmatpush.msra.mxu0 %v3058
    %3072 = vmatpush.msra.mxu0 %v3057
    %3073 = vmatpush.msra.mxu0 %v3056
    %3074 = vmatpush.msra.mxu0 %v3055
    %3075 = vmatpush.msra.mxu0 %v3054
    %3076 = vmatpush.msra.mxu0 %v3053
    %3077 = vmatpush.msra.mxu0 %v3052
    %3078 = vmatpush.msra.mxu0 %v3051
    %3079 = vmatpush.msra.mxu0 %v3050
    %3080 = vmatpush.msra.mxu0 %v3049
    %3081 = vmatpush.msra.mxu0 %v3048
    %3082 = vmatpush.msra.mxu0 %v3047
    %3083 = vmatmul.f32.gmra.mxu0 %v721
    %v3084 = vpop.f32.mrf.mxu0
    %v3085 = vadd.f32 %v3065, %v3084
    %3086 = vmatmul.f32.gmra.mxu0 %v876
    %v3087 = vpop.f32.mrf.mxu0
    %v3088 = vadd.f32 %v3065, %v3087
    %3089 = vmatmul.f32.gmra.mxu0 %v1031
    %v3090 = vpop.f32.mrf.mxu0
    %v3091 = vadd.f32 %v3065, %v3090
    %3092 = vmatmul.f32.gmra.mxu0 %v1186
    %v3093 = vpop.f32.mrf.mxu0
    %v3094 = vadd.f32 %v3065, %v3093
    %3095 = vmatmul.f32.gmra.mxu0 %v1341
    %v3096 = vpop.f32.mrf.mxu0
    %v3097 = vadd.f32 %v3065, %v3096
    %3098 = vmatmul.f32.gmra.mxu0 %v1496
    %v3099 = vpop.f32.mrf.mxu0
    %v3100 = vadd.f32 %v3065, %v3099
    %3101 = vmatmul.f32.gmra.mxu0 %v1651
    %v3102 = vpop.f32.mrf.mxu0
    %v3103 = vadd.f32 %v3065, %v3102
    %3104 = vmatmul.f32.gmra.mxu0 %v1806
    %v3105 = vpop.f32.mrf.mxu0
    %v3106 = vadd.f32 %v3065, %v3105
    %3107 = vmatmul.f32.gmra.mxu0 %v1961
    %v3108 = vpop.f32.mrf.mxu0
    %v3109 = vadd.f32 %v3065, %v3108
    %3110 = vmatmul.f32.gmra.mxu0 %v2116
    %v3111 = vpop.f32.mrf.mxu0
    %v3112 = vadd.f32 %v3065, %v3111
    %3113 = vmatmul.f32.gmra.mxu0 %v2271
    %v3114 = vpop.f32.mrf.mxu0
    %v3115 = vadd.f32 %v3065, %v3114
    %3116 = vmatmul.f32.gmra.mxu0 %v2426
    %v3117 = vpop.f32.mrf.mxu0
    %v3118 = vadd.f32 %v3065, %v3117
    %3119 = vmatmul.f32.gmra.mxu0 %v2581
    %v3120 = vpop.f32.mrf.mxu0
    %v3121 = vadd.f32 %v3065, %v3120
    %3122 = vmatmul.f32.gmra.mxu0 %v2736
    %v3123 = vpop.f32.mrf.mxu0
    %v3124 = vadd.f32 %v3065, %v3123
    %3125 = vmatmul.f32.gmra.mxu0 %v2891
    %v3126 = vpop.f32.mrf.mxu0
    %v3127 = vadd.f32 %v3065, %v3126
    %3128 = vmatmul.f32.gmra.mxu0 %v3046
    %v3129 = vpop.f32.mrf.mxu0
    %v3130 = vadd.f32 %v3065, %v3129
    %3131 = vdwg.mxu0
    %v3132 = vtanh.pop %v3085
    %v3133 = vtanh.pop %v3088
    %v3134 = vtanh.pop %v3091
    %v3135 = vtanh.pop %v3094
    %v3136 = vtanh.pop %v3097
    %v3137 = vtanh.pop %v3100
    %v3138 = vtanh.pop %v3103
    %v3139 = vtanh.pop %v3106
    %v3140 = vtanh.pop %v3109
    %v3141 = vtanh.pop %v3112
    %v3142 = vtanh.pop %v3115
    %v3143 = vtanh.pop %v3118
    %v3144 = vtanh.pop %v3121
    %v3145 = vtanh.pop %v3124
    %v3146 = vtanh.pop %v3127
    %v3147 = vtanh.pop %v3130
    %v3148 = vld [vmem:[%s7] sm:$0xff]
    %v3149 = vld [vmem:[%s7 + $0x8] sm:$0xff]
    %v3150 = vld [vmem:[%s7 + $0x10] sm:$0xff]
    %v3151 = vld [vmem:[%s7 + $0x18] sm:$0xff]
    %v3152 = vld [vmem:[%s7 + $0x20] sm:$0xff]
    %v3153 = vld [vmem:[%s7 + $0x28] sm:$0xff]
    %v3154 = vld [vmem:[%s7 + $0x30] sm:$0xff]
    %v3155 = vld [vmem:[%s7 + $0x38] sm:$0xff]
    %v3156 = vld [vmem:[%s7 + $0x40] sm:$0xff]
    %v3157 = vld [vmem:[%s7 + $0x48] sm:$0xff]
    %v3158 = vld [vmem:[%s7 + $0x50] sm:$0xff]
    %v3159 = vld [vmem:[%s7 + $0x58] sm:$0xff]
    %v3160 = vld [vmem:[%s7 + $0x60] sm:$0xff]
    %v3161 = vld [vmem:[%s7 + $0x68] sm:$0xff]
    %v3162 = vld [vmem:[%s7 + $0x70] sm:$0xff]
    %v3163 = vld [vmem:[%s7 + $0x78] sm:$0xff]
    %v3164 = vld [vmem:[%s8] sm:$0x1]
    %v3166 = vperm.slane %v3164, 0
    %3168 = vmatpush.msra.mxu0 %v3163
    %3169 = vmatpush.msra.mxu0 %v3162
    %3170 = vmatpush.msra.mxu0 %v3161
    %3171 = vmatpush.msra.mxu0 %v3160
    %3172 = vmatpush.msra.mxu0 %v3159
    %3173 = vmatpush.msra.mxu0 %v3158
    %3174 = vmatpush.msra.mxu0 %v3157
    %3175 = vmatpush.msra.mxu0 %v3156
    %3176 = vmatpush.msra.mxu0 %v3155
    %3177 = vmatpush.msra.mxu0 %v3154
    %3178 = vmatpush.msra.mxu0 %v3153
    %3179 = vmatpush.msra.mxu0 %v3152
    %3180 = vmatpush.msra.mxu0 %v3151
    %3181 = vmatpush.msra.mxu0 %v3150
    %3182 = vmatpush.msra.mxu0 %v3149
    %3183 = vmatpush.msra.mxu0 %v3148
    %3184 = vmatmul.f32.gmra.mxu0 %v3132
    %v3185 = vpop.f32.mrf.mxu0
    %v3186 = vadd.f32 %v3166, %v3185
    %3187 = vmatmul.f32.gmra.mxu0 %v3133
    %v3188 = vpop.f32.mrf.mxu0
    %v3189 = vadd.f32 %v3166, %v3188
    %3190 = vmatmul.f32.gmra.mxu0 %v3134
    %v3191 = vpop.f32.mrf.mxu0
    %v3192 = vadd.f32 %v3166, %v3191
    %3193 = vmatmul.f32.gmra.mxu0 %v3135
    %v3194 = vpop.f32.mrf.mxu0
    %v3195 = vadd.f32 %v3166, %v3194
    %3196 = vmatmul.f32.gmra.mxu0 %v3136
    %v3197 = vpop.f32.mrf.mxu0
    %v3198 = vadd.f32 %v3166, %v3197
    %3199 = vmatmul.f32.gmra.mxu0 %v3137
    %v3200 = vpop.f32.mrf.mxu0
    %v3201 = vadd.f32 %v3166, %v3200
    %3202 = vmatmul.f32.gmra.mxu0 %v3138
    %v3203 = vpop.f32.mrf.mxu0
    %v3204 = vadd.f32 %v3166, %v3203
    %3205 = vmatmul.f32.gmra.mxu0 %v3139
    %v3206 = vpop.f32.mrf.mxu0
    %v3207 = vadd.f32 %v3166, %v3206
    %3208 = vmatmul.f32.gmra.mxu0 %v3140
    %v3209 = vpop.f32.mrf.mxu0
    %v3210 = vadd.f32 %v3166, %v3209
    %3211 = vmatmul.f32.gmra.mxu0 %v3141
    %v3212 = vpop.f32.mrf.mxu0
    %v3213 = vadd.f32 %v3166, %v3212
    %3214 = vmatmul.f32.gmra.mxu0 %v3142
    %v3215 = vpop.f32.mrf.mxu0
    %v3216 = vadd.f32 %v3166, %v3215
    %3217 = vmatmul.f32.gmra.mxu0 %v3143
    %v3218 = vpop.f32.mrf.mxu0
    %v3219 = vadd.f32 %v3166, %v3218
    %3220 = vmatmul.f32.gmra.mxu0 %v3144
    %v3221 = vpop.f32.mrf.mxu0
    %v3222 = vadd.f32 %v3166, %v3221
    %3223 = vmatmul.f32.gmra.mxu0 %v3145
    %v3224 = vpop.f32.mrf.mxu0
    %v3225 = vadd.f32 %v3166, %v3224
    %3226 = vmatmul.f32.gmra.mxu0 %v3146
    %v3227 = vpop.f32.mrf.mxu0
    %v3228 = vadd.f32 %v3166, %v3227
    %3229 = vmatmul.f32.gmra.mxu0 %v3147
    %v3230 = vpop.f32.mrf.mxu0
    %v3231 = vadd.f32 %v3166, %v3230
    %3232 = vdwg.mxu0
    %v3233 = vtanh.pop %v3186
    %v3234 = vtanh.pop %v3189
    %v3235 = vtanh.pop %v3192
    %v3236 = vtanh.pop %v3195
    %v3237 = vtanh.pop %v3198
    %v3238 = vtanh.pop %v3201
    %v3239 = vtanh.pop %v3204
    %v3240 = vtanh.pop %v3207
    %v3241 = vtanh.pop %v3210
    %v3242 = vtanh.pop %v3213
    %v3243 = vtanh.pop %v3216
    %v3244 = vtanh.pop %v3219
    %v3245 = vtanh.pop %v3222
    %v3246 = vtanh.pop %v3225
    %v3247 = vtanh.pop %v3228
    %v3248 = vtanh.pop %v3231
    %v3249 = vld [vmem:[#allocation2] sm:$0xff]
    %v3250 = vld [vmem:[#allocation2 + $0x8] sm:$0xff]
    %v3251 = vld [vmem:[#allocation2 + $0x10] sm:$0xff]
    %v3252 = vld [vmem:[#allocation2 + $0x18] sm:$0xff]
    %v3253 = vld [vmem:[#allocation2 + $0x20] sm:$0xff]
    %v3254 = vld [vmem:[#allocation2 + $0x28] sm:$0xff]
    %v3255 = vld [vmem:[#allocation2 + $0x30] sm:$0xff]
    %v3256 = vld [vmem:[#allocation2 + $0x38] sm:$0xff]
    %v3257 = vld [vmem:[#allocation2 + $0x40] sm:$0xff]
    %v3258 = vld [vmem:[#allocation2 + $0x48] sm:$0xff]
    %v3259 = vld [vmem:[#allocation2 + $0x50] sm:$0xff]
    %v3260 = vld [vmem:[#allocation2 + $0x58] sm:$0xff]
    %v3261 = vld [vmem:[#allocation2 + $0x60] sm:$0xff]
    %v3262 = vld [vmem:[#allocation2 + $0x68] sm:$0xff]
    %v3263 = vld [vmem:[#allocation2 + $0x70] sm:$0xff]
    %v3264 = vld [vmem:[#allocation2 + $0x78] sm:$0xff]
    %v3265 = vld [vmem:[%s10] sm:$0x1]
    %v3267 = vperm.slane %v3265, 0
    %3269 = vmatpush.msra.mxu0 %v3264
    %3270 = vmatpush.msra.mxu0 %v3263
    %3271 = vmatpush.msra.mxu0 %v3262
    %3272 = vmatpush.msra.mxu0 %v3261
    %3273 = vmatpush.msra.mxu0 %v3260
    %3274 = vmatpush.msra.mxu0 %v3259
    %3275 = vmatpush.msra.mxu0 %v3258
    %3276 = vmatpush.msra.mxu0 %v3257
    %3277 = vmatpush.msra.mxu0 %v3256
    %3278 = vmatpush.msra.mxu0 %v3255
    %3279 = vmatpush.msra.mxu0 %v3254
    %3280 = vmatpush.msra.mxu0 %v3253
    %3281 = vmatpush.msra.mxu0 %v3252
    %3282 = vmatpush.msra.mxu0 %v3251
    %3283 = vmatpush.msra.mxu0 %v3250
    %3284 = vmatpush.msra.mxu0 %v3249
    %3285 = vmatmul.f32.gmra.mxu0 %v3233
    %v3286 = vpop.f32.mrf.mxu0
    %v3287 = vadd.f32 %v3267, %v3286
    %3288 = vmatmul.f32.gmra.mxu0 %v3234
    %v3289 = vpop.f32.mrf.mxu0
    %v3290 = vadd.f32 %v3267, %v3289
    %3291 = vmatmul.f32.gmra.mxu0 %v3235
    %v3292 = vpop.f32.mrf.mxu0
    %v3293 = vadd.f32 %v3267, %v3292
    %3294 = vmatmul.f32.gmra.mxu0 %v3236
    %v3295 = vpop.f32.mrf.mxu0
    %v3296 = vadd.f32 %v3267, %v3295
    %3297 = vmatmul.f32.gmra.mxu0 %v3237
    %v3298 = vpop.f32.mrf.mxu0
    %v3299 = vadd.f32 %v3267, %v3298
    %3300 = vmatmul.f32.gmra.mxu0 %v3238
    %v3301 = vpop.f32.mrf.mxu0
    %v3302 = vadd.f32 %v3267, %v3301
    %3303 = vmatmul.f32.gmra.mxu0 %v3239
    %v3304 = vpop.f32.mrf.mxu0
    %v3305 = vadd.f32 %v3267, %v3304
    %3306 = vmatmul.f32.gmra.mxu0 %v3240
    %v3307 = vpop.f32.mrf.mxu0
    %v3308 = vadd.f32 %v3267, %v3307
    %3309 = vmatmul.f32.gmra.mxu0 %v3241
    %v3310 = vpop.f32.mrf.mxu0
    %v3311 = vadd.f32 %v3267, %v3310
    %3312 = vmatmul.f32.gmra.mxu0 %v3242
    %v3313 = vpop.f32.mrf.mxu0
    %v3314 = vadd.f32 %v3267, %v3313
    %3315 = vmatmul.f32.gmra.mxu0 %v3243
    %v3316 = vpop.f32.mrf.mxu0
    %v3317 = vadd.f32 %v3267, %v3316
    %3318 = vmatmul.f32.gmra.mxu0 %v3244
    %v3319 = vpop.f32.mrf.mxu0
    %v3320 = vadd.f32 %v3267, %v3319
    %3321 = vmatmul.f32.gmra.mxu0 %v3245
    %v3322 = vpop.f32.mrf.mxu0
    %v3323 = vadd.f32 %v3267, %v3322
    %3324 = vmatmul.f32.gmra.mxu0 %v3246
    %v3325 = vpop.f32.mrf.mxu0
    %v3326 = vadd.f32 %v3267, %v3325
    %3327 = vmatmul.f32.gmra.mxu0 %v3247
    %v3328 = vpop.f32.mrf.mxu0
    %v3329 = vadd.f32 %v3267, %v3328
    %3330 = vmatmul.f32.gmra.mxu0 %v3248
    %v3331 = vpop.f32.mrf.mxu0
    %v3332 = vadd.f32 %v3267, %v3331
    %3333 = vdwg.mxu0
    %v3334 = vtanh.pop %v3287
    %v3335 = vtanh.pop %v3290
    %v3336 = vtanh.pop %v3293
    %v3337 = vtanh.pop %v3296
    %v3338 = vtanh.pop %v3299
    %v3339 = vtanh.pop %v3302
    %v3340 = vtanh.pop %v3305
    %v3341 = vtanh.pop %v3308
    %v3342 = vtanh.pop %v3311
    %v3343 = vtanh.pop %v3314
    %v3344 = vtanh.pop %v3317
    %v3345 = vtanh.pop %v3320
    %v3346 = vtanh.pop %v3323
    %v3347 = vtanh.pop %v3326
    %v3348 = vtanh.pop %v3329
    %v3349 = vtanh.pop %v3332
    %v3350 = vld [vmem:[%s11] sm:$0x3]
    %v3351 = vld [vmem:[%s12] sm:$0x3]
    %3353 = vset.pattern.permute.xlu0 0
    %3354 = vperm.xlu0 %3353, %v3351
    %v3355 = vpop.permute.xlu0 %3354
    %3357 = vmatpush.xpose.msra.mxu0 %v3349
    %3358 = vmatpush.xpose.msra.mxu0 %v3348
    %3359 = vmatpush.xpose.msra.mxu0 %v3347
    %3360 = vmatpush.xpose.msra.mxu0 %v3346
    %3361 = vmatpush.xpose.msra.mxu0 %v3345
    %3362 = vmatpush.xpose.msra.mxu0 %v3344
    %3363 = vmatpush.xpose.msra.mxu0 %v3343
    %3364 = vmatpush.xpose.msra.mxu0 %v3342
    %3365 = vmatpush.xpose.msra.mxu0 %v3341
    %3366 = vmatpush.xpose.msra.mxu0 %v3340
    %3367 = vmatpush.xpose.msra.mxu0 %v3339
    %3368 = vmatpush.xpose.msra.mxu0 %v3338
    %3369 = vmatpush.xpose.msra.mxu0 %v3337
    %3370 = vmatpush.xpose.msra.mxu0 %v3336
    %3371 = vmatpush.xpose.msra.mxu0 %v3335
    %3372 = vmatpush.xpose.msra.mxu0 %v3334
    %3373 = vmatmul.f32.gmra.mxu0 %v3350
    %v3374 = vpop.f32.mrf.mxu0
    %v3375 = vadd.f32 %v3355, %v3374
    %3376 = vdwg.mxu0
    %3377 = vst [vmem:[%s13] sm:$0x3] %v3375
    // Predicated region
    $region58: #{fls_forward.1} parent=1 // pred_check
      _
    $region59: #{fls_forward.1} parent=1 // pred_check_branch
      %3379 = sbr.rel (0) target = $region61
    $region60: #{fls_forward.1} parent=1 // pred_region
      _
    $region61: #{fls_forward.1} parent=1 // pred_fallthru
      _
    // Predicated region
    $region62: #{fls_forward.1} parent=1 // pred_check
      _
    $region63: #{fls_forward.1} parent=1 // pred_check_branch
      %3381 = sbr.rel (0) target = $region65
    $region64: #{fls_forward.1} parent=1 // pred_region
      _
    $region65: #{fls_forward.1} parent=1 // pred_fallthru
      _
    %3382 = vsyncpa [#allocation3], 1

</llo_original>
